<compile_context>
chip_gen: v5e
topology: v5e:2x2
jax: 0.10.0
libtpu: 0.0.40
codegen_flags: <defaults>
</compile_context>

<pallas_src>
import functools
import numpy as np

import jax
import jax.numpy as jnp
from jax.experimental import pallas as pl
from jax.experimental.pallas import tpu as pltpu

_VMEM_LIMIT = 48 * 1024 * 1024          # stays under v7x's 64 MiB physical VMEM
_EPS = 1e-5


def _cparams():
    return pltpu.CompilerParams(dimension_semantics=("parallel",),
                                vmem_limit_bytes=_VMEM_LIMIT)


def _row_tile(m):
    for t in (1024, 512, 256, 128, 64, 32, 16, 8):
        if m % t == 0:
            return t
    return m


def _ceil8(n):
    return ((n + 7) // 8) * 8


# ---------------------------------------------------------------------------
# Pallas kernels
# ---------------------------------------------------------------------------

def _decomp_kernel(xpad_ref, o_ref, *, km, pad, L):
    """o = x - moving_average(x, km) (replicate-padded, channel-last).

    xpad: (L + 2*pad, C) replicate-padded input;  o: (L, C).
    """
    acc = jnp.zeros(o_ref.shape, jnp.float32)
    for j in range(km):                       # km small & static -> unrolled
        acc = acc + xpad_ref[j:j + L, :]
    o_ref[...] = xpad_ref[pad:pad + L, :] - acc * (1.0 / km)


def _ln_add_kernel(a_ref, b_ref, g_ref, be_ref, o_ref, *, eps):
    """o = LayerNorm(a + b) over the channel (lane) axis."""
    x = a_ref[...] + b_ref[...]
    mu = jnp.mean(x, axis=-1, keepdims=True)
    xc = x - mu
    var = jnp.mean(xc * xc, axis=-1, keepdims=True)
    o_ref[...] = xc * jax.lax.rsqrt(var + eps) * g_ref[...] + be_ref[...]


def _branch_kernel(xcol_ref, wc_ref, bc_ref, wi_ref, bi_ref, wt_ref, btt_ref,
                   g_ref, be_ref, y_ref, xz_ref, *, T, C, eps):
    """Fused per-batch MIC branch core.

    xcol : (T, k*C)  im2col of the zero-padded decomp residual (stride == k)
    y    : (T, k*C)  tanh(ConvTranspose1d) output, pre-reshape
    xz   : VMEM scratch (Z + T, C) holding [zeros ; x1] for the causal iso conv
    """
    Z = _ceil8(T - 1)                 # aligned zero prefix for the scratch
    e = Z - (T - 1)

    # --- strided Conv1d (kernel == stride) as one MXU matmul + tanh ---------
    x1 = jnp.tanh(
        jnp.dot(xcol_ref[...], wc_ref[...],
                preferred_element_type=jnp.float32) + bc_ref[...])    # (T, C)

    # --- causal isometric Conv1d: keep xz resident in VMEM, accumulate ------
    # --- shifted matmuls (no HBM im2col blow-up). ----------------------------
    if Z > 0:
        xz_ref[0:Z, :] = jnp.zeros((Z, C), jnp.float32)
    xz_ref[Z:Z + T, :] = x1
    acc = jnp.zeros((T, C), jnp.float32)
    for j in range(T):                # iso_kernel == T (MICN invariant)
        acc = acc + jnp.dot(
            xz_ref[e + j:e + j + T, :].astype(jnp.bfloat16),
            wi_ref[j * C:(j + 1) * C, :],
            preferred_element_type=jnp.float32)
    xi = jnp.tanh(acc + bi_ref[...])                                   # (T, C)

    # --- LayerNorm(xi + x1), f32 epilogue ------------------------------------
    h = xi + x1
    mu = jnp.mean(h, axis=-1, keepdims=True)
    hc = h - mu
    var = jnp.mean(hc * hc, axis=-1, keepdims=True)
    xn = hc * jax.lax.rsqrt(var + eps) * g_ref[...] + be_ref[...]

    # --- ConvTranspose1d (kernel == stride) as one MXU matmul + tanh ---------
    y_ref[...] = jnp.tanh(
        jnp.dot(xn.astype(jnp.bfloat16), wt_ref[...],
                preferred_element_type=jnp.float32) + btt_ref[...])


def _merge_ffn_kernel(mcol_ref, wm_ref, bm_ref, g1_ref, be1_ref,
                      w1_ref, bb1_ref, w2_ref, bb2_ref, g2_ref, be2_ref,
                      o_ref, *, eps):
    """Fused merge Conv2d -> norm1 -> conv1(1x1) -> conv2(1x1) -> res -> norm2."""
    mg = jnp.dot(mcol_ref[...], wm_ref[...],
                 preferred_element_type=jnp.float32) + bm_ref[...]
    mu = jnp.mean(mg, axis=-1, keepdims=True)
    c = mg - mu
    v = jnp.mean(c * c, axis=-1, keepdims=True)
    y = c * jax.lax.rsqrt(v + eps) * g1_ref[...] + be1_ref[...]
    # 4C-wide hidden activation stays in VMEM / vregs.
    h = jnp.dot(y.astype(jnp.bfloat16), w1_ref[...],
                preferred_element_type=jnp.float32) + bb1_ref[...]
    y2 = jnp.dot(h.astype(jnp.bfloat16), w2_ref[...],
                 preferred_element_type=jnp.float32) + bb2_ref[...]
    z = mg + y2
    mu2 = jnp.mean(z, axis=-1, keepdims=True)
    c2 = z - mu2
    v2 = jnp.mean(c2 * c2, axis=-1, keepdims=True)
    o_ref[...] = c2 * jax.lax.rsqrt(v2 + eps) * g2_ref[...] + be2_ref[...]


# ---------------------------------------------------------------------------
# Wrappers
# ---------------------------------------------------------------------------

def decomp_res(x, km):
    """res = x - moving_avg(x, km) with replicate padding (series_decomp)."""
    B, L, C = x.shape
    pad = (km - 1) // 2
    x = x.astype(jnp.float32)
    if pad > 0:
        xpad = jnp.concatenate(
            [jnp.repeat(x[:, :1, :], pad, axis=1), x,
             jnp.repeat(x[:, -1:, :], pad, axis=1)], axis=1)
    else:
        xpad = x
    Lp = L + 2 * pad
    return pl.pallas_call(
        functools.partial(_decomp_kernel, km=km, pad=pad, L=L),
        out_shape=jax.ShapeDtypeStruct((B, L, C), jnp.float32),
        grid=(B,),
        in_specs=[pl.BlockSpec((None, Lp, C), lambda b: (b, 0, 0))],
        out_specs=pl.BlockSpec((None, L, C), lambda b: (b, 0, 0)),
        compiler_params=_cparams(),
    )(xpad)


def layernorm_add(a, b, gamma, beta, eps=_EPS):
    """LayerNorm(a + b) over the last axis, flattened to (B*L, C) row tiles."""
    shp = a.shape
    C = shp[-1]
    M = int(np.prod(shp[:-1]))
    tm = _row_tile(M)
    out = pl.pallas_call(
        functools.partial(_ln_add_kernel, eps=eps),
        out_shape=jax.ShapeDtypeStruct((M, C), jnp.float32),
        grid=(M // tm,),
        in_specs=[pl.BlockSpec((tm, C), lambda i: (i, 0)),
                  pl.BlockSpec((tm, C), lambda i: (i, 0)),
                  pl.BlockSpec((1, C), lambda i: (0, 0)),
                  pl.BlockSpec((1, C), lambda i: (0, 0))],
        out_specs=pl.BlockSpec((tm, C), lambda i: (i, 0)),
        compiler_params=_cparams(),
    )(a.reshape(M, C).astype(jnp.float32),
      b.reshape(M, C).astype(jnp.float32),
      gamma.reshape(1, C).astype(jnp.float32),
      beta.reshape(1, C).astype(jnp.float32))
    return out.reshape(shp)


def branch_forward(src, cw, cb, tw, tb, iw, ib, ng, nbt, k, iso_k, km):
    """One MIC branch: series_decomp residual -> conv_trans_conv.  src:(B,L,C)."""
    B, L, C = src.shape
    # 1) series decomposition residual (trend is unused by MIC.forward).
    s = decomp_res(src, km)                                         # (B, L, C)

    # 2) strided conv (kernel == stride): im2col is a pure zero-pad + reshape.
    p = k // 2
    T = (L + 2 * p - k) // k + 1
    assert iso_k == T, "MICN invariant: isometric kernel == downsampled length"
    kC = k * C
    xpad = jnp.pad(s, ((0, 0), (p, p), (0, 0)))[:, :T * k, :]
    xcol = xpad.reshape(B, T, kC).astype(jnp.bfloat16)

    # Weight matrices (bf16 on the MXU, f32 accumulate / f32 biases).
    wc = jnp.transpose(cw, (2, 1, 0)).reshape(kC, C).astype(jnp.bfloat16)
    wi = jnp.transpose(iw, (2, 1, 0)).reshape(iso_k * C, C).astype(jnp.bfloat16)
    wt = jnp.transpose(tw, (0, 2, 1)).reshape(C, kC).astype(jnp.bfloat16)
    bct = cb.reshape(1, C).astype(jnp.float32)
    bit = ib.reshape(1, C).astype(jnp.float32)
    btt = jnp.tile(tb, k).reshape(1, kC).astype(jnp.float32)
    g2 = ng.reshape(1, C).astype(jnp.float32)
    b2 = nbt.reshape(1, C).astype(jnp.float32)

    Z = _ceil8(T - 1)
    flops = 2 * B * T * C * (2 * kC + T * C)
    transc = B * T * (2 * C + kC)
    bytes_acc = (2 * B * T * kC + 4 * B * T * kC
                 + 2 * (kC * C + T * C * C + C * kC) + 4 * (4 * C + kC))

    y = pl.pallas_call(
        functools.partial(_branch_kernel, T=T, C=C, eps=_EPS),
        out_shape=jax.ShapeDtypeStruct((B, T, kC), jnp.float32),
        grid=(B,),
        in_specs=[pl.BlockSpec((None, T, kC), lambda b: (b, 0, 0)),
                  pl.BlockSpec((kC, C), lambda b: (0, 0)),
                  pl.BlockSpec((1, C), lambda b: (0, 0)),
                  pl.BlockSpec((iso_k * C, C), lambda b: (0, 0)),
                  pl.BlockSpec((1, C), lambda b: (0, 0)),
                  pl.BlockSpec((C, kC), lambda b: (0, 0)),
                  pl.BlockSpec((1, kC), lambda b: (0, 0)),
                  pl.BlockSpec((1, C), lambda b: (0, 0)),
                  pl.BlockSpec((1, C), lambda b: (0, 0))],
        out_specs=pl.BlockSpec((None, T, kC), lambda b: (b, 0, 0)),
        scratch_shapes=[pltpu.VMEM((Z + T, C), jnp.float32)],
        compiler_params=_cparams(),
        cost_estimate=pl.CostEstimate(flops=flops, transcendentals=transc,
                                      bytes_accessed=bytes_acc),
    )(xcol, wc, bct, wi, bit, wt, btt, g2, b2)

    # 3) ConvTranspose output: (T, k*C) -> (T*k, C) is a pure reshape
    #    (non-overlapping windows); crop to L, then LayerNorm(xt + s).
    xt = y.reshape(B, T * k, C)[:, :L, :]
    return layernorm_add(xt, s, ng, nbt)


def merge_ffn(multi, p):
    """Fused merge Conv2d + norm1 + conv1 + conv2 + residual + norm2."""
    B, L, C = multi[0].shape
    nk = len(multi)
    M = B * L
    nkC = nk * C
    tm = _row_tile(M)
    mcol = jnp.concatenate(multi, axis=-1).reshape(M, nkC).astype(jnp.bfloat16)
    wm = jnp.transpose(p["merge_w"][..., 0], (2, 1, 0)).reshape(nkC, C)
    w1 = p["c1_w"][:, :, 0].T                        # (C, 4C)
    w2 = p["c2_w"][:, :, 0].T                        # (4C, C)

    def v1(x):
        return x.reshape(1, -1).astype(jnp.float32)

    flops = 2 * M * C * (nkC + 8 * C)
    bytes_acc = 2 * M * nkC + 4 * M * C + 2 * (nkC * C + 8 * C * C) + 4 * 8 * C

    out = pl.pallas_call(
        functools.partial(_merge_ffn_kernel, eps=_EPS),
        out_shape=jax.ShapeDtypeStruct((M, C), jnp.float32),
        grid=(M // tm,),
        in_specs=[pl.BlockSpec((tm, nkC), lambda i: (i, 0)),
                  pl.BlockSpec((nkC, C), lambda i: (0, 0)),
                  pl.BlockSpec((1, C), lambda i: (0, 0)),
                  pl.BlockSpec((1, C), lambda i: (0, 0)),
                  pl.BlockSpec((1, C), lambda i: (0, 0)),
                  pl.BlockSpec((C, 4 * C), lambda i: (0, 0)),
                  pl.BlockSpec((1, 4 * C), lambda i: (0, 0)),
                  pl.BlockSpec((4 * C, C), lambda i: (0, 0)),
                  pl.BlockSpec((1, C), lambda i: (0, 0)),
                  pl.BlockSpec((1, C), lambda i: (0, 0)),
                  pl.BlockSpec((1, C), lambda i: (0, 0))],
        out_specs=pl.BlockSpec((tm, C), lambda i: (i, 0)),
        compiler_params=_cparams(),
        cost_estimate=pl.CostEstimate(flops=flops, transcendentals=2 * M,
                                      bytes_accessed=bytes_acc),
    )(mcol, wm.astype(jnp.bfloat16), v1(p["merge_b"]),
      v1(p["n1_g"]), v1(p["n1_b"]),
      w1.astype(jnp.bfloat16), v1(p["c1_b"]),
      w2.astype(jnp.bfloat16), v1(p["c2_b"]),
      v1(p["n2_g"]), v1(p["n2_b"]))
    return out.reshape(B, L, C)


def mic_forward(src, p, conv_kernel, decomp_kernel, iso_kernel):
    multi = []
    for i, k in enumerate(conv_kernel):
        multi.append(branch_forward(
            src, p["conv_w"][i], p["conv_b"][i],
            p["trans_w"][i], p["trans_b"][i],
            p["iso_w"][i], p["iso_b"][i],
            p["norm_g"], p["norm_b"], k, iso_kernel[i], decomp_kernel[i]))
    return merge_ffn(multi, p)


# ---------------------------------------------------------------------------
# Deterministic parameter init (shapes follow MIC.__init__)
# ---------------------------------------------------------------------------

def init_params(key, C, conv_kernel, iso_kernel):
    ks = iter(jax.random.split(key, 64))

    def w(shape, scale=0.05):
        return (scale * jax.random.normal(next(ks), shape)).astype(jnp.float32)

    p = {"conv_w": [], "conv_b": [], "trans_w": [], "trans_b": [],
         "iso_w": [], "iso_b": []}
    for k, ik in zip(conv_kernel, iso_kernel):
        p["conv_w"].append(w((C, C, k)));  p["conv_b"].append(w((C,)))
        p["trans_w"].append(w((C, C, k))); p["trans_b"].append(w((C,)))   # (Cin,Cout,k)
        p["iso_w"].append(w((C, C, ik)));  p["iso_b"].append(w((C,)))
    nk = len(conv_kernel)
    p["merge_w"] = w((C, C, nk, 1)); p["merge_b"] = w((C,))
    p["c1_w"] = w((4 * C, C, 1));    p["c1_b"] = w((4 * C,))
    p["c2_w"] = w((C, 4 * C, 1));    p["c2_b"] = w((C,))
    p["norm_g"] = jnp.ones((C,), jnp.float32); p["norm_b"] = jnp.zeros((C,), jnp.float32)
    p["n1_g"] = jnp.ones((C,), jnp.float32);   p["n1_b"] = jnp.zeros((C,), jnp.float32)
    p["n2_g"] = jnp.ones((C,), jnp.float32);   p["n2_b"] = jnp.zeros((C,), jnp.float32)
    return p


# ---------------------------------------------------------------------------
# Pure-JAX f32 reference (independent conv lowering) for a correctness check
# ---------------------------------------------------------------------------

def ref_forward(src, p, conv_kernel, decomp_kernel, iso_kernel):
    B, L, C = src.shape
    HI = jax.lax.Precision.HIGHEST

    def ln(x, g, b, eps=1e-5):
        m = jnp.mean(x, -1, keepdims=True)
        v = jnp.mean((x - m) ** 2, -1, keepdims=True)
        return (x - m) / jnp.sqrt(v + eps) * g + b

    def conv1d(x_blc, w, b, stride, pad):
        x = jnp.transpose(x_blc, (0, 2, 1))
        y = jax.lax.conv_general_dilated(
            x, w, (stride,), [(pad, pad)],
            dimension_numbers=("NCH", "OIH", "NCH"), precision=HI)
        return jnp.transpose(y + b[None, :, None], (0, 2, 1))

    def conv_trans1d(x_blc, w, b, k):                 # stride == kernel, pad 0
        y = jnp.einsum("btc,coj->btjo", x_blc, w, precision=HI)
        return y.reshape(x_blc.shape[0], x_blc.shape[1] * k, w.shape[1]) + b

    def decomp(x, km):
        pad = (km - 1) // 2
        xp = jnp.concatenate([jnp.repeat(x[:, :1], pad, 1), x,
                              jnp.repeat(x[:, -1:], pad, 1)], 1)
        mm = jnp.mean(jnp.stack([xp[:, j:j + x.shape[1]] for j in range(km)], 0), 0)
        return x - mm

    multi = []
    for i, k in enumerate(conv_kernel):
        s = decomp(src, decomp_kernel[i])
        x1 = jnp.tanh(conv1d(s, p["conv_w"][i], p["conv_b"][i], k, k // 2))
        T = x1.shape[1]
        xz = jnp.concatenate([jnp.zeros((B, T - 1, C), x1.dtype), x1], 1)
        xi = jnp.tanh(conv1d(xz, p["iso_w"][i], p["iso_b"][i], 1, 0))
        x = ln(xi + x1, p["norm_g"], p["norm_b"])
        xt = jnp.tanh(conv_trans1d(x, p["trans_w"][i], p["trans_b"][i], k))[:, :L, :]
        multi.append(ln(xt + s, p["norm_g"], p["norm_b"]))

    mg = sum(jnp.einsum("blc,oc->blo", multi[i], p["merge_w"][:, :, i, 0], precision=HI)
             for i in range(len(conv_kernel))) + p["merge_b"]
    y = ln(mg, p["n1_g"], p["n1_b"])
    h = jnp.einsum("blc,oc->blo", y, p["c1_w"][:, :, 0], precision=HI) + p["c1_b"]
    y2 = jnp.einsum("blc,oc->blo", h, p["c2_w"][:, :, 0], precision=HI) + p["c2_b"]
    return ln(mg + y2, p["n2_g"], p["n2_b"])


# ---------------------------------------------------------------------------

if __name__ == "__main__":
    # Small shapes consistent with MIC: batch=2, seq=16, feature_size=32.
    B, L, C = 2, 16, 32
    conv_kernel = [2, 4]
    decomp_kernel = [k + 1 if k % 2 == 0 else k for k in conv_kernel]      # [3, 5]
    iso_kernel = [(L + k) // k if k % 2 == 0 else (L + k - 1) // k
                  for k in conv_kernel]                                    # [9, 5]

    key = jax.random.PRNGKey(0)
    kx, kp = jax.random.split(key)
    src = jax.random.normal(kx, (B, L, C), dtype=jnp.float32)
    params = init_params(kp, C, conv_kernel, iso_kernel)

    fwd = jax.jit(functools.partial(mic_forward, conv_kernel=conv_kernel,
                                    decomp_kernel=decomp_kernel,
                                    iso_kernel=iso_kernel))
    out = jax.block_until_ready(fwd(src, params))
    assert out.shape == (B, L, C) and out.dtype == jnp.float32

    ref = ref_forward(src, params, conv_kernel, decomp_kernel, iso_kernel)
    # bf16 MXU matmuls (f32 accumulate) vs. an f32/HIGHEST reference.
    np.testing.assert_allclose(np.asarray(out), np.asarray(ref),
                               rtol=5e-2, atol=5e-2)
    print("KERNEL_OK")
</pallas_src>

<mosaic_0001>
module attributes {stable_mosaic.version = 11 : i64} {
  func.func @_decomp_kernel(%arg0: i32, %arg1: memref<1x18x32xf32, #tpu.memory_space<vmem>>, %arg2: memref<1x16x32xf32, #tpu.memory_space<vmem>>) attributes {dimension_semantics = [#tpu.dimension_semantics<parallel>], iteration_bounds = array<i64: 2>, scalar_prefetch = 0 : i64, scratch_operands = 0 : i64, tpu.core_type = #tpu.core_type<tc>, window_params = [{transform_indices = @transform_0, window_bounds = array<i64: 1, 18, 32>}, {transform_indices = @transform_1, window_bounds = array<i64: 1, 16, 32>}]} {
    %cst = arith.constant 0.000000e+00 : f32
    %0 = vector.broadcast %cst : f32 to vector<16x32xf32>
    %c0 = arith.constant 0 : index
    %c0_0 = arith.constant 0 : index
    %c0_1 = arith.constant 0 : index
    %1 = vector.load %arg1[%c0, %c0_0, %c0_1] : memref<1x18x32xf32, #tpu.memory_space<vmem>>, vector<1x16x32xf32>
    %2 = vector.shape_cast %1 : vector<1x16x32xf32> to vector<16x32xf32>
    %3 = arith.addf %0, %2 : vector<16x32xf32>
    %c0_2 = arith.constant 0 : index
    %c1 = arith.constant 1 : index
    %c0_3 = arith.constant 0 : index
    %4 = vector.load %arg1[%c0_2, %c1, %c0_3] : memref<1x18x32xf32, #tpu.memory_space<vmem>>, vector<1x16x32xf32>
    %5 = vector.shape_cast %4 : vector<1x16x32xf32> to vector<16x32xf32>
    %6 = arith.addf %3, %5 : vector<16x32xf32>
    %c0_4 = arith.constant 0 : index
    %c2 = arith.constant 2 : index
    %c0_5 = arith.constant 0 : index
    %7 = vector.load %arg1[%c0_4, %c2, %c0_5] : memref<1x18x32xf32, #tpu.memory_space<vmem>>, vector<1x16x32xf32>
    %8 = vector.shape_cast %7 : vector<1x16x32xf32> to vector<16x32xf32>
    %9 = arith.addf %6, %8 : vector<16x32xf32>
    %c0_6 = arith.constant 0 : index
    %c1_7 = arith.constant 1 : index
    %c0_8 = arith.constant 0 : index
    %10 = vector.load %arg1[%c0_6, %c1_7, %c0_8] : memref<1x18x32xf32, #tpu.memory_space<vmem>>, vector<1x16x32xf32>
    %11 = vector.shape_cast %10 : vector<1x16x32xf32> to vector<16x32xf32>
    %cst_9 = arith.constant 0.333333343 : f32
    %12 = vector.broadcast %cst_9 : f32 to vector<16x32xf32>
    %13 = arith.mulf %9, %12 : vector<16x32xf32>
    %14 = arith.subf %11, %13 : vector<16x32xf32>
    %c0_10 = arith.constant 0 : index
    %c0_11 = arith.constant 0 : index
    %c0_12 = arith.constant 0 : index
    %15 = vector.load %arg2[%c0_10, %c0_11, %c0_12] : memref<1x16x32xf32, #tpu.memory_space<vmem>>, vector<1x16x32xf32>
    %16 = vector.shape_cast %15 : vector<1x16x32xf32> to vector<16x32xf32>
    %17 = vector.shape_cast %14 : vector<16x32xf32> to vector<1x16x32xf32>
    tpu.vector_store %arg2[%c0_10, %c0_11, %c0_12], %17 {strides = array<i32>} : memref<1x16x32xf32, #tpu.memory_space<vmem>>, vector<1x16x32xf32>,
    return
  }
  func.func @transform_0(%arg0: i32) -> (i32, i32, i32) {
    %c0_i32 = arith.constant 0 : i32
    %c0_i32_0 = arith.constant 0 : i32
    %c0_i32_1 = arith.constant 0 : i32
    return %arg0, %c0_i32, %c0_i32_0 : i32, i32, i32
  }
  func.func @transform_1(%arg0: i32) -> (i32, i32, i32) {
    %c0_i32 = arith.constant 0 : i32
    %c0_i32_0 = arith.constant 0 : i32
    %c0_i32_1 = arith.constant 0 : i32
    return %arg0, %c0_i32, %c0_i32_0 : i32, i32, i32
  }
}

module attributes {stable_mosaic.version = 11 : i64} {
  func.func @_branch_kernel(%arg0: i32, %arg1: memref<1x9x64xbf16, #tpu.memory_space<vmem>>, %arg2: memref<64x32xbf16, #tpu.memory_space<vmem>>, %arg3: memref<1x32xf32, #tpu.memory_space<vmem>>, %arg4: memref<288x32xbf16, #tpu.memory_space<vmem>>, %arg5: memref<1x32xf32, #tpu.memory_space<vmem>>, %arg6: memref<32x64xbf16, #tpu.memory_space<vmem>>, %arg7: memref<1x64xf32, #tpu.memory_space<vmem>>, %arg8: memref<1x32xf32, #tpu.memory_space<vmem>>, %arg9: memref<1x32xf32, #tpu.memory_space<vmem>>, %arg10: memref<1x9x64xf32, #tpu.memory_space<vmem>>, %arg11: memref<17x32xf32, #tpu.memory_space<vmem>>) attributes {dimension_semantics = [#tpu.dimension_semantics<parallel>], iteration_bounds = array<i64: 2>, scalar_prefetch = 0 : i64, scratch_operands = 1 : i64, tpu.core_type = #tpu.core_type<tc>, window_params = [{transform_indices = @transform_0, window_bounds = array<i64: 1, 9, 64>}, {pipeline_mode = #tpu.pipeline_mode<synchronous>, transform_indices = @transform_1, window_bounds = array<i64: 64, 32>}, {pipeline_mode = #tpu.pipeline_mode<synchronous>, transform_indices = @transform_2, window_bounds = array<i64: 1, 32>}, {pipeline_mode = #tpu.pipeline_mode<synchronous>, transform_indices = @transform_3, window_bounds = array<i64: 288, 32>}, {pipeline_mode = #tpu.pipeline_mode<synchronous>, transform_indices = @transform_4, window_bounds = array<i64: 1, 32>}, {pipeline_mode = #tpu.pipeline_mode<synchronous>, transform_indices = @transform_5, window_bounds = array<i64: 32, 64>}, {pipeline_mode = #tpu.pipeline_mode<synchronous>, transform_indices = @transform_6, window_bounds = array<i64: 1, 64>}, {pipeline_mode = #tpu.pipeline_mode<synchronous>, transform_indices = @transform_7, window_bounds = array<i64: 1, 32>}, {pipeline_mode = #tpu.pipeline_mode<synchronous>, transform_indices = @transform_8, window_bounds = array<i64: 1, 32>}, {transform_indices = @transform_9, window_bounds = array<i64: 1, 9, 64>}]} {
    %c0 = arith.constant 0 : index
    %c0_0 = arith.constant 0 : index
    %c0_1 = arith.constant 0 : index
    %0 = vector.load %arg1[%c0, %c0_0, %c0_1] : memref<1x9x64xbf16, #tpu.memory_space<vmem>>, vector<1x9x64xbf16>
    %1 = vector.shape_cast %0 : vector<1x9x64xbf16> to vector<9x64xbf16>
    %c0_2 = arith.constant 0 : index
    %c0_3 = arith.constant 0 : index
    %2 = vector.load %arg2[%c0_2, %c0_3] : memref<64x32xbf16, #tpu.memory_space<vmem>>, vector<64x32xbf16>
    %cst = arith.constant dense<0.000000e+00> : vector<9x32xf32>
    %3 = tpu.matmul %1, %2, %cst {dimension_numbers = #tpu.dot_dimension_numbers<[1], [0], [0], [1], [0, 0, 1, 1], [], []>} : vector<9x64xbf16>, vector<64x32xbf16>, vector<9x32xf32> -> vector<9x32xf32>
    %c0_4 = arith.constant 0 : index
    %c0_5 = arith.constant 0 : index
    %4 = vector.load %arg3[%c0_4, %c0_5] : memref<1x32xf32, #tpu.memory_space<vmem>>, vector<1x32xf32>
    %5 = vector.broadcast %4 : vector<1x32xf32> to vector<9x32xf32>
    %6 = arith.addf %3, %5 : vector<9x32xf32>
    %7 = math.tanh %6 : vector<9x32xf32>
    %cst_6 = arith.constant 0.000000e+00 : f32
    %8 = vector.broadcast %cst_6 : f32 to vector<8x32xf32>
    %c0_7 = arith.constant 0 : index
    %c0_8 = arith.constant 0 : index
    %9 = vector.load %arg11[%c0_7, %c0_8] : memref<17x32xf32, #tpu.memory_space<vmem>>, vector<8x32xf32>
    tpu.vector_store %arg11[%c0_7, %c0_8], %8 {strides = array<i32>} : memref<17x32xf32, #tpu.memory_space<vmem>>, vector<8x32xf32>,
    %c8 = arith.constant 8 : index
    %c0_9 = arith.constant 0 : index
    %10 = vector.load %arg11[%c8, %c0_9] : memref<17x32xf32, #tpu.memory_space<vmem>>, vector<9x32xf32>
    tpu.vector_store %arg11[%c8, %c0_9], %7 {strides = array<i32>} : memref<17x32xf32, #tpu.memory_space<vmem>>, vector<9x32xf32>,
    %cst_10 = arith.constant 0.000000e+00 : f32
    %11 = vector.broadcast %cst_10 : f32 to vector<9x32xf32>
    %c0_11 = arith.constant 0 : index
    %c0_12 = arith.constant 0 : index
    %12 = vector.load %arg11[%c0_11, %c0_12] : memref<17x32xf32, #tpu.memory_space<vmem>>, vector<9x32xf32>
    %13 = arith.truncf %12 : vector<9x32xf32> to vector<9x32xbf16>
    %c0_13 = arith.constant 0 : index
    %c0_14 = arith.constant 0 : index
    %14 = vector.load %arg4[%c0_13, %c0_14] : memref<288x32xbf16, #tpu.memory_space<vmem>>, vector<32x32xbf16>
    %cst_15 = arith.constant dense<0.000000e+00> : vector<9x32xf32>
    %15 = tpu.matmul %13, %14, %cst_15 {dimension_numbers = #tpu.dot_dimension_numbers<[1], [0], [0], [1], [0, 0, 1, 1], [], []>} : vector<9x32xbf16>, vector<32x32xbf16>, vector<9x32xf32> -> vector<9x32xf32>
    %16 = arith.addf %11, %15 : vector<9x32xf32>
    %c1 = arith.constant 1 : index
    %c0_16 = arith.constant 0 : index
    %17 = vector.load %arg11[%c1, %c0_16] : memref<17x32xf32, #tpu.memory_space<vmem>>, vector<9x32xf32>
    %18 = arith.truncf %17 : vector<9x32xf32> to vector<9x32xbf16>
    %c32 = arith.constant 32 : index
    %c0_17 = arith.constant 0 : index
    %19 = vector.load %arg4[%c32, %c0_17] : memref<288x32xbf16, #tpu.memory_space<vmem>>, vector<32x32xbf16>
    %cst_18 = arith.constant dense<0.000000e+00> : vector<9x32xf32>
    %20 = tpu.matmul %18, %19, %cst_18 {dimension_numbers = #tpu.dot_dimension_numbers<[1], [0], [0], [1], [0, 0, 1, 1], [], []>} : vector<9x32xbf16>, vector<32x32xbf16>, vector<9x32xf32> -> vector<9x32xf32>
    %21 = arith.addf %16, %20 : vector<9x32xf32>
    %c2 = arith.constant 2 : index
    %c0_19 = arith.constant 0 : index
    %22 = vector.load %arg11[%c2, %c0_19] : memref<17x32xf32, #tpu.memory_space<vmem>>, vector<9x32xf32>
    %23 = arith.truncf %22 : vector<9x32xf32> to vector<9x32xbf16>
    %c64 = arith.constant 64 : index
    %c0_20 = arith.constant 0 : index
    %24 = vector.load %arg4[%c64, %c0_20] : memref<288x32xbf16, #tpu.memory_space<vmem>>, vector<32x32xbf16>
    %cst_21 = arith.constant dense<0.000000e+00> : vector<9x32xf32>
    %25 = tpu.matmul %23, %24, %cst_21 {dimension_numbers = #tpu.dot_dimension_numbers<[1], [0], [0], [1], [0, 0, 1, 1], [], []>} : vector<9x32xbf16>, vector<32x32xbf16>, vector<9x32xf32> -> vector<9x32xf32>
    %26 = arith.addf %21, %25 : vector<9x32xf32>
    %c3 = arith.constant 3 : index
    %c0_22 = arith.constant 0 : index
    %27 = vector.load %arg11[%c3, %c0_22] : memref<17x32xf32, #tpu.memory_space<vmem>>, vector<9x32xf32>
    %28 = arith.truncf %27 : vector<9x32xf32> to vector<9x32xbf16>
    %c96 = arith.constant 96 : index
    %c0_23 = arith.constant 0 : index
    %29 = vector.load %arg4[%c96, %c0_23] : memref<288x32xbf16, #tpu.memory_space<vmem>>, vector<32x32xbf16>
    %cst_24 = arith.constant dense<0.000000e+00> : vector<9x32xf32>
    %30 = tpu.matmul %28, %29, %cst_24 {dimension_numbers = #tpu.dot_dimension_numbers<[1], [0], [0], [1], [0, 0, 1, 1], [], []>} : vector<9x32xbf16>, vector<32x32xbf16>, vector<9x32xf32> -> vector<9x32xf32>
    %31 = arith.addf %26, %30 : vector<9x32xf32>
    %c4 = arith.constant 4 : index
    %c0_25 = arith.constant 0 : index
    %32 = vector.load %arg11[%c4, %c0_25] : memref<17x32xf32, #tpu.memory_space<vmem>>, vector<9x32xf32>
    %33 = arith.truncf %32 : vector<9x32xf32> to vector<9x32xbf16>
    %c128 = arith.constant 128 : index
    %c0_26 = arith.constant 0 : index
    %34 = vector.load %arg4[%c128, %c0_26] : memref<288x32xbf16, #tpu.memory_space<vmem>>, vector<32x32xbf16>
    %cst_27 = arith.constant dense<0.000000e+00> : vector<9x32xf32>
    %35 = tpu.matmul %33, %34, %cst_27 {dimension_numbers = #tpu.dot_dimension_numbers<[1], [0], [0], [1], [0, 0, 1, 1], [], []>} : vector<9x32xbf16>, vector<32x32xbf16>, vector<9x32xf32> -> vector<9x32xf32>
    %36 = arith.addf %31, %35 : vector<9x32xf32>
    %c5 = arith.constant 5 : index
    %c0_28 = arith.constant 0 : index
    %37 = vector.load %arg11[%c5, %c0_28] : memref<17x32xf32, #tpu.memory_space<vmem>>, vector<9x32xf32>
    %38 = arith.truncf %37 : vector<9x32xf32> to vector<9x32xbf16>
    %c160 = arith.constant 160 : index
    %c0_29 = arith.constant 0 : index
    %39 = vector.load %arg4[%c160, %c0_29] : memref<288x32xbf16, #tpu.memory_space<vmem>>, vector<32x32xbf16>
    %cst_30 = arith.constant dense<0.000000e+00> : vector<9x32xf32>
    %40 = tpu.matmul %38, %39, %cst_30 {dimension_numbers = #tpu.dot_dimension_numbers<[1], [0], [0], [1], [0, 0, 1, 1], [], []>} : vector<9x32xbf16>, vector<32x32xbf16>, vector<9x32xf32> -> vector<9x32xf32>
    %41 = arith.addf %36, %40 : vector<9x32xf32>
    %c6 = arith.constant 6 : index
    %c0_31 = arith.constant 0 : index
    %42 = vector.load %arg11[%c6, %c0_31] : memref<17x32xf32, #tpu.memory_space<vmem>>, vector<9x32xf32>
    %43 = arith.truncf %42 : vector<9x32xf32> to vector<9x32xbf16>
    %c192 = arith.constant 192 : index
    %c0_32 = arith.constant 0 : index
    %44 = vector.load %arg4[%c192, %c0_32] : memref<288x32xbf16, #tpu.memory_space<vmem>>, vector<32x32xbf16>
    %cst_33 = arith.constant dense<0.000000e+00> : vector<9x32xf32>
    %45 = tpu.matmul %43, %44, %cst_33 {dimension_numbers = #tpu.dot_dimension_numbers<[1], [0], [0], [1], [0, 0, 1, 1], [], []>} : vector<9x32xbf16>, vector<32x32xbf16>, vector<9x32xf32> -> vector<9x32xf32>
    %46 = arith.addf %41, %45 : vector<9x32xf32>
    %c7 = arith.constant 7 : index
    %c0_34 = arith.constant 0 : index
    %47 = vector.load %arg11[%c7, %c0_34] : memref<17x32xf32, #tpu.memory_space<vmem>>, vector<9x32xf32>
    %48 = arith.truncf %47 : vector<9x32xf32> to vector<9x32xbf16>
    %c224 = arith.constant 224 : index
    %c0_35 = arith.constant 0 : index
    %49 = vector.load %arg4[%c224, %c0_35] : memref<288x32xbf16, #tpu.memory_space<vmem>>, vector<32x32xbf16>
    %cst_36 = arith.constant dense<0.000000e+00> : vector<9x32xf32>
    %50 = tpu.matmul %48, %49, %cst_36 {dimension_numbers = #tpu.dot_dimension_numbers<[1], [0], [0], [1], [0, 0, 1, 1], [], []>} : vector<9x32xbf16>, vector<32x32xbf16>, vector<9x32xf32> -> vector<9x32xf32>
    %51 = arith.addf %46, %50 : vector<9x32xf32>
    %c8_37 = arith.constant 8 : index
    %c0_38 = arith.constant 0 : index
    %52 = vector.load %arg11[%c8_37, %c0_38] : memref<17x32xf32, #tpu.memory_space<vmem>>, vector<9x32xf32>
    %53 = arith.truncf %52 : vector<9x32xf32> to vector<9x32xbf16>
    %c256 = arith.constant 256 : index
    %c0_39 = arith.constant 0 : index
    %54 = vector.load %arg4[%c256, %c0_39] : memref<288x32xbf16, #tpu.memory_space<vmem>>, vector<32x32xbf16>
    %cst_40 = arith.constant dense<0.000000e+00> : vector<9x32xf32>
    %55 = tpu.matmul %53, %54, %cst_40 {dimension_numbers = #tpu.dot_dimension_numbers<[1], [0], [0], [1], [0, 0, 1, 1], [], []>} : vector<9x32xbf16>, vector<32x32xbf16>, vector<9x32xf32> -> vector<9x32xf32>
    %56 = arith.addf %51, %55 : vector<9x32xf32>
    %c0_41 = arith.constant 0 : index
    %c0_42 = arith.constant 0 : index
    %57 = vector.load %arg5[%c0_41, %c0_42] : memref<1x32xf32, #tpu.memory_space<vmem>>, vector<1x32xf32>
    %58 = vector.broadcast %57 : vector<1x32xf32> to vector<9x32xf32>
    %59 = arith.addf %56, %58 : vector<9x32xf32>
    %60 = math.tanh %59 : vector<9x32xf32>
    %61 = arith.addf %60, %7 : vector<9x32xf32>
    %cst_43 = arith.constant dense<0.000000e+00> : vector<9xf32>
    %62 = vector.multi_reduction <add>, %61, %cst_43 [1] : vector<9x32xf32> to vector<9xf32>
    %63 = vector.shape_cast %62 : vector<9xf32> to vector<9x1xf32>
    %cst_44 = arith.constant 3.200000e+01 : f32
    %64 = vector.broadcast %cst_44 : f32 to vector<9x1xf32>
    %65 = arith.divf %63, %64 : vector<9x1xf32>
    %66 = vector.broadcast %65 : vector<9x1xf32> to vector<9x32xf32>
    %67 = arith.subf %61, %66 : vector<9x32xf32>
    %68 = arith.mulf %67, %67 : vector<9x32xf32>
    %cst_45 = arith.constant dense<0.000000e+00> : vector<9xf32>
    %69 = vector.multi_reduction <add>, %68, %cst_45 [1] : vector<9x32xf32> to vector<9xf32>
    %70 = vector.shape_cast %69 : vector<9xf32> to vector<9x1xf32>
    %cst_46 = arith.constant 3.200000e+01 : f32
    %71 = vector.broadcast %cst_46 : f32 to vector<9x1xf32>
    %72 = arith.divf %70, %71 : vector<9x1xf32>
    %cst_47 = arith.constant 9.99999974E-6 : f32
    %73 = vector.broadcast %cst_47 : f32 to vector<9x1xf32>
    %74 = arith.addf %72, %73 : vector<9x1xf32>
    %75 = math.rsqrt %74 : vector<9x1xf32>
    %76 = vector.broadcast %75 : vector<9x1xf32> to vector<9x32xf32>
    %77 = arith.mulf %67, %76 : vector<9x32xf32>
    %c0_48 = arith.constant 0 : index
    %c0_49 = arith.constant 0 : index
    %78 = vector.load %arg8[%c0_48, %c0_49] : memref<1x32xf32, #tpu.memory_space<vmem>>, vector<1x32xf32>
    %79 = vector.broadcast %78 : vector<1x32xf32> to vector<9x32xf32>
    %80 = arith.mulf %77, %79 : vector<9x32xf32>
    %c0_50 = arith.constant 0 : index
    %c0_51 = arith.constant 0 : index
    %81 = vector.load %arg9[%c0_50, %c0_51] : memref<1x32xf32, #tpu.memory_space<vmem>>, vector<1x32xf32>
    %82 = vector.broadcast %81 : vector<1x32xf32> to vector<9x32xf32>
    %83 = arith.addf %80, %82 : vector<9x32xf32>
    %84 = arith.truncf %83 : vector<9x32xf32> to vector<9x32xbf16>
    %c0_52 = arith.constant 0 : index
    %c0_53 = arith.constant 0 : index
    %85 = vector.load %arg6[%c0_52, %c0_53] : memref<32x64xbf16, #tpu.memory_space<vmem>>, vector<32x64xbf16>
    %cst_54 = arith.constant dense<0.000000e+00> : vector<9x64xf32>
    %86 = tpu.matmul %84, %85, %cst_54 {dimension_numbers = #tpu.dot_dimension_numbers<[1], [0], [0], [1], [0, 0, 1, 1], [], []>} : vector<9x32xbf16>, vector<32x64xbf16>, vector<9x64xf32> -> vector<9x64xf32>
    %c0_55 = arith.constant 0 : index
    %c0_56 = arith.constant 0 : index
    %87 = vector.load %arg7[%c0_55, %c0_56] : memref<1x64xf32, #tpu.memory_space<vmem>>, vector<1x64xf32>
    %88 = vector.broadcast %87 : vector<1x64xf32> to vector<9x64xf32>
    %89 = arith.addf %86, %88 : vector<9x64xf32>
    %90 = math.tanh %89 : vector<9x64xf32>
    %c0_57 = arith.constant 0 : index
    %c0_58 = arith.constant 0 : index
    %c0_59 = arith.constant 0 : index
    %91 = vector.load %arg10[%c0_57, %c0_58, %c0_59] : memref<1x9x64xf32, #tpu.memory_space<vmem>>, vector<1x9x64xf32>
    %92 = vector.shape_cast %91 : vector<1x9x64xf32> to vector<9x64xf32>
    %93 = vector.shape_cast %90 : vector<9x64xf32> to vector<1x9x64xf32>
    tpu.vector_store %arg10[%c0_57, %c0_58, %c0_59], %93 {strides = array<i32>} : memref<1x9x64xf32, #tpu.memory_space<vmem>>, vector<1x9x64xf32>,
    return
  }
  func.func @transform_0(%arg0: i32) -> (i32, i32, i32) {
    %c0_i32 = arith.constant 0 : i32
    %c0_i32_0 = arith.constant 0 : i32
    %c0_i32_1 = arith.constant 0 : i32
    return %arg0, %c0_i32, %c0_i32_0 : i32, i32, i32
  }
  func.func @transform_1(%arg0: i32) -> (i32, i32) {
    %c0_i32 = arith.constant 0 : i32
    %c0_i32_0 = arith.constant 0 : i32
    %c0_i32_1 = arith.constant 0 : i32
    return %c0_i32, %c0_i32_0 : i32, i32
  }
  func.func @transform_2(%arg0: i32) -> (i32, i32) {
    %c0_i32 = arith.constant 0 : i32
    %c0_i32_0 = arith.constant 0 : i32
    %c0_i32_1 = arith.constant 0 : i32
    return %c0_i32, %c0_i32_0 : i32, i32
  }
  func.func @transform_3(%arg0: i32) -> (i32, i32) {
    %c0_i32 = arith.constant 0 : i32
    %c0_i32_0 = arith.constant 0 : i32
    %c0_i32_1 = arith.constant 0 : i32
    return %c0_i32, %c0_i32_0 : i32, i32
  }
  func.func @transform_4(%arg0: i32) -> (i32, i32) {
    %c0_i32 = arith.constant 0 : i32
    %c0_i32_0 = arith.constant 0 : i32
    %c0_i32_1 = arith.constant 0 : i32
    return %c0_i32, %c0_i32_0 : i32, i32
  }
  func.func @transform_5(%arg0: i32) -> (i32, i32) {
    %c0_i32 = arith.constant 0 : i32
    %c0_i32_0 = arith.constant 0 : i32
    %c0_i32_1 = arith.constant 0 : i32
    return %c0_i32, %c0_i32_0 : i32, i32
  }
  func.func @transform_6(%arg0: i32) -> (i32, i32) {
    %c0_i32 = arith.constant 0 : i32
    %c0_i32_0 = arith.constant 0 : i32
    %c0_i32_1 = arith.constant 0 : i32
    return %c0_i32, %c0_i32_0 : i32, i32
  }
  func.func @transform_7(%arg0: i32) -> (i32, i32) {
    %c0_i32 = arith.constant 0 : i32
    %c0_i32_0 = arith.constant 0 : i32
    %c0_i32_1 = arith.constant 0 : i32
    return %c0_i32, %c0_i32_0 : i32, i32
  }
  func.func @transform_8(%arg0: i32) -> (i32, i32) {
    %c0_i32 = arith.constant 0 : i32
    %c0_i32_0 = arith.constant 0 : i32
    %c0_i32_1 = arith.constant 0 : i32
    return %c0_i32, %c0_i32_0 : i32, i32
  }
  func.func @transform_9(%arg0: i32) -> (i32, i32, i32) {
    %c0_i32 = arith.constant 0 : i32
    %c0_i32_0 = arith.constant 0 : i32
    %c0_i32_1 = arith.constant 0 : i32
    return %arg0, %c0_i32, %c0_i32_0 : i32, i32, i32
  }
}

module attributes {stable_mosaic.version = 11 : i64} {
  func.func @_decomp_kernel(%arg0: i32, %arg1: memref<1x20x32xf32, #tpu.memory_space<vmem>>, %arg2: memref<1x16x32xf32, #tpu.memory_space<vmem>>) attributes {dimension_semantics = [#tpu.dimension_semantics<parallel>], iteration_bounds = array<i64: 2>, scalar_prefetch = 0 : i64, scratch_operands = 0 : i64, tpu.core_type = #tpu.core_type<tc>, window_params = [{transform_indices = @transform_0, window_bounds = array<i64: 1, 20, 32>}, {transform_indices = @transform_1, window_bounds = array<i64: 1, 16, 32>}]} {
    %cst = arith.constant 0.000000e+00 : f32
    %0 = vector.broadcast %cst : f32 to vector<16x32xf32>
    %c0 = arith.constant 0 : index
    %c0_0 = arith.constant 0 : index
    %c0_1 = arith.constant 0 : index
    %1 = vector.load %arg1[%c0, %c0_0, %c0_1] : memref<1x20x32xf32, #tpu.memory_space<vmem>>, vector<1x16x32xf32>
    %2 = vector.shape_cast %1 : vector<1x16x32xf32> to vector<16x32xf32>
    %3 = arith.addf %0, %2 : vector<16x32xf32>
    %c0_2 = arith.constant 0 : index
    %c1 = arith.constant 1 : index
    %c0_3 = arith.constant 0 : index
    %4 = vector.load %arg1[%c0_2, %c1, %c0_3] : memref<1x20x32xf32, #tpu.memory_space<vmem>>, vector<1x16x32xf32>
    %5 = vector.shape_cast %4 : vector<1x16x32xf32> to vector<16x32xf32>
    %6 = arith.addf %3, %5 : vector<16x32xf32>
    %c0_4 = arith.constant 0 : index
    %c2 = arith.constant 2 : index
    %c0_5 = arith.constant 0 : index
    %7 = vector.load %arg1[%c0_4, %c2, %c0_5] : memref<1x20x32xf32, #tpu.memory_space<vmem>>, vector<1x16x32xf32>
    %8 = vector.shape_cast %7 : vector<1x16x32xf32> to vector<16x32xf32>
    %9 = arith.addf %6, %8 : vector<16x32xf32>
    %c0_6 = arith.constant 0 : index
    %c3 = arith.constant 3 : index
    %c0_7 = arith.constant 0 : index
    %10 = vector.load %arg1[%c0_6, %c3, %c0_7] : memref<1x20x32xf32, #tpu.memory_space<vmem>>, vector<1x16x32xf32>
    %11 = vector.shape_cast %10 : vector<1x16x32xf32> to vector<16x32xf32>
    %12 = arith.addf %9, %11 : vector<16x32xf32>
    %c0_8 = arith.constant 0 : index
    %c4 = arith.constant 4 : index
    %c0_9 = arith.constant 0 : index
    %13 = vector.load %arg1[%c0_8, %c4, %c0_9] : memref<1x20x32xf32, #tpu.memory_space<vmem>>, vector<1x16x32xf32>
    %14 = vector.shape_cast %13 : vector<1x16x32xf32> to vector<16x32xf32>
    %15 = arith.addf %12, %14 : vector<16x32xf32>
    %c0_10 = arith.constant 0 : index
    %c2_11 = arith.constant 2 : index
    %c0_12 = arith.constant 0 : index
    %16 = vector.load %arg1[%c0_10, %c2_11, %c0_12] : memref<1x20x32xf32, #tpu.memory_space<vmem>>, vector<1x16x32xf32>
    %17 = vector.shape_cast %16 : vector<1x16x32xf32> to vector<16x32xf32>
    %cst_13 = arith.constant 2.000000e-01 : f32
    %18 = vector.broadcast %cst_13 : f32 to vector<16x32xf32>
    %19 = arith.mulf %15, %18 : vector<16x32xf32>
    %20 = arith.subf %17, %19 : vector<16x32xf32>
    %c0_14 = arith.constant 0 : index
    %c0_15 = arith.constant 0 : index
    %c0_16 = arith.constant 0 : index
    %21 = vector.load %arg2[%c0_14, %c0_15, %c0_16] : memref<1x16x32xf32, #tpu.memory_space<vmem>>, vector<1x16x32xf32>
    %22 = vector.shape_cast %21 : vector<1x16x32xf32> to vector<16x32xf32>
    %23 = vector.shape_cast %20 : vector<16x32xf32> to vector<1x16x32xf32>
    tpu.vector_store %arg2[%c0_14, %c0_15, %c0_16], %23 {strides = array<i32>} : memref<1x16x32xf32, #tpu.memory_space<vmem>>, vector<1x16x32xf32>,
    return
  }
  func.func @transform_0(%arg0: i32) -> (i32, i32, i32) {
    %c0_i32 = arith.constant 0 : i32
    %c0_i32_0 = arith.constant 0 : i32
    %c0_i32_1 = arith.constant 0 : i32
    return %arg0, %c0_i32, %c0_i32_0 : i32, i32, i32
  }
  func.func @transform_1(%arg0: i32) -> (i32, i32, i32) {
    %c0_i32 = arith.constant 0 : i32
    %c0_i32_0 = arith.constant 0 : i32
    %c0_i32_1 = arith.constant 0 : i32
    return %arg0, %c0_i32, %c0_i32_0 : i32, i32, i32
  }
}

module attributes {stable_mosaic.version = 11 : i64} {
  func.func @_ln_add_kernel(%arg0: i32, %arg1: memref<32x32xf32, #tpu.memory_space<vmem>>, %arg2: memref<32x32xf32, #tpu.memory_space<vmem>>, %arg3: memref<1x32xf32, #tpu.memory_space<vmem>>, %arg4: memref<1x32xf32, #tpu.memory_space<vmem>>, %arg5: memref<32x32xf32, #tpu.memory_space<vmem>>) attributes {dimension_semantics = [#tpu.dimension_semantics<parallel>], iteration_bounds = array<i64: 1>, scalar_prefetch = 0 : i64, scratch_operands = 0 : i64, tpu.core_type = #tpu.core_type<tc>, window_params = [{transform_indices = @transform_0, window_bounds = array<i64: 32, 32>}, {transform_indices = @transform_1, window_bounds = array<i64: 32, 32>}, {pipeline_mode = #tpu.pipeline_mode<synchronous>, transform_indices = @transform_2, window_bounds = array<i64: 1, 32>}, {pipeline_mode = #tpu.pipeline_mode<synchronous>, transform_indices = @transform_3, window_bounds = array<i64: 1, 32>}, {transform_indices = @transform_4, window_bounds = array<i64: 32, 32>}]} {
    %c0 = arith.constant 0 : index
    %c0_0 = arith.constant 0 : index
    %0 = vector.load %arg1[%c0, %c0_0] : memref<32x32xf32, #tpu.memory_space<vmem>>, vector<32x32xf32>
    %c0_1 = arith.constant 0 : index
    %c0_2 = arith.constant 0 : index
    %1 = vector.load %arg2[%c0_1, %c0_2] : memref<32x32xf32, #tpu.memory_space<vmem>>, vector<32x32xf32>
    %2 = arith.addf %0, %1 : vector<32x32xf32>
    %cst = arith.constant dense<0.000000e+00> : vector<32xf32>
    %3 = vector.multi_reduction <add>, %2, %cst [1] : vector<32x32xf32> to vector<32xf32>
    %4 = vector.shape_cast %3 : vector<32xf32> to vector<32x1xf32>
    %cst_3 = arith.constant 3.200000e+01 : f32
    %5 = vector.broadcast %cst_3 : f32 to vector<32x1xf32>
    %6 = arith.divf %4, %5 : vector<32x1xf32>
    %7 = vector.broadcast %6 : vector<32x1xf32> to vector<32x32xf32>
    %8 = arith.subf %2, %7 : vector<32x32xf32>
    %9 = arith.mulf %8, %8 : vector<32x32xf32>
    %cst_4 = arith.constant dense<0.000000e+00> : vector<32xf32>
    %10 = vector.multi_reduction <add>, %9, %cst_4 [1] : vector<32x32xf32> to vector<32xf32>
    %11 = vector.shape_cast %10 : vector<32xf32> to vector<32x1xf32>
    %cst_5 = arith.constant 3.200000e+01 : f32
    %12 = vector.broadcast %cst_5 : f32 to vector<32x1xf32>
    %13 = arith.divf %11, %12 : vector<32x1xf32>
    %cst_6 = arith.constant 9.99999974E-6 : f32
    %14 = vector.broadcast %cst_6 : f32 to vector<32x1xf32>
    %15 = arith.addf %13, %14 : vector<32x1xf32>
    %16 = math.rsqrt %15 : vector<32x1xf32>
    %17 = vector.broadcast %16 : vector<32x1xf32> to vector<32x32xf32>
    %18 = arith.mulf %8, %17 : vector<32x32xf32>
    %c0_7 = arith.constant 0 : index
    %c0_8 = arith.constant 0 : index
    %19 = vector.load %arg3[%c0_7, %c0_8] : memref<1x32xf32, #tpu.memory_space<vmem>>, vector<1x32xf32>
    %20 = vector.broadcast %19 : vector<1x32xf32> to vector<32x32xf32>
    %21 = arith.mulf %18, %20 : vector<32x32xf32>
    %c0_9 = arith.constant 0 : index
    %c0_10 = arith.constant 0 : index
    %22 = vector.load %arg4[%c0_9, %c0_10] : memref<1x32xf32, #tpu.memory_space<vmem>>, vector<1x32xf32>
    %23 = vector.broadcast %22 : vector<1x32xf32> to vector<32x32xf32>
    %24 = arith.addf %21, %23 : vector<32x32xf32>
    %c0_11 = arith.constant 0 : index
    %c0_12 = arith.constant 0 : index
    %25 = vector.load %arg5[%c0_11, %c0_12] : memref<32x32xf32, #tpu.memory_space<vmem>>, vector<32x32xf32>
    tpu.vector_store %arg5[%c0_11, %c0_12], %24 {strides = array<i32>} : memref<32x32xf32, #tpu.memory_space<vmem>>, vector<32x32xf32>,
    return
  }
  func.func @transform_0(%arg0: i32) -> (i32, i32) {
    %c0_i32 = arith.constant 0 : i32
    %c0_i32_0 = arith.constant 0 : i32
    return %arg0, %c0_i32 : i32, i32
  }
  func.func @transform_1(%arg0: i32) -> (i32, i32) {
    %c0_i32 = arith.constant 0 : i32
    %c0_i32_0 = arith.constant 0 : i32
    return %arg0, %c0_i32 : i32, i32
  }
  func.func @transform_2(%arg0: i32) -> (i32, i32) {
    %c0_i32 = arith.constant 0 : i32
    %c0_i32_0 = arith.constant 0 : i32
    %c0_i32_1 = arith.constant 0 : i32
    return %c0_i32, %c0_i32_0 : i32, i32
  }
  func.func @transform_3(%arg0: i32) -> (i32, i32) {
    %c0_i32 = arith.constant 0 : i32
    %c0_i32_0 = arith.constant 0 : i32
    %c0_i32_1 = arith.constant 0 : i32
    return %c0_i32, %c0_i32_0 : i32, i32
  }
  func.func @transform_4(%arg0: i32) -> (i32, i32) {
    %c0_i32 = arith.constant 0 : i32
    %c0_i32_0 = arith.constant 0 : i32
    return %arg0, %c0_i32 : i32, i32
  }
}

module attributes {stable_mosaic.version = 11 : i64} {
  func.func @_branch_kernel(%arg0: i32, %arg1: memref<1x5x128xbf16, #tpu.memory_space<vmem>>, %arg2: memref<128x32xbf16, #tpu.memory_space<vmem>>, %arg3: memref<1x32xf32, #tpu.memory_space<vmem>>, %arg4: memref<160x32xbf16, #tpu.memory_space<vmem>>, %arg5: memref<1x32xf32, #tpu.memory_space<vmem>>, %arg6: memref<32x128xbf16, #tpu.memory_space<vmem>>, %arg7: memref<1x128xf32, #tpu.memory_space<vmem>>, %arg8: memref<1x32xf32, #tpu.memory_space<vmem>>, %arg9: memref<1x32xf32, #tpu.memory_space<vmem>>, %arg10: memref<1x5x128xf32, #tpu.memory_space<vmem>>, %arg11: memref<13x32xf32, #tpu.memory_space<vmem>>) attributes {dimension_semantics = [#tpu.dimension_semantics<parallel>], iteration_bounds = array<i64: 2>, scalar_prefetch = 0 : i64, scratch_operands = 1 : i64, tpu.core_type = #tpu.core_type<tc>, window_params = [{transform_indices = @transform_0, window_bounds = array<i64: 1, 5, 128>}, {pipeline_mode = #tpu.pipeline_mode<synchronous>, transform_indices = @transform_1, window_bounds = array<i64: 128, 32>}, {pipeline_mode = #tpu.pipeline_mode<synchronous>, transform_indices = @transform_2, window_bounds = array<i64: 1, 32>}, {pipeline_mode = #tpu.pipeline_mode<synchronous>, transform_indices = @transform_3, window_bounds = array<i64: 160, 32>}, {pipeline_mode = #tpu.pipeline_mode<synchronous>, transform_indices = @transform_4, window_bounds = array<i64: 1, 32>}, {pipeline_mode = #tpu.pipeline_mode<synchronous>, transform_indices = @transform_5, window_bounds = array<i64: 32, 128>}, {pipeline_mode = #tpu.pipeline_mode<synchronous>, transform_indices = @transform_6, window_bounds = array<i64: 1, 128>}, {pipeline_mode = #tpu.pipeline_mode<synchronous>, transform_indices = @transform_7, window_bounds = array<i64: 1, 32>}, {pipeline_mode = #tpu.pipeline_mode<synchronous>, transform_indices = @transform_8, window_bounds = array<i64: 1, 32>}, {transform_indices = @transform_9, window_bounds = array<i64: 1, 5, 128>}]} {
    %c0 = arith.constant 0 : index
    %c0_0 = arith.constant 0 : index
    %c0_1 = arith.constant 0 : index
    %0 = vector.load %arg1[%c0, %c0_0, %c0_1] : memref<1x5x128xbf16, #tpu.memory_space<vmem>>, vector<1x5x128xbf16>
    %1 = vector.shape_cast %0 : vector<1x5x128xbf16> to vector<5x128xbf16>
    %c0_2 = arith.constant 0 : index
    %c0_3 = arith.constant 0 : index
    %2 = vector.load %arg2[%c0_2, %c0_3] : memref<128x32xbf16, #tpu.memory_space<vmem>>, vector<128x32xbf16>
    %cst = arith.constant dense<0.000000e+00> : vector<5x32xf32>
    %3 = tpu.matmul %1, %2, %cst {dimension_numbers = #tpu.dot_dimension_numbers<[1], [0], [0], [1], [0, 0, 1, 1], [], []>} : vector<5x128xbf16>, vector<128x32xbf16>, vector<5x32xf32> -> vector<5x32xf32>
    %c0_4 = arith.constant 0 : index
    %c0_5 = arith.constant 0 : index
    %4 = vector.load %arg3[%c0_4, %c0_5] : memref<1x32xf32, #tpu.memory_space<vmem>>, vector<1x32xf32>
    %5 = vector.broadcast %4 : vector<1x32xf32> to vector<5x32xf32>
    %6 = arith.addf %3, %5 : vector<5x32xf32>
    %7 = math.tanh %6 : vector<5x32xf32>
    %cst_6 = arith.constant 0.000000e+00 : f32
    %8 = vector.broadcast %cst_6 : f32 to vector<8x32xf32>
    %c0_7 = arith.constant 0 : index
    %c0_8 = arith.constant 0 : index
    %9 = vector.load %arg11[%c0_7, %c0_8] : memref<13x32xf32, #tpu.memory_space<vmem>>, vector<8x32xf32>
    tpu.vector_store %arg11[%c0_7, %c0_8], %8 {strides = array<i32>} : memref<13x32xf32, #tpu.memory_space<vmem>>, vector<8x32xf32>,
    %c8 = arith.constant 8 : index
    %c0_9 = arith.constant 0 : index
    %10 = vector.load %arg11[%c8, %c0_9] : memref<13x32xf32, #tpu.memory_space<vmem>>, vector<5x32xf32>
    tpu.vector_store %arg11[%c8, %c0_9], %7 {strides = array<i32>} : memref<13x32xf32, #tpu.memory_space<vmem>>, vector<5x32xf32>,
    %cst_10 = arith.constant 0.000000e+00 : f32
    %11 = vector.broadcast %cst_10 : f32 to vector<5x32xf32>
    %c4 = arith.constant 4 : index
    %c0_11 = arith.constant 0 : index
    %12 = vector.load %arg11[%c4, %c0_11] : memref<13x32xf32, #tpu.memory_space<vmem>>, vector<5x32xf32>
    %13 = arith.truncf %12 : vector<5x32xf32> to vector<5x32xbf16>
    %c0_12 = arith.constant 0 : index
    %c0_13 = arith.constant 0 : index
    %14 = vector.load %arg4[%c0_12, %c0_13] : memref<160x32xbf16, #tpu.memory_space<vmem>>, vector<32x32xbf16>
    %cst_14 = arith.constant dense<0.000000e+00> : vector<5x32xf32>
    %15 = tpu.matmul %13, %14, %cst_14 {dimension_numbers = #tpu.dot_dimension_numbers<[1], [0], [0], [1], [0, 0, 1, 1], [], []>} : vector<5x32xbf16>, vector<32x32xbf16>, vector<5x32xf32> -> vector<5x32xf32>
    %16 = arith.addf %11, %15 : vector<5x32xf32>
    %c5 = arith.constant 5 : index
    %c0_15 = arith.constant 0 : index
    %17 = vector.load %arg11[%c5, %c0_15] : memref<13x32xf32, #tpu.memory_space<vmem>>, vector<5x32xf32>
    %18 = arith.truncf %17 : vector<5x32xf32> to vector<5x32xbf16>
    %c32 = arith.constant 32 : index
    %c0_16 = arith.constant 0 : index
    %19 = vector.load %arg4[%c32, %c0_16] : memref<160x32xbf16, #tpu.memory_space<vmem>>, vector<32x32xbf16>
    %cst_17 = arith.constant dense<0.000000e+00> : vector<5x32xf32>
    %20 = tpu.matmul %18, %19, %cst_17 {dimension_numbers = #tpu.dot_dimension_numbers<[1], [0], [0], [1], [0, 0, 1, 1], [], []>} : vector<5x32xbf16>, vector<32x32xbf16>, vector<5x32xf32> -> vector<5x32xf32>
    %21 = arith.addf %16, %20 : vector<5x32xf32>
    %c6 = arith.constant 6 : index
    %c0_18 = arith.constant 0 : index
    %22 = vector.load %arg11[%c6, %c0_18] : memref<13x32xf32, #tpu.memory_space<vmem>>, vector<5x32xf32>
    %23 = arith.truncf %22 : vector<5x32xf32> to vector<5x32xbf16>
    %c64 = arith.constant 64 : index
    %c0_19 = arith.constant 0 : index
    %24 = vector.load %arg4[%c64, %c0_19] : memref<160x32xbf16, #tpu.memory_space<vmem>>, vector<32x32xbf16>
    %cst_20 = arith.constant dense<0.000000e+00> : vector<5x32xf32>
    %25 = tpu.matmul %23, %24, %cst_20 {dimension_numbers = #tpu.dot_dimension_numbers<[1], [0], [0], [1], [0, 0, 1, 1], [], []>} : vector<5x32xbf16>, vector<32x32xbf16>, vector<5x32xf32> -> vector<5x32xf32>
    %26 = arith.addf %21, %25 : vector<5x32xf32>
    %c7 = arith.constant 7 : index
    %c0_21 = arith.constant 0 : index
    %27 = vector.load %arg11[%c7, %c0_21] : memref<13x32xf32, #tpu.memory_space<vmem>>, vector<5x32xf32>
    %28 = arith.truncf %27 : vector<5x32xf32> to vector<5x32xbf16>
    %c96 = arith.constant 96 : index
    %c0_22 = arith.constant 0 : index
    %29 = vector.load %arg4[%c96, %c0_22] : memref<160x32xbf16, #tpu.memory_space<vmem>>, vector<32x32xbf16>
    %cst_23 = arith.constant dense<0.000000e+00> : vector<5x32xf32>
    %30 = tpu.matmul %28, %29, %cst_23 {dimension_numbers = #tpu.dot_dimension_numbers<[1], [0], [0], [1], [0, 0, 1, 1], [], []>} : vector<5x32xbf16>, vector<32x32xbf16>, vector<5x32xf32> -> vector<5x32xf32>
    %31 = arith.addf %26, %30 : vector<5x32xf32>
    %c8_24 = arith.constant 8 : index
    %c0_25 = arith.constant 0 : index
    %32 = vector.load %arg11[%c8_24, %c0_25] : memref<13x32xf32, #tpu.memory_space<vmem>>, vector<5x32xf32>
    %33 = arith.truncf %32 : vector<5x32xf32> to vector<5x32xbf16>
    %c128 = arith.constant 128 : index
    %c0_26 = arith.constant 0 : index
    %34 = vector.load %arg4[%c128, %c0_26] : memref<160x32xbf16, #tpu.memory_space<vmem>>, vector<32x32xbf16>
    %cst_27 = arith.constant dense<0.000000e+00> : vector<5x32xf32>
    %35 = tpu.matmul %33, %34, %cst_27 {dimension_numbers = #tpu.dot_dimension_numbers<[1], [0], [0], [1], [0, 0, 1, 1], [], []>} : vector<5x32xbf16>, vector<32x32xbf16>, vector<5x32xf32> -> vector<5x32xf32>
    %36 = arith.addf %31, %35 : vector<5x32xf32>
    %c0_28 = arith.constant 0 : index
    %c0_29 = arith.constant 0 : index
    %37 = vector.load %arg5[%c0_28, %c0_29] : memref<1x32xf32, #tpu.memory_space<vmem>>, vector<1x32xf32>
    %38 = vector.broadcast %37 : vector<1x32xf32> to vector<5x32xf32>
    %39 = arith.addf %36, %38 : vector<5x32xf32>
    %40 = math.tanh %39 : vector<5x32xf32>
    %41 = arith.addf %40, %7 : vector<5x32xf32>
    %cst_30 = arith.constant dense<0.000000e+00> : vector<5xf32>
    %42 = vector.multi_reduction <add>, %41, %cst_30 [1] : vector<5x32xf32> to vector<5xf32>
    %43 = vector.shape_cast %42 : vector<5xf32> to vector<5x1xf32>
    %cst_31 = arith.constant 3.200000e+01 : f32
    %44 = vector.broadcast %cst_31 : f32 to vector<5x1xf32>
    %45 = arith.divf %43, %44 : vector<5x1xf32>
    %46 = vector.broadcast %45 : vector<5x1xf32> to vector<5x32xf32>
    %47 = arith.subf %41, %46 : vector<5x32xf32>
    %48 = arith.mulf %47, %47 : vector<5x32xf32>
    %cst_32 = arith.constant dense<0.000000e+00> : vector<5xf32>
    %49 = vector.multi_reduction <add>, %48, %cst_32 [1] : vector<5x32xf32> to vector<5xf32>
    %50 = vector.shape_cast %49 : vector<5xf32> to vector<5x1xf32>
    %cst_33 = arith.constant 3.200000e+01 : f32
    %51 = vector.broadcast %cst_33 : f32 to vector<5x1xf32>
    %52 = arith.divf %50, %51 : vector<5x1xf32>
    %cst_34 = arith.constant 9.99999974E-6 : f32
    %53 = vector.broadcast %cst_34 : f32 to vector<5x1xf32>
    %54 = arith.addf %52, %53 : vector<5x1xf32>
    %55 = math.rsqrt %54 : vector<5x1xf32>
    %56 = vector.broadcast %55 : vector<5x1xf32> to vector<5x32xf32>
    %57 = arith.mulf %47, %56 : vector<5x32xf32>
    %c0_35 = arith.constant 0 : index
    %c0_36 = arith.constant 0 : index
    %58 = vector.load %arg8[%c0_35, %c0_36] : memref<1x32xf32, #tpu.memory_space<vmem>>, vector<1x32xf32>
    %59 = vector.broadcast %58 : vector<1x32xf32> to vector<5x32xf32>
    %60 = arith.mulf %57, %59 : vector<5x32xf32>
    %c0_37 = arith.constant 0 : index
    %c0_38 = arith.constant 0 : index
    %61 = vector.load %arg9[%c0_37, %c0_38] : memref<1x32xf32, #tpu.memory_space<vmem>>, vector<1x32xf32>
    %62 = vector.broadcast %61 : vector<1x32xf32> to vector<5x32xf32>
    %63 = arith.addf %60, %62 : vector<5x32xf32>
    %64 = arith.truncf %63 : vector<5x32xf32> to vector<5x32xbf16>
    %c0_39 = arith.constant 0 : index
    %c0_40 = arith.constant 0 : index
    %65 = vector.load %arg6[%c0_39, %c0_40] : memref<32x128xbf16, #tpu.memory_space<vmem>>, vector<32x128xbf16>
    %cst_41 = arith.constant dense<0.000000e+00> : vector<5x128xf32>
    %66 = tpu.matmul %64, %65, %cst_41 {dimension_numbers = #tpu.dot_dimension_numbers<[1], [0], [0], [1], [0, 0, 1, 1], [], []>} : vector<5x32xbf16>, vector<32x128xbf16>, vector<5x128xf32> -> vector<5x128xf32>
    %c0_42 = arith.constant 0 : index
    %c0_43 = arith.constant 0 : index
    %67 = vector.load %arg7[%c0_42, %c0_43] : memref<1x128xf32, #tpu.memory_space<vmem>>, vector<1x128xf32>
    %68 = vector.broadcast %67 : vector<1x128xf32> to vector<5x128xf32>
    %69 = arith.addf %66, %68 : vector<5x128xf32>
    %70 = math.tanh %69 : vector<5x128xf32>
    %c0_44 = arith.constant 0 : index
    %c0_45 = arith.constant 0 : index
    %c0_46 = arith.constant 0 : index
    %71 = vector.load %arg10[%c0_44, %c0_45, %c0_46] : memref<1x5x128xf32, #tpu.memory_space<vmem>>, vector<1x5x128xf32>
    %72 = vector.shape_cast %71 : vector<1x5x128xf32> to vector<5x128xf32>
    %73 = vector.shape_cast %70 : vector<5x128xf32> to vector<1x5x128xf32>
    tpu.vector_store %arg10[%c0_44, %c0_45, %c0_46], %73 {strides = array<i32>} : memref<1x5x128xf32, #tpu.memory_space<vmem>>, vector<1x5x128xf32>,
    return
  }
  func.func @transform_0(%arg0: i32) -> (i32, i32, i32) {
    %c0_i32 = arith.constant 0 : i32
    %c0_i32_0 = arith.constant 0 : i32
    %c0_i32_1 = arith.constant 0 : i32
    return %arg0, %c0_i32, %c0_i32_0 : i32, i32, i32
  }
  func.func @transform_1(%arg0: i32) -> (i32, i32) {
    %c0_i32 = arith.constant 0 : i32
    %c0_i32_0 = arith.constant 0 : i32
    %c0_i32_1 = arith.constant 0 : i32
    return %c0_i32, %c0_i32_0 : i32, i32
  }
  func.func @transform_2(%arg0: i32) -> (i32, i32) {
    %c0_i32 = arith.constant 0 : i32
    %c0_i32_0 = arith.constant 0 : i32
    %c0_i32_1 = arith.constant 0 : i32
    return %c0_i32, %c0_i32_0 : i32, i32
  }
  func.func @transform_3(%arg0: i32) -> (i32, i32) {
    %c0_i32 = arith.constant 0 : i32
    %c0_i32_0 = arith.constant 0 : i32
    %c0_i32_1 = arith.constant 0 : i32
    return %c0_i32, %c0_i32_0 : i32, i32
  }
  func.func @transform_4(%arg0: i32) -> (i32, i32) {
    %c0_i32 = arith.constant 0 : i32
    %c0_i32_0 = arith.constant 0 : i32
    %c0_i32_1 = arith.constant 0 : i32
    return %c0_i32, %c0_i32_0 : i32, i32
  }
  func.func @transform_5(%arg0: i32) -> (i32, i32) {
    %c0_i32 = arith.constant 0 : i32
    %c0_i32_0 = arith.constant 0 : i32
    %c0_i32_1 = arith.constant 0 : i32
    return %c0_i32, %c0_i32_0 : i32, i32
  }
  func.func @transform_6(%arg0: i32) -> (i32, i32) {
    %c0_i32 = arith.constant 0 : i32
    %c0_i32_0 = arith.constant 0 : i32
    %c0_i32_1 = arith.constant 0 : i32
    return %c0_i32, %c0_i32_0 : i32, i32
  }
  func.func @transform_7(%arg0: i32) -> (i32, i32) {
    %c0_i32 = arith.constant 0 : i32
    %c0_i32_0 = arith.constant 0 : i32
    %c0_i32_1 = arith.constant 0 : i32
    return %c0_i32, %c0_i32_0 : i32, i32
  }
  func.func @transform_8(%arg0: i32) -> (i32, i32) {
    %c0_i32 = arith.constant 0 : i32
    %c0_i32_0 = arith.constant 0 : i32
    %c0_i32_1 = arith.constant 0 : i32
    return %c0_i32, %c0_i32_0 : i32, i32
  }
  func.func @transform_9(%arg0: i32) -> (i32, i32, i32) {
    %c0_i32 = arith.constant 0 : i32
    %c0_i32_0 = arith.constant 0 : i32
    %c0_i32_1 = arith.constant 0 : i32
    return %arg0, %c0_i32, %c0_i32_0 : i32, i32, i32
  }
}

module attributes {stable_mosaic.version = 11 : i64} {
  func.func @_merge_ffn_kernel(%arg0: i32, %arg1: memref<32x64xbf16, #tpu.memory_space<vmem>>, %arg2: memref<64x32xbf16, #tpu.memory_space<vmem>>, %arg3: memref<1x32xf32, #tpu.memory_space<vmem>>, %arg4: memref<1x32xf32, #tpu.memory_space<vmem>>, %arg5: memref<1x32xf32, #tpu.memory_space<vmem>>, %arg6: memref<32x128xbf16, #tpu.memory_space<vmem>>, %arg7: memref<1x128xf32, #tpu.memory_space<vmem>>, %arg8: memref<128x32xbf16, #tpu.memory_space<vmem>>, %arg9: memref<1x32xf32, #tpu.memory_space<vmem>>, %arg10: memref<1x32xf32, #tpu.memory_space<vmem>>, %arg11: memref<1x32xf32, #tpu.memory_space<vmem>>, %arg12: memref<32x32xf32, #tpu.memory_space<vmem>>) attributes {dimension_semantics = [#tpu.dimension_semantics<parallel>], iteration_bounds = array<i64: 1>, scalar_prefetch = 0 : i64, scratch_operands = 0 : i64, tpu.core_type = #tpu.core_type<tc>, window_params = [{transform_indices = @transform_0, window_bounds = array<i64: 32, 64>}, {pipeline_mode = #tpu.pipeline_mode<synchronous>, transform_indices = @transform_1, window_bounds = array<i64: 64, 32>}, {pipeline_mode = #tpu.pipeline_mode<synchronous>, transform_indices = @transform_2, window_bounds = array<i64: 1, 32>}, {pipeline_mode = #tpu.pipeline_mode<synchronous>, transform_indices = @transform_3, window_bounds = array<i64: 1, 32>}, {pipeline_mode = #tpu.pipeline_mode<synchronous>, transform_indices = @transform_4, window_bounds = array<i64: 1, 32>}, {pipeline_mode = #tpu.pipeline_mode<synchronous>, transform_indices = @transform_5, window_bounds = array<i64: 32, 128>}, {pipeline_mode = #tpu.pipeline_mode<synchronous>, transform_indices = @transform_6, window_bounds = array<i64: 1, 128>}, {pipeline_mode = #tpu.pipeline_mode<synchronous>, transform_indices = @transform_7, window_bounds = array<i64: 128, 32>}, {pipeline_mode = #tpu.pipeline_mode<synchronous>, transform_indices = @transform_8, window_bounds = array<i64: 1, 32>}, {pipeline_mode = #tpu.pipeline_mode<synchronous>, transform_indices = @transform_9, window_bounds = array<i64: 1, 32>}, {pipeline_mode = #tpu.pipeline_mode<synchronous>, transform_indices = @transform_10, window_bounds = array<i64: 1, 32>}, {transform_indices = @transform_11, window_bounds = array<i64: 32, 32>}]} {
    %c0 = arith.constant 0 : index
    %c0_0 = arith.constant 0 : index
    %0 = vector.load %arg1[%c0, %c0_0] : memref<32x64xbf16, #tpu.memory_space<vmem>>, vector<32x64xbf16>
    %c0_1 = arith.constant 0 : index
    %c0_2 = arith.constant 0 : index
    %1 = vector.load %arg2[%c0_1, %c0_2] : memref<64x32xbf16, #tpu.memory_space<vmem>>, vector<64x32xbf16>
    %cst = arith.constant dense<0.000000e+00> : vector<32x32xf32>
    %2 = tpu.matmul %0, %1, %cst {dimension_numbers = #tpu.dot_dimension_numbers<[1], [0], [0], [1], [0, 0, 1, 1], [], []>} : vector<32x64xbf16>, vector<64x32xbf16>, vector<32x32xf32> -> vector<32x32xf32>
    %c0_3 = arith.constant 0 : index
    %c0_4 = arith.constant 0 : index
    %3 = vector.load %arg3[%c0_3, %c0_4] : memref<1x32xf32, #tpu.memory_space<vmem>>, vector<1x32xf32>
    %4 = vector.broadcast %3 : vector<1x32xf32> to vector<32x32xf32>
    %5 = arith.addf %2, %4 : vector<32x32xf32>
    %cst_5 = arith.constant dense<0.000000e+00> : vector<32xf32>
    %6 = vector.multi_reduction <add>, %5, %cst_5 [1] : vector<32x32xf32> to vector<32xf32>
    %7 = vector.shape_cast %6 : vector<32xf32> to vector<32x1xf32>
    %cst_6 = arith.constant 3.200000e+01 : f32
    %8 = vector.broadcast %cst_6 : f32 to vector<32x1xf32>
    %9 = arith.divf %7, %8 : vector<32x1xf32>
    %10 = vector.broadcast %9 : vector<32x1xf32> to vector<32x32xf32>
    %11 = arith.subf %5, %10 : vector<32x32xf32>
    %12 = arith.mulf %11, %11 : vector<32x32xf32>
    %cst_7 = arith.constant dense<0.000000e+00> : vector<32xf32>
    %13 = vector.multi_reduction <add>, %12, %cst_7 [1] : vector<32x32xf32> to vector<32xf32>
    %14 = vector.shape_cast %13 : vector<32xf32> to vector<32x1xf32>
    %cst_8 = arith.constant 3.200000e+01 : f32
    %15 = vector.broadcast %cst_8 : f32 to vector<32x1xf32>
    %16 = arith.divf %14, %15 : vector<32x1xf32>
    %cst_9 = arith.constant 9.99999974E-6 : f32
    %17 = vector.broadcast %cst_9 : f32 to vector<32x1xf32>
    %18 = arith.addf %16, %17 : vector<32x1xf32>
    %19 = math.rsqrt %18 : vector<32x1xf32>
    %20 = vector.broadcast %19 : vector<32x1xf32> to vector<32x32xf32>
    %21 = arith.mulf %11, %20 : vector<32x32xf32>
    %c0_10 = arith.constant 0 : index
    %c0_11 = arith.constant 0 : index
    %22 = vector.load %arg4[%c0_10, %c0_11] : memref<1x32xf32, #tpu.memory_space<vmem>>, vector<1x32xf32>
    %23 = vector.broadcast %22 : vector<1x32xf32> to vector<32x32xf32>
    %24 = arith.mulf %21, %23 : vector<32x32xf32>
    %c0_12 = arith.constant 0 : index
    %c0_13 = arith.constant 0 : index
    %25 = vector.load %arg5[%c0_12, %c0_13] : memref<1x32xf32, #tpu.memory_space<vmem>>, vector<1x32xf32>
    %26 = vector.broadcast %25 : vector<1x32xf32> to vector<32x32xf32>
    %27 = arith.addf %24, %26 : vector<32x32xf32>
    %28 = arith.truncf %27 : vector<32x32xf32> to vector<32x32xbf16>
    %c0_14 = arith.constant 0 : index
    %c0_15 = arith.constant 0 : index
    %29 = vector.load %arg6[%c0_14, %c0_15] : memref<32x128xbf16, #tpu.memory_space<vmem>>, vector<32x128xbf16>
    %cst_16 = arith.constant dense<0.000000e+00> : vector<32x128xf32>
    %30 = tpu.matmul %28, %29, %cst_16 {dimension_numbers = #tpu.dot_dimension_numbers<[1], [0], [0], [1], [0, 0, 1, 1], [], []>} : vector<32x32xbf16>, vector<32x128xbf16>, vector<32x128xf32> -> vector<32x128xf32>
    %c0_17 = arith.constant 0 : index
    %c0_18 = arith.constant 0 : index
    %31 = vector.load %arg7[%c0_17, %c0_18] : memref<1x128xf32, #tpu.memory_space<vmem>>, vector<1x128xf32>
    %32 = vector.broadcast %31 : vector<1x128xf32> to vector<32x128xf32>
    %33 = arith.addf %30, %32 : vector<32x128xf32>
    %34 = arith.truncf %33 : vector<32x128xf32> to vector<32x128xbf16>
    %c0_19 = arith.constant 0 : index
    %c0_20 = arith.constant 0 : index
    %35 = vector.load %arg8[%c0_19, %c0_20] : memref<128x32xbf16, #tpu.memory_space<vmem>>, vector<128x32xbf16>
    %cst_21 = arith.constant dense<0.000000e+00> : vector<32x32xf32>
    %36 = tpu.matmul %34, %35, %cst_21 {dimension_numbers = #tpu.dot_dimension_numbers<[1], [0], [0], [1], [0, 0, 1, 1], [], []>} : vector<32x128xbf16>, vector<128x32xbf16>, vector<32x32xf32> -> vector<32x32xf32>
    %c0_22 = arith.constant 0 : index
    %c0_23 = arith.constant 0 : index
    %37 = vector.load %arg9[%c0_22, %c0_23] : memref<1x32xf32, #tpu.memory_space<vmem>>, vector<1x32xf32>
    %38 = vector.broadcast %37 : vector<1x32xf32> to vector<32x32xf32>
    %39 = arith.addf %36, %38 : vector<32x32xf32>
    %40 = arith.addf %5, %39 : vector<32x32xf32>
    %cst_24 = arith.constant dense<0.000000e+00> : vector<32xf32>
    %41 = vector.multi_reduction <add>, %40, %cst_24 [1] : vector<32x32xf32> to vector<32xf32>
    %42 = vector.shape_cast %41 : vector<32xf32> to vector<32x1xf32>
    %cst_25 = arith.constant 3.200000e+01 : f32
    %43 = vector.broadcast %cst_25 : f32 to vector<32x1xf32>
    %44 = arith.divf %42, %43 : vector<32x1xf32>
    %45 = vector.broadcast %44 : vector<32x1xf32> to vector<32x32xf32>
    %46 = arith.subf %40, %45 : vector<32x32xf32>
    %47 = arith.mulf %46, %46 : vector<32x32xf32>
    %cst_26 = arith.constant dense<0.000000e+00> : vector<32xf32>
    %48 = vector.multi_reduction <add>, %47, %cst_26 [1] : vector<32x32xf32> to vector<32xf32>
    %49 = vector.shape_cast %48 : vector<32xf32> to vector<32x1xf32>
    %cst_27 = arith.constant 3.200000e+01 : f32
    %50 = vector.broadcast %cst_27 : f32 to vector<32x1xf32>
    %51 = arith.divf %49, %50 : vector<32x1xf32>
    %cst_28 = arith.constant 9.99999974E-6 : f32
    %52 = vector.broadcast %cst_28 : f32 to vector<32x1xf32>
    %53 = arith.addf %51, %52 : vector<32x1xf32>
    %54 = math.rsqrt %53 : vector<32x1xf32>
    %55 = vector.broadcast %54 : vector<32x1xf32> to vector<32x32xf32>
    %56 = arith.mulf %46, %55 : vector<32x32xf32>
    %c0_29 = arith.constant 0 : index
    %c0_30 = arith.constant 0 : index
    %57 = vector.load %arg10[%c0_29, %c0_30] : memref<1x32xf32, #tpu.memory_space<vmem>>, vector<1x32xf32>
    %58 = vector.broadcast %57 : vector<1x32xf32> to vector<32x32xf32>
    %59 = arith.mulf %56, %58 : vector<32x32xf32>
    %c0_31 = arith.constant 0 : index
    %c0_32 = arith.constant 0 : index
    %60 = vector.load %arg11[%c0_31, %c0_32] : memref<1x32xf32, #tpu.memory_space<vmem>>, vector<1x32xf32>
    %61 = vector.broadcast %60 : vector<1x32xf32> to vector<32x32xf32>
    %62 = arith.addf %59, %61 : vector<32x32xf32>
    %c0_33 = arith.constant 0 : index
    %c0_34 = arith.constant 0 : index
    %63 = vector.load %arg12[%c0_33, %c0_34] : memref<32x32xf32, #tpu.memory_space<vmem>>, vector<32x32xf32>
    tpu.vector_store %arg12[%c0_33, %c0_34], %62 {strides = array<i32>} : memref<32x32xf32, #tpu.memory_space<vmem>>, vector<32x32xf32>,
    return
  }
  func.func @transform_0(%arg0: i32) -> (i32, i32) {
    %c0_i32 = arith.constant 0 : i32
    %c0_i32_0 = arith.constant 0 : i32
    return %arg0, %c0_i32 : i32, i32
  }
  func.func @transform_1(%arg0: i32) -> (i32, i32) {
    %c0_i32 = arith.constant 0 : i32
    %c0_i32_0 = arith.constant 0 : i32
    %c0_i32_1 = arith.constant 0 : i32
    return %c0_i32, %c0_i32_0 : i32, i32
  }
  func.func @transform_2(%arg0: i32) -> (i32, i32) {
    %c0_i32 = arith.constant 0 : i32
    %c0_i32_0 = arith.constant 0 : i32
    %c0_i32_1 = arith.constant 0 : i32
    return %c0_i32, %c0_i32_0 : i32, i32
  }
  func.func @transform_3(%arg0: i32) -> (i32, i32) {
    %c0_i32 = arith.constant 0 : i32
    %c0_i32_0 = arith.constant 0 : i32
    %c0_i32_1 = arith.constant 0 : i32
    return %c0_i32, %c0_i32_0 : i32, i32
  }
  func.func @transform_4(%arg0: i32) -> (i32, i32) {
    %c0_i32 = arith.constant 0 : i32
    %c0_i32_0 = arith.constant 0 : i32
    %c0_i32_1 = arith.constant 0 : i32
    return %c0_i32, %c0_i32_0 : i32, i32
  }
  func.func @transform_5(%arg0: i32) -> (i32, i32) {
    %c0_i32 = arith.constant 0 : i32
    %c0_i32_0 = arith.constant 0 : i32
    %c0_i32_1 = arith.constant 0 : i32
    return %c0_i32, %c0_i32_0 : i32, i32
  }
  func.func @transform_6(%arg0: i32) -> (i32, i32) {
    %c0_i32 = arith.constant 0 : i32
    %c0_i32_0 = arith.constant 0 : i32
    %c0_i32_1 = arith.constant 0 : i32
    return %c0_i32, %c0_i32_0 : i32, i32
  }
  func.func @transform_7(%arg0: i32) -> (i32, i32) {
    %c0_i32 = arith.constant 0 : i32
    %c0_i32_0 = arith.constant 0 : i32
    %c0_i32_1 = arith.constant 0 : i32
    return %c0_i32, %c0_i32_0 : i32, i32
  }
  func.func @transform_8(%arg0: i32) -> (i32, i32) {
    %c0_i32 = arith.constant 0 : i32
    %c0_i32_0 = arith.constant 0 : i32
    %c0_i32_1 = arith.constant 0 : i32
    return %c0_i32, %c0_i32_0 : i32, i32
  }
  func.func @transform_9(%arg0: i32) -> (i32, i32) {
    %c0_i32 = arith.constant 0 : i32
    %c0_i32_0 = arith.constant 0 : i32
    %c0_i32_1 = arith.constant 0 : i32
    return %c0_i32, %c0_i32_0 : i32, i32
  }
  func.func @transform_10(%arg0: i32) -> (i32, i32) {
    %c0_i32 = arith.constant 0 : i32
    %c0_i32_0 = arith.constant 0 : i32
    %c0_i32_1 = arith.constant 0 : i32
    return %c0_i32, %c0_i32_0 : i32, i32
  }
  func.func @transform_11(%arg0: i32) -> (i32, i32) {
    %c0_i32 = arith.constant 0 : i32
    %c0_i32_0 = arith.constant 0 : i32
    return %arg0, %c0_i32 : i32, i32
  }
}

</mosaic_0001>

<llo_original>
// kernel: tile.13
$region0: #{tile.13}
  #allocation0 [shape = 's32[1]{0}', space=sflag, size = 0x4, scoped, tag = 'scoped memory for tile.13']
  %s0 = inlined_call_operand.vmem [shape: f32[32], index: 0, kind: input, shape index: {}]
  %s1 = inlined_call_operand.vmem [shape: f32[2,32], index: 1, kind: output, shape index: {}]
  // Predicated region
  $region2: #{tile.13} parent=0 // pred_check
    _
  $region3: #{tile.13} parent=0 // pred_check_branch
    %3 = sbr.rel (0) target = $region5
  $region4: #{tile.13} parent=0 // pred_region
    _
  $region5: #{tile.13} parent=0 // pred_fallthru
    _
  %v4 = vld [vmem:[%s0] ss:$0 sm:$0xff]
  %5 = vst [vmem:[%s1] sm:$0x3] %v4

// kernel: tile.14
$region0: #{tile.14}
  %s0 = inlined_call_operand.vmem [shape: f32[2,32], index: 0, kind: input, shape index: {}]
  %s1 = inlined_call_operand.vmem [shape: f32[1,64], index: 1, kind: output, shape index: {}]
  $region1: #{tile.14} parent=0
    #allocation0 [shape = 'u8[4096]{0}', space=vmem, size = 0x1000, scoped, tag = 'scoped mem for output reshape']
    #allocation1 [shape = 'u8[4096]{0}', space=vmem, size = 0x1000, scoped, tag = 'scoped mem for input reshape']
    %s3 = ssub.s32 4, 1
    %v4 = vld [vmem:[%s0] sm:%s3]
    %5 = vst [vmem:[#allocation1] sm:%s3] %v4
    %v6 = vld [vmem:[#allocation1] sm:$0x1]
    %vm7 = vcmask 261120
    %8 = vst.msk [vmem:[#allocation0] sm:$0x1] %vm7, %v6
    %s9 = scalar_lea.vmem [#allocation1], 1
    %v10 = vld [vmem:[%s9] sm:$0x1]
    %11 = vrot.lane.b32.xlu0 %v10, 32
    %v12 = vpop.permute.xlu0 %11
    %vm13 = vcmask 523520
    %14 = vst.msk [vmem:[#allocation0] sm:$0x1] %vm13, %v12
    %s16 = ssub.s32 2, 1
    %v17 = vld [vmem:[#allocation0] sm:%s16]
    %s19 = ssub.s32 2, 1
    %20 = vst [vmem:[%s1] sm:%s19] %v17

// kernel: mic_forward.7
$region0: #{mic_forward.7}
  #allocation0 [shape = 'u32[]', space=smem, size = 0x4, offset = 0x4, fixed_abs, tag = 'smem constant byte address 0x4 - core index']
  #allocation1 [shape = 'u32[72,128]{1,0:T(1,128)}', space=vmem, size = 0x9000, scoped, tag = 'internal scratch']
  %s0 = inlined_call_operand.vmem [shape: f32[2,18,32], index: 0, kind: input, shape index: {}]
  %s1 = inlined_call_operand.vmem [shape: f32[2,16,32], index: 1, kind: output, shape index: {}]
  %s2 = sld [smem:[#allocation0]]
  $region37: #{mic_forward.7} parent=0
    _
  %s4 = ssub.s32 1, %s2
  %s5 = scalar_select 0, %s4, %s2
  loop: start=0, step=1, limit=4
  $region2: #{mic_forward.7} parent=0 // loop_pre_header
    _
  $region3: #{mic_forward.7} parent=0 // loop_header
    %s7 = sphi 0, %s11
    %p8 = scmp.ge.s32.totalorder %s7, 4
    %s17 = sphi 0, %s19
    %s20 = sphi 0, %s17
    %s21 = sphi 0, %s20
    %s37 = sphi 0, %s21
    %s43 = sphi 0, %s45
    %s46 = sphi 0, %s43
    %s47 = sphi 0, %s46
    %s63 = sphi 0, %s47
  $region4: #{mic_forward.7} parent=0 // loop_header_branch
    %10 = sbr.rel (%p8) target = $region8
  $region5: #{mic_forward.7} parent=0 // loop_body
    %s12 = ssub.s32 %s7, 1
    %s13 = ssub.s32 %s7, 2
    %s14 = sadd.s32 %s7, 1
    %s15 = ssub.s32 %s7, %s14
    %p16 = scmp.eq.s32.totalorder %s15, 0
    %s18 = sadd.s32 %s17, 1
    %s19 = scalar_select %p16, %s17, %s18
    %p22 = pneg %p16
    %p23 = scmp.eq.s32.totalorder %s7, 1
    %p24 = por %p22, %p23
    %p25 = scmp.ne.s32.totalorder %s17, %s20
    %p26 = scmp.eq.s32.totalorder %s7, 0
    %p27 = por %p25, %p26
    %p28 = scmp.ne.s32.totalorder %s17, %s20
    %p29 = scmp.eq.s32.totalorder %s12, 1
    %p30 = por %p28, %p29
    %p31 = scmp.ne.s32.totalorder %s20, %s21
    %p32 = scmp.eq.s32.totalorder %s12, 0
    %p33 = por %p31, %p32
    %p34 = scmp.ne.s32.totalorder %s20, %s21
    %p35 = scmp.eq.s32.totalorder %s13, 1
    %p36 = por %p34, %p35
    %p38 = scmp.ne.s32.totalorder %s21, %s37
    %p39 = scmp.eq.s32.totalorder %s13, 0
    %p40 = por %p38, %p39
    %s41 = ssub.s32 %s7, %s14
    %p42 = scmp.eq.s32.totalorder %s41, 0
    %s44 = sadd.s32 %s43, 1
    %s45 = scalar_select %p42, %s43, %s44
    %p48 = pneg %p42
    %p49 = scmp.eq.s32.totalorder %s7, 1
    %p50 = por %p48, %p49
    %p51 = scmp.ne.s32.totalorder %s43, %s46
    %p52 = scmp.eq.s32.totalorder %s7, 0
    %p53 = por %p51, %p52
    %p54 = scmp.ne.s32.totalorder %s43, %s46
    %p55 = scmp.eq.s32.totalorder %s12, 1
    %p56 = por %p54, %p55
    %p57 = scmp.ne.s32.totalorder %s46, %s47
    %p58 = scmp.eq.s32.totalorder %s12, 0
    %p59 = por %p57, %p58
    %p60 = scmp.ne.s32.totalorder %s46, %s47
    %p61 = scmp.eq.s32.totalorder %s13, 1
    %p62 = por %p60, %p61
    %p64 = scmp.ne.s32.totalorder %s47, %s63
    %p65 = scmp.eq.s32.totalorder %s13, 0
    %p66 = por %p64, %p65
    %p67 = scmp.le.s32.totalorder 1, %s7
    %p68 = scmp.lt.s32.totalorder %s7, 3
    %p69 = pnand %p67, %p68
    %p70 = pneg %p69
    // Predicated region
    $region9: #{mic_forward.7} parent=5 // pred_check
      _
    $region10: #{mic_forward.7} parent=5 // pred_check_branch
      %72 = sbr.rel (%p69) target = $region12
    $region11: #{mic_forward.7} parent=5 // pred_region
      %s73 = ssub.s32 %s7, 1
    $region12: #{mic_forward.7} parent=5 // pred_fallthru
      _
    %p74 = scmp.lt.s32.totalorder %s7, 2
    // Predicated region
    $region13: #{mic_forward.7} parent=5 // pred_check
      %p75 = pneg %p74
    $region14: #{mic_forward.7} parent=5 // pred_check_branch
      %77 = sbr.rel (%p75) target = $region16
    $region15: #{mic_forward.7} parent=5 // pred_region
      // Predicated region
      $region17: #{mic_forward.7} parent=15 // pred_check
        %p78 = pneg %p27
      $region18: #{mic_forward.7} parent=15 // pred_check_branch
        %80 = sbr.rel (%p78) target = $region20
      $region19: #{mic_forward.7} parent=15 // pred_region
        %p81 = scmp.lt.s32.totalorder %s7, 1
        %s82 = scalar_select %p81, %s7, 1
        %s83 = smul.addr %s82, 3
        %s84 = smul.addr %s83, 8
        %s85 = scalar_lea.vmem %s0, %s84
      $region20: #{mic_forward.7} parent=15 // pred_fallthru
        _
    $region16: #{mic_forward.7} parent=5 // pred_fallthru
      _
    %p86 = scmp.le.s32.totalorder 1, %s7
    %p87 = scmp.lt.s32.totalorder %s7, 3
    %p88 = pnand %p86, %p87
    %p89 = pneg %p88
    // Predicated region
    $region21: #{mic_forward.7} parent=5 // pred_check
      _
    $region22: #{mic_forward.7} parent=5 // pred_check_branch
      %91 = sbr.rel (%p88) target = $region24
    $region23: #{mic_forward.7} parent=5 // pred_region
      %s92 = ssub.s32 %s7, 1
      %p93 = scmp.lt.s32.totalorder %s12, 1
      %s94 = scalar_select %p93, %s12, 1
      %s95 = smul.addr %s94, 3
      %s96 = smul.addr %s95, 8
      %s97 = scalar_lea.vmem %s0, %s96
      %p98 = pneg %p33
      %p99 = pneg %p30
      %p100 = pneg %p59
      %p101 = pneg %p56
      %p102 = scmp.lt.s32.totalorder %s12, 1
      %s103 = scalar_select %p102, %s12, 1
      %s104 = smul.addr %s103, 2
      %s105 = smul.addr %s104, 8
      %s106 = scalar_lea.vmem %s1, %s105
      %p107 = scmp.lt.s32.totalorder %s12, 1
      %s108 = scalar_select %p107, %s12, 1
      %s109 = smul.addr %s108, 3
      %s110 = smul.addr %s109, 8
      %s111 = scalar_lea.vmem %s0, %s110
      %p112 = scmp.lt.s32.totalorder %s12, 1
      %s113 = scalar_select %p112, %s12, 1
      %s114 = smul.addr %s113, 2
      %s115 = smul.addr %s114, 8
      %s116 = scalar_lea.vmem %s1, %s115
      %v117 = vld [vmem:[%s111] sm:$0xff]
      %v118 = vld [vmem:[%s111 + $0x8] sm:$0xff]
      %v119 = vadd.f32 %v117, 0.0
      %v120 = vadd.f32 %v118, 0.0
      %v121 = vld [vmem:[%s111 + $0x1] sm:$0xff]
      %v122 = vld [vmem:[%s111 + $0x9] sm:$0xff]
      %v123 = vadd.f32 %v119, %v121
      %v124 = vadd.f32 %v120, %v122
      %v125 = vld [vmem:[%s111 + $0x2] sm:$0xff]
      %v126 = vld [vmem:[%s111 + $0xa] sm:$0xff]
      %v127 = vadd.f32 %v123, %v125
      %v128 = vadd.f32 %v124, %v126
      %v129 = vmul.f32 %v127, 0.33333334
      %v130 = vmul.f32 %v128, 0.33333334
      %v131 = vsub.f32 %v121, %v129
      %v132 = vsub.f32 %v122, %v130
      %vm133 = vcmask 261120
      %134 = vst.msk [vmem:[%s116] sm:$0xff] %vm133, %v131
      %135 = vst.msk [vmem:[%s116 + $0x8] sm:$0xff] %vm133, %v132
      %p136 = scmp.lt.s32.totalorder %s12, 1
      %s137 = scalar_select %p136, %s12, 1
      %s138 = smul.addr %s137, 2
      %s139 = smul.addr %s138, 8
      %s140 = scalar_lea.vmem %s1, %s139
      // Predicated region
      $region25: #{mic_forward.7} parent=23 // pred_check
        %p141 = pneg %p56
      $region26: #{mic_forward.7} parent=23 // pred_check_branch
        %143 = sbr.rel (%p141) target = $region28
      $region27: #{mic_forward.7} parent=23 // pred_region
        _
      $region28: #{mic_forward.7} parent=23 // pred_fallthru
        _
    $region24: #{mic_forward.7} parent=5 // pred_fallthru
      _
    %p144 = scmp.le.s32.totalorder 2, %s7
    // Predicated region
    $region29: #{mic_forward.7} parent=5 // pred_check
      %p145 = pneg %p144
    $region30: #{mic_forward.7} parent=5 // pred_check_branch
      %147 = sbr.rel (%p145) target = $region32
    $region31: #{mic_forward.7} parent=5 // pred_region
      %s148 = ssub.s32 %s7, 2
      // Predicated region
      $region33: #{mic_forward.7} parent=31 // pred_check
        %p149 = pneg %p62
      $region34: #{mic_forward.7} parent=31 // pred_check_branch
        %151 = sbr.rel (%p149) target = $region36
      $region35: #{mic_forward.7} parent=31 // pred_region
        %p152 = scmp.lt.s32.totalorder %s13, 1
        %s153 = scalar_select %p152, %s13, 1
        %s154 = smul.addr %s153, 2
        %s155 = smul.addr %s154, 8
        %s156 = scalar_lea.vmem %s1, %s155
      $region36: #{mic_forward.7} parent=31 // pred_fallthru
        _
    $region32: #{mic_forward.7} parent=5 // pred_fallthru
      _
  $region6: #{mic_forward.7} parent=0 // loop_footer
    %s11 = sadd.s32 1, %s7
  $region7: #{mic_forward.7} parent=0 // loop_footer_branch
    %6 = sbr.rel target = $region3
  $region8: #{mic_forward.7} parent=0 // loop_exit
    _

// kernel: mic_forward.10
$region0: #{mic_forward.10}
  #allocation0 [shape = 'u32[]', space=smem, size = 0x4, offset = 0x4, fixed_abs, tag = 'smem constant byte address 0x4 - core index']
  #allocation1 [shape = 'u32[72,128]{1,0:T(1,128)}', space=vmem, size = 0x9000, scoped, tag = 'internal scratch']
  %s0 = inlined_call_operand.vmem [shape: f32[2,20,32], index: 0, kind: input, shape index: {}]
  %s1 = inlined_call_operand.vmem [shape: f32[2,16,32], index: 1, kind: output, shape index: {}]
  %s2 = sld [smem:[#allocation0]]
  $region37: #{mic_forward.10} parent=0
    _
  %s4 = ssub.s32 1, %s2
  %s5 = scalar_select 0, %s4, %s2
  loop: start=0, step=1, limit=4
  $region2: #{mic_forward.10} parent=0 // loop_pre_header
    _
  $region3: #{mic_forward.10} parent=0 // loop_header
    %s7 = sphi 0, %s11
    %p8 = scmp.ge.s32.totalorder %s7, 4
    %s17 = sphi 0, %s19
    %s20 = sphi 0, %s17
    %s21 = sphi 0, %s20
    %s37 = sphi 0, %s21
    %s43 = sphi 0, %s45
    %s46 = sphi 0, %s43
    %s47 = sphi 0, %s46
    %s63 = sphi 0, %s47
  $region4: #{mic_forward.10} parent=0 // loop_header_branch
    %10 = sbr.rel (%p8) target = $region8
  $region5: #{mic_forward.10} parent=0 // loop_body
    %s12 = ssub.s32 %s7, 1
    %s13 = ssub.s32 %s7, 2
    %s14 = sadd.s32 %s7, 1
    %s15 = ssub.s32 %s7, %s14
    %p16 = scmp.eq.s32.totalorder %s15, 0
    %s18 = sadd.s32 %s17, 1
    %s19 = scalar_select %p16, %s17, %s18
    %p22 = pneg %p16
    %p23 = scmp.eq.s32.totalorder %s7, 1
    %p24 = por %p22, %p23
    %p25 = scmp.ne.s32.totalorder %s17, %s20
    %p26 = scmp.eq.s32.totalorder %s7, 0
    %p27 = por %p25, %p26
    %p28 = scmp.ne.s32.totalorder %s17, %s20
    %p29 = scmp.eq.s32.totalorder %s12, 1
    %p30 = por %p28, %p29
    %p31 = scmp.ne.s32.totalorder %s20, %s21
    %p32 = scmp.eq.s32.totalorder %s12, 0
    %p33 = por %p31, %p32
    %p34 = scmp.ne.s32.totalorder %s20, %s21
    %p35 = scmp.eq.s32.totalorder %s13, 1
    %p36 = por %p34, %p35
    %p38 = scmp.ne.s32.totalorder %s21, %s37
    %p39 = scmp.eq.s32.totalorder %s13, 0
    %p40 = por %p38, %p39
    %s41 = ssub.s32 %s7, %s14
    %p42 = scmp.eq.s32.totalorder %s41, 0
    %s44 = sadd.s32 %s43, 1
    %s45 = scalar_select %p42, %s43, %s44
    %p48 = pneg %p42
    %p49 = scmp.eq.s32.totalorder %s7, 1
    %p50 = por %p48, %p49
    %p51 = scmp.ne.s32.totalorder %s43, %s46
    %p52 = scmp.eq.s32.totalorder %s7, 0
    %p53 = por %p51, %p52
    %p54 = scmp.ne.s32.totalorder %s43, %s46
    %p55 = scmp.eq.s32.totalorder %s12, 1
    %p56 = por %p54, %p55
    %p57 = scmp.ne.s32.totalorder %s46, %s47
    %p58 = scmp.eq.s32.totalorder %s12, 0
    %p59 = por %p57, %p58
    %p60 = scmp.ne.s32.totalorder %s46, %s47
    %p61 = scmp.eq.s32.totalorder %s13, 1
    %p62 = por %p60, %p61
    %p64 = scmp.ne.s32.totalorder %s47, %s63
    %p65 = scmp.eq.s32.totalorder %s13, 0
    %p66 = por %p64, %p65
    %p67 = scmp.le.s32.totalorder 1, %s7
    %p68 = scmp.lt.s32.totalorder %s7, 3
    %p69 = pnand %p67, %p68
    %p70 = pneg %p69
    // Predicated region
    $region9: #{mic_forward.10} parent=5 // pred_check
      _
    $region10: #{mic_forward.10} parent=5 // pred_check_branch
      %72 = sbr.rel (%p69) target = $region12
    $region11: #{mic_forward.10} parent=5 // pred_region
      %s73 = ssub.s32 %s7, 1
    $region12: #{mic_forward.10} parent=5 // pred_fallthru
      _
    %p74 = scmp.lt.s32.totalorder %s7, 2
    // Predicated region
    $region13: #{mic_forward.10} parent=5 // pred_check
      %p75 = pneg %p74
    $region14: #{mic_forward.10} parent=5 // pred_check_branch
      %77 = sbr.rel (%p75) target = $region16
    $region15: #{mic_forward.10} parent=5 // pred_region
      // Predicated region
      $region17: #{mic_forward.10} parent=15 // pred_check
        %p78 = pneg %p27
      $region18: #{mic_forward.10} parent=15 // pred_check_branch
        %80 = sbr.rel (%p78) target = $region20
      $region19: #{mic_forward.10} parent=15 // pred_region
        %p81 = scmp.lt.s32.totalorder %s7, 1
        %s82 = scalar_select %p81, %s7, 1
        %s83 = smul.addr %s82, 3
        %s84 = smul.addr %s83, 8
        %s85 = scalar_lea.vmem %s0, %s84
      $region20: #{mic_forward.10} parent=15 // pred_fallthru
        _
    $region16: #{mic_forward.10} parent=5 // pred_fallthru
      _
    %p86 = scmp.le.s32.totalorder 1, %s7
    %p87 = scmp.lt.s32.totalorder %s7, 3
    %p88 = pnand %p86, %p87
    %p89 = pneg %p88
    // Predicated region
    $region21: #{mic_forward.10} parent=5 // pred_check
      _
    $region22: #{mic_forward.10} parent=5 // pred_check_branch
      %91 = sbr.rel (%p88) target = $region24
    $region23: #{mic_forward.10} parent=5 // pred_region
      %s92 = ssub.s32 %s7, 1
      %p93 = scmp.lt.s32.totalorder %s12, 1
      %s94 = scalar_select %p93, %s12, 1
      %s95 = smul.addr %s94, 3
      %s96 = smul.addr %s95, 8
      %s97 = scalar_lea.vmem %s0, %s96
      %p98 = pneg %p33
      %p99 = pneg %p30
      %p100 = pneg %p59
      %p101 = pneg %p56
      %p102 = scmp.lt.s32.totalorder %s12, 1
      %s103 = scalar_select %p102, %s12, 1
      %s104 = smul.addr %s103, 2
      %s105 = smul.addr %s104, 8
      %s106 = scalar_lea.vmem %s1, %s105
      %p107 = scmp.lt.s32.totalorder %s12, 1
      %s108 = scalar_select %p107, %s12, 1
      %s109 = smul.addr %s108, 3
      %s110 = smul.addr %s109, 8
      %s111 = scalar_lea.vmem %s0, %s110
      %p112 = scmp.lt.s32.totalorder %s12, 1
      %s113 = scalar_select %p112, %s12, 1
      %s114 = smul.addr %s113, 2
      %s115 = smul.addr %s114, 8
      %s116 = scalar_lea.vmem %s1, %s115
      %v117 = vld [vmem:[%s111] sm:$0xff]
      %v118 = vld [vmem:[%s111 + $0x8] sm:$0xff]
      %v119 = vadd.f32 %v117, 0.0
      %v120 = vadd.f32 %v118, 0.0
      %v121 = vld [vmem:[%s111 + $0x1] sm:$0xff]
      %v122 = vld [vmem:[%s111 + $0x9] sm:$0xff]
      %v123 = vadd.f32 %v119, %v121
      %v124 = vadd.f32 %v120, %v122
      %v125 = vld [vmem:[%s111 + $0x2] sm:$0xff]
      %v126 = vld [vmem:[%s111 + $0xa] sm:$0xff]
      %v127 = vadd.f32 %v123, %v125
      %v128 = vadd.f32 %v124, %v126
      %v129 = vld [vmem:[%s111 + $0x3] sm:$0xff]
      %v130 = vld [vmem:[%s111 + $0xb] sm:$0xff]
      %v131 = vadd.f32 %v127, %v129
      %v132 = vadd.f32 %v128, %v130
      %v133 = vld [vmem:[%s111 + $0x4] sm:$0xff]
      %v134 = vld [vmem:[%s111 + $0xc] sm:$0xff]
      %v135 = vadd.f32 %v131, %v133
      %v136 = vadd.f32 %v132, %v134
      %v137 = vmul.f32 %v135, 0.2
      %v138 = vmul.f32 %v136, 0.2
      %v139 = vsub.f32 %v125, %v137
      %v140 = vsub.f32 %v126, %v138
      %vm141 = vcmask 261120
      %142 = vst.msk [vmem:[%s116] sm:$0xff] %vm141, %v139
      %143 = vst.msk [vmem:[%s116 + $0x8] sm:$0xff] %vm141, %v140
      %p144 = scmp.lt.s32.totalorder %s12, 1
      %s145 = scalar_select %p144, %s12, 1
      %s146 = smul.addr %s145, 2
      %s147 = smul.addr %s146, 8
      %s148 = scalar_lea.vmem %s1, %s147
      // Predicated region
      $region25: #{mic_forward.10} parent=23 // pred_check
        %p149 = pneg %p56
      $region26: #{mic_forward.10} parent=23 // pred_check_branch
        %151 = sbr.rel (%p149) target = $region28
      $region27: #{mic_forward.10} parent=23 // pred_region
        _
      $region28: #{mic_forward.10} parent=23 // pred_fallthru
        _
    $region24: #{mic_forward.10} parent=5 // pred_fallthru
      _
    %p152 = scmp.le.s32.totalorder 2, %s7
    // Predicated region
    $region29: #{mic_forward.10} parent=5 // pred_check
      %p153 = pneg %p152
    $region30: #{mic_forward.10} parent=5 // pred_check_branch
      %155 = sbr.rel (%p153) target = $region32
    $region31: #{mic_forward.10} parent=5 // pred_region
      %s156 = ssub.s32 %s7, 2
      // Predicated region
      $region33: #{mic_forward.10} parent=31 // pred_check
        %p157 = pneg %p62
      $region34: #{mic_forward.10} parent=31 // pred_check_branch
        %159 = sbr.rel (%p157) target = $region36
      $region35: #{mic_forward.10} parent=31 // pred_region
        %p160 = scmp.lt.s32.totalorder %s13, 1
        %s161 = scalar_select %p160, %s13, 1
        %s162 = smul.addr %s161, 2
        %s163 = smul.addr %s162, 8
        %s164 = scalar_lea.vmem %s1, %s163
      $region36: #{mic_forward.10} parent=31 // pred_fallthru
        _
    $region32: #{mic_forward.10} parent=5 // pred_fallthru
      _
  $region6: #{mic_forward.10} parent=0 // loop_footer
    %s11 = sadd.s32 1, %s7
  $region7: #{mic_forward.10} parent=0 // loop_footer_branch
    %6 = sbr.rel target = $region3
  $region8: #{mic_forward.10} parent=0 // loop_exit
    _

// kernel: mic_forward.9
$region0: #{mic_forward.9}
  #allocation0 [shape = 'u32[]', space=smem, size = 0x4, offset = 0x4, fixed_abs, tag = 'smem constant byte address 0x4 - core index']
  #allocation1 [shape = 'u32[72,128]{1,0:T(1,128)}', space=vmem, size = 0x9000, scoped, tag = 'internal scratch']
  %s0 = inlined_call_operand.vmem [shape: f32[32,32], index: 0, kind: input, shape index: {}]
  %s1 = inlined_call_operand.vmem [shape: f32[32,32], index: 1, kind: input, shape index: {}]
  %s2 = inlined_call_operand.vmem [shape: f32[1,32], index: 2, kind: input, shape index: {}]
  %s3 = inlined_call_operand.vmem [shape: f32[1,32], index: 3, kind: input, shape index: {}]
  %s4 = inlined_call_operand.vmem [shape: f32[32,32], index: 4, kind: output, shape index: {}]
  %s5 = sld [smem:[#allocation0]]
  $region26: #{mic_forward.9} parent=0
    _
  %s7 = ssub.s32 1, %s5
  %s8 = scalar_select 0, %s7, %s5
  // Predicated region
  $region2: #{mic_forward.9} parent=0 // pred_check
    _
  $region3: #{mic_forward.9} parent=0 // pred_check_branch
    %10 = sbr.rel (0) target = $region5
  $region4: #{mic_forward.9} parent=0 // pred_region
    _
  $region5: #{mic_forward.9} parent=0 // pred_fallthru
    _
  // Predicated region
  $region6: #{mic_forward.9} parent=0 // pred_check
    _
  $region7: #{mic_forward.9} parent=0 // pred_check_branch
    %12 = sbr.rel (0) target = $region9
  $region8: #{mic_forward.9} parent=0 // pred_region
    _
  $region9: #{mic_forward.9} parent=0 // pred_fallthru
    _
  // Predicated region
  $region10: #{mic_forward.9} parent=0 // pred_check
    _
  $region11: #{mic_forward.9} parent=0 // pred_check_branch
    %14 = sbr.rel (0) target = $region13
  $region12: #{mic_forward.9} parent=0 // pred_region
    _
  $region13: #{mic_forward.9} parent=0 // pred_fallthru
    _
  // Predicated region
  $region14: #{mic_forward.9} parent=0 // pred_check
    _
  $region15: #{mic_forward.9} parent=0 // pred_check_branch
    %16 = sbr.rel (0) target = $region17
  $region16: #{mic_forward.9} parent=0 // pred_region
    _
  $region17: #{mic_forward.9} parent=0 // pred_fallthru
    _
  %v17 = vld [vmem:[%s0] sm:$0xff]
  %v18 = vld [vmem:[%s0 + $0x8] sm:$0xff]
  %v19 = vld [vmem:[%s0 + $0x10] sm:$0xff]
  %v20 = vld [vmem:[%s0 + $0x18] sm:$0xff]
  %v21 = vld [vmem:[%s1] sm:$0xff]
  %v22 = vld [vmem:[%s1 + $0x8] sm:$0xff]
  %v23 = vld [vmem:[%s1 + $0x10] sm:$0xff]
  %v24 = vld [vmem:[%s1 + $0x18] sm:$0xff]
  %v25 = vadd.f32 %v17, %v21
  %v26 = vadd.f32 %v18, %v22
  %v27 = vadd.f32 %v19, %v23
  %v28 = vadd.f32 %v20, %v24
  %vm29 = vcmask 261120
  %v30 = vsel %vm29, %v25, 0.0
  %31 = vadd.xlane.f32.xlu0 %v30
  %v32 = vpop.xlane.xlu0 %31
  %v33 = vsel %vm29, %v26, 0.0
  %34 = vadd.xlane.f32.xlu0 %v33
  %v35 = vpop.xlane.xlu0 %34
  %v36 = vsel %vm29, %v27, 0.0
  %37 = vadd.xlane.f32.xlu0 %v36
  %v38 = vpop.xlane.xlu0 %37
  %v39 = vsel %vm29, %v28, 0.0
  %40 = vadd.xlane.f32.xlu0 %v39
  %v41 = vpop.xlane.xlu0 %40
  %v42 = vrcp.pop 32.0
  %v43 = vmul.f32 32.0, %v42
  %v44 = vsub.f32 1.0, %v43
  %v45 = vmul.f32 %v42, %v44
  %v46 = vadd.f32 %v42, %v45
  %vm47 = vweird.f32 %v42
  %v48 = vsel %vm47, %v42, %v46
  %v49 = vmul.f32 %v32, %v48
  %v50 = vmul.f32 %v35, %v48
  %v51 = vmul.f32 %v38, %v48
  %v52 = vmul.f32 %v41, %v48
  %v53 = vsub.f32 %v25, %v49
  %v54 = vsub.f32 %v26, %v50
  %v55 = vsub.f32 %v27, %v51
  %v56 = vsub.f32 %v28, %v52
  %v57 = vmul.f32 %v53, %v53
  %v58 = vmul.f32 %v54, %v54
  %v59 = vmul.f32 %v55, %v55
  %v60 = vmul.f32 %v56, %v56
  %v61 = vsel %vm29, %v57, 0.0
  %62 = vadd.xlane.f32.xlu0 %v61
  %v63 = vpop.xlane.xlu0 %62
  %v64 = vsel %vm29, %v58, 0.0
  %65 = vadd.xlane.f32.xlu0 %v64
  %v66 = vpop.xlane.xlu0 %65
  %v67 = vsel %vm29, %v59, 0.0
  %68 = vadd.xlane.f32.xlu0 %v67
  %v69 = vpop.xlane.xlu0 %68
  %v70 = vsel %vm29, %v60, 0.0
  %71 = vadd.xlane.f32.xlu0 %v70
  %v72 = vpop.xlane.xlu0 %71
  %v73 = vmul.f32 %v63, %v48
  %v74 = vmul.f32 %v66, %v48
  %v75 = vmul.f32 %v69, %v48
  %v76 = vmul.f32 %v72, %v48
  %v77 = vadd.f32 %v73, 1e-05
  %v78 = vadd.f32 %v74, 1e-05
  %v79 = vadd.f32 %v75, 1e-05
  %v80 = vadd.f32 %v76, 1e-05
  %v81 = vrsqrt.pop %v77
  %v82 = vmul.f32 %v81, %v77
  %v83 = vmul.f32 %v82, %v81
  %v84 = vmul.f32 0.5, %v83
  %v85 = vsub.f32 1.5, %v84
  %v86 = vmul.f32 %v81, %v85
  %vm87 = vweird.f32 %v77
  %vm88 = vweird.f32 %v81
  %vm89 = vmor %vm87, %vm88
  %v90 = vsel %vm89, %v81, %v86
  %v91 = vrsqrt.pop %v78
  %v92 = vmul.f32 %v91, %v78
  %v93 = vmul.f32 %v92, %v91
  %v94 = vmul.f32 0.5, %v93
  %v95 = vsub.f32 1.5, %v94
  %v96 = vmul.f32 %v91, %v95
  %vm97 = vweird.f32 %v78
  %vm98 = vweird.f32 %v91
  %vm99 = vmor %vm97, %vm98
  %v100 = vsel %vm99, %v91, %v96
  %v101 = vrsqrt.pop %v79
  %v102 = vmul.f32 %v101, %v79
  %v103 = vmul.f32 %v102, %v101
  %v104 = vmul.f32 0.5, %v103
  %v105 = vsub.f32 1.5, %v104
  %v106 = vmul.f32 %v101, %v105
  %vm107 = vweird.f32 %v79
  %vm108 = vweird.f32 %v101
  %vm109 = vmor %vm107, %vm108
  %v110 = vsel %vm109, %v101, %v106
  %v111 = vrsqrt.pop %v80
  %v112 = vmul.f32 %v111, %v80
  %v113 = vmul.f32 %v112, %v111
  %v114 = vmul.f32 0.5, %v113
  %v115 = vsub.f32 1.5, %v114
  %v116 = vmul.f32 %v111, %v115
  %vm117 = vweird.f32 %v80
  %vm118 = vweird.f32 %v111
  %vm119 = vmor %vm117, %vm118
  %v120 = vsel %vm119, %v111, %v116
  %v121 = vmul.f32 %v53, %v90
  %v122 = vmul.f32 %v54, %v100
  %v123 = vmul.f32 %v55, %v110
  %v124 = vmul.f32 %v56, %v120
  %v125 = vld [vmem:[%s2] sm:$0x1]
  %v127 = vperm.slane %v125, 0
  %v129 = vmul.f32 %v121, %v127
  %v130 = vmul.f32 %v122, %v127
  %v131 = vmul.f32 %v123, %v127
  %v132 = vmul.f32 %v124, %v127
  %v133 = vld [vmem:[%s3] sm:$0x1]
  %v135 = vperm.slane %v133, 0
  %v137 = vadd.f32 %v129, %v135
  %v138 = vadd.f32 %v130, %v135
  %v139 = vadd.f32 %v131, %v135
  %v140 = vadd.f32 %v132, %v135
  %141 = vst.msk [vmem:[%s4] sm:$0xff] %vm29, %v137
  %142 = vst.msk [vmem:[%s4 + $0x8] sm:$0xff] %vm29, %v138
  %143 = vst.msk [vmem:[%s4 + $0x10] sm:$0xff] %vm29, %v139
  %144 = vst.msk [vmem:[%s4 + $0x18] sm:$0xff] %vm29, %v140
  // Predicated region
  $region18: #{mic_forward.9} parent=0 // pred_check
    _
  $region19: #{mic_forward.9} parent=0 // pred_check_branch
    %146 = sbr.rel (0) target = $region21
  $region20: #{mic_forward.9} parent=0 // pred_region
    _
  $region21: #{mic_forward.9} parent=0 // pred_fallthru
    _
  // Predicated region
  $region22: #{mic_forward.9} parent=0 // pred_check
    _
  $region23: #{mic_forward.9} parent=0 // pred_check_branch
    %148 = sbr.rel (0) target = $region25
  $region24: #{mic_forward.9} parent=0 // pred_region
    _
  $region25: #{mic_forward.9} parent=0 // pred_fallthru
    _

// kernel: tile.18
$region0: #{tile.18}
  #allocation0 [shape = 's32[1]{0}', space=sflag, size = 0x4, scoped, tag = 'scoped memory for tile.18']
  %s0 = inlined_call_operand.vmem [shape: f32[32], index: 0, kind: input, shape index: {}]
  %s1 = inlined_call_operand.vmem [shape: f32[4,32], index: 1, kind: output, shape index: {}]
  // Predicated region
  $region2: #{tile.18} parent=0 // pred_check
    _
  $region3: #{tile.18} parent=0 // pred_check_branch
    %3 = sbr.rel (0) target = $region5
  $region4: #{tile.18} parent=0 // pred_region
    _
  $region5: #{tile.18} parent=0 // pred_fallthru
    _
  %v4 = vld [vmem:[%s0] ss:$0 sm:$0xff]
  %5 = vst [vmem:[%s1] sm:$0xf] %v4

// kernel: tile.19
$region0: #{tile.19}
  %s0 = inlined_call_operand.vmem [shape: f32[4,32], index: 0, kind: input, shape index: {}]
  %s1 = inlined_call_operand.vmem [shape: f32[1,128], index: 1, kind: output, shape index: {}]
  $region1: #{tile.19} parent=0
    #allocation0 [shape = 'u8[4096]{0}', space=vmem, size = 0x1000, scoped, tag = 'scoped mem for output reshape']
    #allocation1 [shape = 'u8[4096]{0}', space=vmem, size = 0x1000, scoped, tag = 'scoped mem for input reshape']
    %s3 = ssub.s32 16, 1
    %v4 = vld [vmem:[%s0] sm:%s3]
    %5 = vst [vmem:[#allocation1] sm:%s3] %v4
    %v6 = vld [vmem:[#allocation1] sm:$0x1]
    %vm7 = vcmask 261120
    %8 = vst.msk [vmem:[#allocation0] sm:$0x1] %vm7, %v6
    %s9 = scalar_lea.vmem [#allocation1], 3
    %v10 = vld [vmem:[%s9] sm:$0x1]
    %11 = vrot.lane.b32.xlu0 %v10, 96
    %v12 = vpop.permute.xlu0 %11
    %vm13 = vcmask 1048320
    %14 = vst.msk [vmem:[#allocation0] sm:$0x1] %vm13, %v12
    %s15 = scalar_lea.vmem [#allocation1], 2
    %v16 = vld [vmem:[%s15] sm:$0x1]
    %17 = vrot.lane.b32.xlu0 %v16, 64
    %v18 = vpop.permute.xlu0 %17
    %vm19 = vcmask 785920
    %20 = vst.msk [vmem:[#allocation0] sm:$0x1] %vm19, %v18
    %s21 = scalar_lea.vmem [#allocation1], 1
    %v22 = vld [vmem:[%s21] sm:$0x1]
    %23 = vrot.lane.b32.xlu0 %v22, 32
    %v24 = vpop.permute.xlu0 %23
    %vm25 = vcmask 523520
    %26 = vst.msk [vmem:[#allocation0] sm:$0x1] %vm25, %v24
    %s28 = ssub.s32 2, 1
    %v29 = vld [vmem:[#allocation0] sm:%s28]
    %s31 = ssub.s32 2, 1
    %32 = vst [vmem:[%s1] sm:%s31] %v29

// kernel: mic_forward.8
$region0: #{mic_forward.8}
  #allocation0 [shape = 'u32[]', space=smem, size = 0x4, offset = 0x4, fixed_abs, tag = 'smem constant byte address 0x4 - core index']
  #allocation1 [shape = 'u32[72,128]{1,0:T(1,128)}', space=vmem, size = 0x9000, scoped, tag = 'internal scratch']
  #allocation2 [shape = 'f32[17,32]{1,0:T(8,128)}', space=vmem, size = 0x3000, scoped, tag = 'scratch operand']
  %s0 = inlined_call_operand.vmem [shape: bf16[2,9,64], index: 0, kind: input, shape index: {}]
  %s1 = inlined_call_operand.vmem [shape: bf16[64,32], index: 1, kind: input, shape index: {}]
  %s2 = inlined_call_operand.vmem [shape: f32[1,32], index: 2, kind: input, shape index: {}]
  %s3 = inlined_call_operand.vmem [shape: bf16[288,32], index: 3, kind: input, shape index: {}]
  %s4 = inlined_call_operand.vmem [shape: f32[1,32], index: 4, kind: input, shape index: {}]
  %s5 = inlined_call_operand.vmem [shape: bf16[32,64], index: 5, kind: input, shape index: {}]
  %s6 = inlined_call_operand.vmem [shape: f32[1,64], index: 6, kind: input, shape index: {}]
  %s7 = inlined_call_operand.vmem [shape: f32[1,32], index: 7, kind: input, shape index: {}]
  %s8 = inlined_call_operand.vmem [shape: f32[1,32], index: 8, kind: input, shape index: {}]
  %s9 = inlined_call_operand.vmem [shape: f32[2,9,64], index: 9, kind: output, shape index: {}]
  %s10 = sld [smem:[#allocation0]]
  $region69: #{mic_forward.8} parent=0
    _
  %s12 = ssub.s32 1, %s10
  %s13 = scalar_select 0, %s12, %s10
  loop: start=0, step=1, limit=4
  $region2: #{mic_forward.8} parent=0 // loop_pre_header
    _
  $region3: #{mic_forward.8} parent=0 // loop_header
    %s15 = sphi 0, %s19
    %p16 = scmp.ge.s32.totalorder %s15, 4
    %s25 = sphi 0, %s27
    %s28 = sphi 0, %s25
    %s29 = sphi 0, %s28
    %s45 = sphi 0, %s29
    %s49 = sphi 0, %s49
    %s51 = sphi 0, %s49
    %s52 = sphi 0, %s51
    %s66 = sphi 0, %s52
    %s70 = sphi 0, %s70
    %s72 = sphi 0, %s70
    %s73 = sphi 0, %s72
    %s87 = sphi 0, %s73
    %s91 = sphi 0, %s91
    %s93 = sphi 0, %s91
    %s94 = sphi 0, %s93
    %s108 = sphi 0, %s94
    %s112 = sphi 0, %s112
    %s114 = sphi 0, %s112
    %s115 = sphi 0, %s114
    %s129 = sphi 0, %s115
    %s133 = sphi 0, %s133
    %s135 = sphi 0, %s133
    %s136 = sphi 0, %s135
    %s150 = sphi 0, %s136
    %s154 = sphi 0, %s154
    %s156 = sphi 0, %s154
    %s157 = sphi 0, %s156
    %s171 = sphi 0, %s157
    %s175 = sphi 0, %s175
    %s177 = sphi 0, %s175
    %s178 = sphi 0, %s177
    %s192 = sphi 0, %s178
    %s196 = sphi 0, %s196
    %s198 = sphi 0, %s196
    %s199 = sphi 0, %s198
    %s213 = sphi 0, %s199
    %s219 = sphi 0, %s221
    %s222 = sphi 0, %s219
    %s223 = sphi 0, %s222
    %s239 = sphi 0, %s223
  $region4: #{mic_forward.8} parent=0 // loop_header_branch
    %18 = sbr.rel (%p16) target = $region8
  $region5: #{mic_forward.8} parent=0 // loop_body
    %s20 = ssub.s32 %s15, 1
    %s21 = ssub.s32 %s15, 2
    %s22 = sadd.s32 %s15, 1
    %s23 = ssub.s32 %s15, %s22
    %p24 = scmp.eq.s32.totalorder %s23, 0
    %s26 = sadd.s32 %s25, 1
    %s27 = scalar_select %p24, %s25, %s26
    %p30 = pneg %p24
    %p31 = scmp.eq.s32.totalorder %s15, 1
    %p32 = por %p30, %p31
    %p33 = scmp.ne.s32.totalorder %s25, %s28
    %p34 = scmp.eq.s32.totalorder %s15, 0
    %p35 = por %p33, %p34
    %p36 = scmp.ne.s32.totalorder %s25, %s28
    %p37 = scmp.eq.s32.totalorder %s20, 1
    %p38 = por %p36, %p37
    %p39 = scmp.ne.s32.totalorder %s28, %s29
    %p40 = scmp.eq.s32.totalorder %s20, 0
    %p41 = por %p39, %p40
    %p42 = scmp.ne.s32.totalorder %s28, %s29
    %p43 = scmp.eq.s32.totalorder %s21, 1
    %p44 = por %p42, %p43
    %p46 = scmp.ne.s32.totalorder %s29, %s45
    %p47 = scmp.eq.s32.totalorder %s21, 0
    %p48 = por %p46, %p47
    %s50 = sadd.s32 %s49, 1
    %p53 = scmp.eq.s32.totalorder %s15, 1
    %p54 = scmp.ne.s32.totalorder %s49, %s51
    %p55 = scmp.eq.s32.totalorder %s15, 0
    %p56 = por %p54, %p55
    %p57 = scmp.ne.s32.totalorder %s49, %s51
    %p58 = scmp.eq.s32.totalorder %s20, 1
    %p59 = por %p57, %p58
    %p60 = scmp.ne.s32.totalorder %s51, %s52
    %p61 = scmp.eq.s32.totalorder %s20, 0
    %p62 = por %p60, %p61
    %p63 = scmp.ne.s32.totalorder %s51, %s52
    %p64 = scmp.eq.s32.totalorder %s21, 1
    %p65 = por %p63, %p64
    %p67 = scmp.ne.s32.totalorder %s52, %s66
    %p68 = scmp.eq.s32.totalorder %s21, 0
    %p69 = por %p67, %p68
    %s71 = sadd.s32 %s70, 1
    %p74 = scmp.eq.s32.totalorder %s15, 1
    %p75 = scmp.ne.s32.totalorder %s70, %s72
    %p76 = scmp.eq.s32.totalorder %s15, 0
    %p77 = por %p75, %p76
    %p78 = scmp.ne.s32.totalorder %s70, %s72
    %p79 = scmp.eq.s32.totalorder %s20, 1
    %p80 = por %p78, %p79
    %p81 = scmp.ne.s32.totalorder %s72, %s73
    %p82 = scmp.eq.s32.totalorder %s20, 0
    %p83 = por %p81, %p82
    %p84 = scmp.ne.s32.totalorder %s72, %s73
    %p85 = scmp.eq.s32.totalorder %s21, 1
    %p86 = por %p84, %p85
    %p88 = scmp.ne.s32.totalorder %s73, %s87
    %p89 = scmp.eq.s32.totalorder %s21, 0
    %p90 = por %p88, %p89
    %s92 = sadd.s32 %s91, 1
    %p95 = scmp.eq.s32.totalorder %s15, 1
    %p96 = scmp.ne.s32.totalorder %s91, %s93
    %p97 = scmp.eq.s32.totalorder %s15, 0
    %p98 = por %p96, %p97
    %p99 = scmp.ne.s32.totalorder %s91, %s93
    %p100 = scmp.eq.s32.totalorder %s20, 1
    %p101 = por %p99, %p100
    %p102 = scmp.ne.s32.totalorder %s93, %s94
    %p103 = scmp.eq.s32.totalorder %s20, 0
    %p104 = por %p102, %p103
    %p105 = scmp.ne.s32.totalorder %s93, %s94
    %p106 = scmp.eq.s32.totalorder %s21, 1
    %p107 = por %p105, %p106
    %p109 = scmp.ne.s32.totalorder %s94, %s108
    %p110 = scmp.eq.s32.totalorder %s21, 0
    %p111 = por %p109, %p110
    %s113 = sadd.s32 %s112, 1
    %p116 = scmp.eq.s32.totalorder %s15, 1
    %p117 = scmp.ne.s32.totalorder %s112, %s114
    %p118 = scmp.eq.s32.totalorder %s15, 0
    %p119 = por %p117, %p118
    %p120 = scmp.ne.s32.totalorder %s112, %s114
    %p121 = scmp.eq.s32.totalorder %s20, 1
    %p122 = por %p120, %p121
    %p123 = scmp.ne.s32.totalorder %s114, %s115
    %p124 = scmp.eq.s32.totalorder %s20, 0
    %p125 = por %p123, %p124
    %p126 = scmp.ne.s32.totalorder %s114, %s115
    %p127 = scmp.eq.s32.totalorder %s21, 1
    %p128 = por %p126, %p127
    %p130 = scmp.ne.s32.totalorder %s115, %s129
    %p131 = scmp.eq.s32.totalorder %s21, 0
    %p132 = por %p130, %p131
    %s134 = sadd.s32 %s133, 1
    %p137 = scmp.eq.s32.totalorder %s15, 1
    %p138 = scmp.ne.s32.totalorder %s133, %s135
    %p139 = scmp.eq.s32.totalorder %s15, 0
    %p140 = por %p138, %p139
    %p141 = scmp.ne.s32.totalorder %s133, %s135
    %p142 = scmp.eq.s32.totalorder %s20, 1
    %p143 = por %p141, %p142
    %p144 = scmp.ne.s32.totalorder %s135, %s136
    %p145 = scmp.eq.s32.totalorder %s20, 0
    %p146 = por %p144, %p145
    %p147 = scmp.ne.s32.totalorder %s135, %s136
    %p148 = scmp.eq.s32.totalorder %s21, 1
    %p149 = por %p147, %p148
    %p151 = scmp.ne.s32.totalorder %s136, %s150
    %p152 = scmp.eq.s32.totalorder %s21, 0
    %p153 = por %p151, %p152
    %s155 = sadd.s32 %s154, 1
    %p158 = scmp.eq.s32.totalorder %s15, 1
    %p159 = scmp.ne.s32.totalorder %s154, %s156
    %p160 = scmp.eq.s32.totalorder %s15, 0
    %p161 = por %p159, %p160
    %p162 = scmp.ne.s32.totalorder %s154, %s156
    %p163 = scmp.eq.s32.totalorder %s20, 1
    %p164 = por %p162, %p163
    %p165 = scmp.ne.s32.totalorder %s156, %s157
    %p166 = scmp.eq.s32.totalorder %s20, 0
    %p167 = por %p165, %p166
    %p168 = scmp.ne.s32.totalorder %s156, %s157
    %p169 = scmp.eq.s32.totalorder %s21, 1
    %p170 = por %p168, %p169
    %p172 = scmp.ne.s32.totalorder %s157, %s171
    %p173 = scmp.eq.s32.totalorder %s21, 0
    %p174 = por %p172, %p173
    %s176 = sadd.s32 %s175, 1
    %p179 = scmp.eq.s32.totalorder %s15, 1
    %p180 = scmp.ne.s32.totalorder %s175, %s177
    %p181 = scmp.eq.s32.totalorder %s15, 0
    %p182 = por %p180, %p181
    %p183 = scmp.ne.s32.totalorder %s175, %s177
    %p184 = scmp.eq.s32.totalorder %s20, 1
    %p185 = por %p183, %p184
    %p186 = scmp.ne.s32.totalorder %s177, %s178
    %p187 = scmp.eq.s32.totalorder %s20, 0
    %p188 = por %p186, %p187
    %p189 = scmp.ne.s32.totalorder %s177, %s178
    %p190 = scmp.eq.s32.totalorder %s21, 1
    %p191 = por %p189, %p190
    %p193 = scmp.ne.s32.totalorder %s178, %s192
    %p194 = scmp.eq.s32.totalorder %s21, 0
    %p195 = por %p193, %p194
    %s197 = sadd.s32 %s196, 1
    %p200 = scmp.eq.s32.totalorder %s15, 1
    %p201 = scmp.ne.s32.totalorder %s196, %s198
    %p202 = scmp.eq.s32.totalorder %s15, 0
    %p203 = por %p201, %p202
    %p204 = scmp.ne.s32.totalorder %s196, %s198
    %p205 = scmp.eq.s32.totalorder %s20, 1
    %p206 = por %p204, %p205
    %p207 = scmp.ne.s32.totalorder %s198, %s199
    %p208 = scmp.eq.s32.totalorder %s20, 0
    %p209 = por %p207, %p208
    %p210 = scmp.ne.s32.totalorder %s198, %s199
    %p211 = scmp.eq.s32.totalorder %s21, 1
    %p212 = por %p210, %p211
    %p214 = scmp.ne.s32.totalorder %s199, %s213
    %p215 = scmp.eq.s32.totalorder %s21, 0
    %p216 = por %p214, %p215
    %s217 = ssub.s32 %s15, %s22
    %p218 = scmp.eq.s32.totalorder %s217, 0
    %s220 = sadd.s32 %s219, 1
    %s221 = scalar_select %p218, %s219, %s220
    %p224 = pneg %p218
    %p225 = scmp.eq.s32.totalorder %s15, 1
    %p226 = por %p224, %p225
    %p227 = scmp.ne.s32.totalorder %s219, %s222
    %p228 = scmp.eq.s32.totalorder %s15, 0
    %p229 = por %p227, %p228
    %p230 = scmp.ne.s32.totalorder %s219, %s222
    %p231 = scmp.eq.s32.totalorder %s20, 1
    %p232 = por %p230, %p231
    %p233 = scmp.ne.s32.totalorder %s222, %s223
    %p234 = scmp.eq.s32.totalorder %s20, 0
    %p235 = por %p233, %p234
    %p236 = scmp.ne.s32.totalorder %s222, %s223
    %p237 = scmp.eq.s32.totalorder %s21, 1
    %p238 = por %p236, %p237
    %p240 = scmp.ne.s32.totalorder %s223, %s239
    %p241 = scmp.eq.s32.totalorder %s21, 0
    %p242 = por %p240, %p241
    %p243 = scmp.le.s32.totalorder 1, %s15
    %p244 = scmp.lt.s32.totalorder %s15, 3
    %p245 = pnand %p243, %p244
    %p246 = pneg %p245
    // Predicated region
    $region9: #{mic_forward.8} parent=5 // pred_check
      _
    $region10: #{mic_forward.8} parent=5 // pred_check_branch
      %248 = sbr.rel (%p245) target = $region12
    $region11: #{mic_forward.8} parent=5 // pred_region
      %s249 = ssub.s32 %s15, 1
      // Predicated region
      $region13: #{mic_forward.8} parent=11 // pred_check
        %p250 = pneg %p62
      $region14: #{mic_forward.8} parent=11 // pred_check_branch
        %252 = sbr.rel (%p250) target = $region16
      $region15: #{mic_forward.8} parent=11 // pred_region
        _
      $region16: #{mic_forward.8} parent=11 // pred_fallthru
        _
      // Predicated region
      $region17: #{mic_forward.8} parent=11 // pred_check
        %p253 = pneg %p83
      $region18: #{mic_forward.8} parent=11 // pred_check_branch
        %255 = sbr.rel (%p253) target = $region20
      $region19: #{mic_forward.8} parent=11 // pred_region
        _
      $region20: #{mic_forward.8} parent=11 // pred_fallthru
        _
      // Predicated region
      $region21: #{mic_forward.8} parent=11 // pred_check
        %p256 = pneg %p104
      $region22: #{mic_forward.8} parent=11 // pred_check_branch
        %258 = sbr.rel (%p256) target = $region24
      $region23: #{mic_forward.8} parent=11 // pred_region
        _
      $region24: #{mic_forward.8} parent=11 // pred_fallthru
        _
      // Predicated region
      $region25: #{mic_forward.8} parent=11 // pred_check
        %p259 = pneg %p125
      $region26: #{mic_forward.8} parent=11 // pred_check_branch
        %261 = sbr.rel (%p259) target = $region28
      $region27: #{mic_forward.8} parent=11 // pred_region
        _
      $region28: #{mic_forward.8} parent=11 // pred_fallthru
        _
      // Predicated region
      $region29: #{mic_forward.8} parent=11 // pred_check
        %p262 = pneg %p146
      $region30: #{mic_forward.8} parent=11 // pred_check_branch
        %264 = sbr.rel (%p262) target = $region32
      $region31: #{mic_forward.8} parent=11 // pred_region
        _
      $region32: #{mic_forward.8} parent=11 // pred_fallthru
        _
      // Predicated region
      $region33: #{mic_forward.8} parent=11 // pred_check
        %p265 = pneg %p167
      $region34: #{mic_forward.8} parent=11 // pred_check_branch
        %267 = sbr.rel (%p265) target = $region36
      $region35: #{mic_forward.8} parent=11 // pred_region
        _
      $region36: #{mic_forward.8} parent=11 // pred_fallthru
        _
      // Predicated region
      $region37: #{mic_forward.8} parent=11 // pred_check
        %p268 = pneg %p188
      $region38: #{mic_forward.8} parent=11 // pred_check_branch
        %270 = sbr.rel (%p268) target = $region40
      $region39: #{mic_forward.8} parent=11 // pred_region
        _
      $region40: #{mic_forward.8} parent=11 // pred_fallthru
        _
      // Predicated region
      $region41: #{mic_forward.8} parent=11 // pred_check
        %p271 = pneg %p209
      $region42: #{mic_forward.8} parent=11 // pred_check_branch
        %273 = sbr.rel (%p271) target = $region44
      $region43: #{mic_forward.8} parent=11 // pred_region
        _
      $region44: #{mic_forward.8} parent=11 // pred_fallthru
        _
    $region12: #{mic_forward.8} parent=5 // pred_fallthru
      _
    %p274 = scmp.lt.s32.totalorder %s15, 2
    // Predicated region
    $region45: #{mic_forward.8} parent=5 // pred_check
      %p275 = pneg %p274
    $region46: #{mic_forward.8} parent=5 // pred_check_branch
      %277 = sbr.rel (%p275) target = $region48
    $region47: #{mic_forward.8} parent=5 // pred_region
      // Predicated region
      $region49: #{mic_forward.8} parent=47 // pred_check
        %p278 = pneg %p35
      $region50: #{mic_forward.8} parent=47 // pred_check_branch
        %280 = sbr.rel (%p278) target = $region52
      $region51: #{mic_forward.8} parent=47 // pred_region
        %p281 = scmp.lt.s32.totalorder %s15, 1
        %s282 = scalar_select %p281, %s15, 1
        %s283 = smul.addr %s282, 2
        %s284 = smul.addr %s283, 4
        %s285 = scalar_lea.vmem %s0, %s284
      $region52: #{mic_forward.8} parent=47 // pred_fallthru
        _
    $region48: #{mic_forward.8} parent=5 // pred_fallthru
      _
    %p286 = scmp.le.s32.totalorder 1, %s15
    %p287 = scmp.lt.s32.totalorder %s15, 3
    %p288 = pnand %p286, %p287
    %p289 = pneg %p288
    // Predicated region
    $region53: #{mic_forward.8} parent=5 // pred_check
      _
    $region54: #{mic_forward.8} parent=5 // pred_check_branch
      %291 = sbr.rel (%p288) target = $region56
    $region55: #{mic_forward.8} parent=5 // pred_region
      %s292 = ssub.s32 %s15, 1
      %p293 = scmp.lt.s32.totalorder %s20, 1
      %s294 = scalar_select %p293, %s20, 1
      %s295 = smul.addr %s294, 2
      %s296 = smul.addr %s295, 4
      %s297 = scalar_lea.vmem %s0, %s296
      %p298 = pneg %p41
      %p299 = pneg %p38
      %p300 = pneg %p62
      %p301 = pneg %p59
      %p302 = pneg %p83
      %p303 = pneg %p80
      %p304 = pneg %p104
      %p305 = pneg %p101
      %p306 = pneg %p125
      %p307 = pneg %p122
      %p308 = pneg %p146
      %p309 = pneg %p143
      %p310 = pneg %p167
      %p311 = pneg %p164
      %p312 = pneg %p188
      %p313 = pneg %p185
      %p314 = pneg %p209
      %p315 = pneg %p206
      %p316 = pneg %p235
      %p317 = pneg %p232
      %p318 = scmp.lt.s32.totalorder %s20, 1
      %s319 = scalar_select %p318, %s20, 1
      %s320 = smul.addr %s319, 2
      %s321 = smul.addr %s320, 8
      %s322 = scalar_lea.vmem %s9, %s321
      %p323 = scmp.lt.s32.totalorder %s20, 1
      %s324 = scalar_select %p323, %s20, 1
      %s325 = smul.addr %s324, 2
      %s326 = smul.addr %s325, 4
      %s327 = scalar_lea.vmem %s0, %s326
      %p328 = scmp.lt.s32.totalorder %s20, 1
      %s329 = scalar_select %p328, %s20, 1
      %s330 = smul.addr %s329, 2
      %s331 = smul.addr %s330, 8
      %s332 = scalar_lea.vmem %s9, %s331
      %v334 = vld [vmem:[%s327] sm:$0xf]
      %v335 = vld [vmem:[%s327 + $0x4] sm:$0x1]
      %v336 = vld [vmem:[%s1] sm:$0xf]
      %v337 = vld [vmem:[%s1 + $0x4] sm:$0xf]
      %v338 = vld [vmem:[%s1 + $0x8] sm:$0xf]
      %v339 = vld [vmem:[%s1 + $0xc] sm:$0xf]
      %v340 = vld [vmem:[%s1 + $0x10] sm:$0xf]
      %v341 = vld [vmem:[%s1 + $0x14] sm:$0xf]
      %v342 = vld [vmem:[%s1 + $0x18] sm:$0xf]
      %v343 = vld [vmem:[%s1 + $0x1c] sm:$0xf]
      %v344 = vld [vmem:[%s2] sm:$0x1]
      %v346 = vperm.slane %v344, 0
      %v350 = vunpack.c.l.b16 %v334
      %v351 = vunpack.c.l.b16 %v335
      %v352 = vpack.c.b16 %v351, %v350
      %v361 = vunpack.c.l.b16 %v336
      %v362 = vunpack.c.l.b16 %v337
      %v363 = vunpack.c.l.b16 %v338
      %v364 = vunpack.c.l.b16 %v339
      %v365 = vunpack.c.l.b16 %v340
      %v366 = vunpack.c.l.b16 %v341
      %v367 = vunpack.c.l.b16 %v342
      %v368 = vunpack.c.l.b16 %v343
      %v369 = vpack.c.b16 %v362, %v361
      %v370 = vpack.c.b16 %v364, %v363
      %v371 = vpack.c.b16 %v366, %v365
      %v372 = vpack.c.b16 %v368, %v367
      %vm377 = vcmask 523264
      %v379 = vsel %vm377, %v352, 0
      %381 = vmatpush.bf16.msra.mxu0 0
      %382 = vmatpush.bf16.msra.mxu0 0
      %383 = vmatpush.bf16.msra.mxu0 0
      %384 = vmatpush.bf16.msra.mxu0 0
      %385 = vmatpush.bf16.msra.mxu0 %v372
      %386 = vmatpush.bf16.msra.mxu0 %v371
      %387 = vmatpush.bf16.msra.mxu0 %v370
      %388 = vmatpush.bf16.msra.mxu0 %v369
      %389 = vmatmul.bf16.gmra.mxu0 %v379
      %v390 = vpop.f32.mrf.mxu0
      %v391 = vadd.f32 %v346, %v390
      %v392 = vpop.f32.mrf.mxu0
      %v393 = vadd.f32 %v346, %v392
      %394 = vdwg.mxu0
      %v395 = vtanh.pop %v391
      %v396 = vtanh.pop %v393
      %vm397 = vcmask 261120
      %398 = vst.msk [vmem:[#allocation2] sm:$0xff] %vm397, 0.0
      %399 = vst.msk [vmem:[#allocation2 + $0x8] sm:$0xff] %vm397, %v395
      %vm400 = vcmask 253952
      %401 = vst.msk [vmem:[#allocation2 + $0x10] sm:$0x1] %vm400, %v396
      %v402 = vld [vmem:[#allocation2] sm:$0xff]
      %v403 = vld [vmem:[#allocation2 + $0x8] sm:$0x1]
      %v404 = vpack.c.bf16 %v403, %v402
      %v405 = vld [vmem:[%s3] sm:$0xf]
      %v406 = vld [vmem:[%s3 + $0x4] sm:$0xf]
      %v407 = vld [vmem:[%s3 + $0x8] sm:$0xf]
      %v408 = vld [vmem:[%s3 + $0xc] sm:$0xf]
      %v409 = vld [vmem:[#allocation2 + $0x1] sm:$0xff]
      %v410 = vld [vmem:[#allocation2 + $0x9] sm:$0x1]
      %v411 = vpack.c.bf16 %v410, %v409
      %v412 = vld [vmem:[%s3 + $0x10] sm:$0xf]
      %v413 = vld [vmem:[%s3 + $0x14] sm:$0xf]
      %v414 = vld [vmem:[%s3 + $0x18] sm:$0xf]
      %v415 = vld [vmem:[%s3 + $0x1c] sm:$0xf]
      %v420 = vunpack.c.l.b16 %v412
      %v421 = vunpack.c.l.b16 %v413
      %v422 = vunpack.c.l.b16 %v414
      %v423 = vunpack.c.l.b16 %v415
      %v424 = vpack.c.b16 %v421, %v420
      %v425 = vpack.c.b16 %v423, %v422
      %v429 = vsel %vm397, %v411, 0
      %431 = vmatpush.bf16.msra.mxu0 0
      %432 = vmatpush.bf16.msra.mxu0 0
      %433 = vmatpush.bf16.msra.mxu0 0
      %434 = vmatpush.bf16.msra.mxu0 0
      %435 = vmatpush.bf16.msra.mxu0 0
      %436 = vmatpush.bf16.msra.mxu0 0
      %437 = vmatpush.bf16.msra.mxu0 %v425
      %438 = vmatpush.bf16.msra.mxu0 %v424
      %439 = vmatmul.bf16.gmra.mxu0 %v429
      %v440 = vpop.f32.mrf.mxu0
      %v441 = vadd.f32 0.0, %v440
      %v442 = vpop.f32.mrf.mxu0
      %v443 = vadd.f32 0.0, %v442
      %444 = vdwg.mxu0
      %v449 = vunpack.c.l.b16 %v405
      %v450 = vunpack.c.l.b16 %v406
      %v451 = vunpack.c.l.b16 %v407
      %v452 = vunpack.c.l.b16 %v408
      %v453 = vpack.c.b16 %v450, %v449
      %v454 = vpack.c.b16 %v452, %v451
      %v458 = vsel %vm397, %v404, 0
      %460 = vmatpush.bf16.msra.mxu0 0
      %461 = vmatpush.bf16.msra.mxu0 0
      %462 = vmatpush.bf16.msra.mxu0 0
      %463 = vmatpush.bf16.msra.mxu0 0
      %464 = vmatpush.bf16.msra.mxu0 0
      %465 = vmatpush.bf16.msra.mxu0 0
      %466 = vmatpush.bf16.msra.mxu0 %v454
      %467 = vmatpush.bf16.msra.mxu0 %v453
      %468 = vmatmul.bf16.gmra.mxu0 %v458
      %v469 = vpop.f32.mrf.mxu0
      %v470 = vadd.f32 %v441, %v469
      %v471 = vpop.f32.mrf.mxu0
      %v472 = vadd.f32 %v443, %v471
      %473 = vdwg.mxu0
      %v474 = vld [vmem:[#allocation2 + $0x2] sm:$0xff]
      %v475 = vld [vmem:[#allocation2 + $0xa] sm:$0x1]
      %v476 = vpack.c.bf16 %v475, %v474
      %v477 = vld [vmem:[%s3 + $0x20] sm:$0xf]
      %v478 = vld [vmem:[%s3 + $0x24] sm:$0xf]
      %v479 = vld [vmem:[%s3 + $0x28] sm:$0xf]
      %v480 = vld [vmem:[%s3 + $0x2c] sm:$0xf]
      %v485 = vunpack.c.l.b16 %v477
      %v486 = vunpack.c.l.b16 %v478
      %v487 = vunpack.c.l.b16 %v479
      %v488 = vunpack.c.l.b16 %v480
      %v489 = vpack.c.b16 %v486, %v485
      %v490 = vpack.c.b16 %v488, %v487
      %v494 = vsel %vm397, %v476, 0
      %496 = vmatpush.bf16.msra.mxu0 0
      %497 = vmatpush.bf16.msra.mxu0 0
      %498 = vmatpush.bf16.msra.mxu0 0
      %499 = vmatpush.bf16.msra.mxu0 0
      %500 = vmatpush.bf16.msra.mxu0 0
      %501 = vmatpush.bf16.msra.mxu0 0
      %502 = vmatpush.bf16.msra.mxu0 %v490
      %503 = vmatpush.bf16.msra.mxu0 %v489
      %504 = vmatmul.bf16.gmra.mxu0 %v494
      %v505 = vpop.f32.mrf.mxu0
      %v506 = vadd.f32 0.0, %v505
      %v507 = vpop.f32.mrf.mxu0
      %v508 = vadd.f32 0.0, %v507
      %509 = vdwg.mxu0
      %v510 = vadd.f32 %v470, %v506
      %v511 = vadd.f32 %v472, %v508
      %v512 = vld [vmem:[#allocation2 + $0x3] sm:$0xff]
      %v513 = vld [vmem:[#allocation2 + $0xb] sm:$0x1]
      %v514 = vpack.c.bf16 %v513, %v512
      %v515 = vld [vmem:[%s3 + $0x30] sm:$0xf]
      %v516 = vld [vmem:[%s3 + $0x34] sm:$0xf]
      %v517 = vld [vmem:[%s3 + $0x38] sm:$0xf]
      %v518 = vld [vmem:[%s3 + $0x3c] sm:$0xf]
      %v523 = vunpack.c.l.b16 %v515
      %v524 = vunpack.c.l.b16 %v516
      %v525 = vunpack.c.l.b16 %v517
      %v526 = vunpack.c.l.b16 %v518
      %v527 = vpack.c.b16 %v524, %v523
      %v528 = vpack.c.b16 %v526, %v525
      %v532 = vsel %vm397, %v514, 0
      %534 = vmatpush.bf16.msra.mxu0 0
      %535 = vmatpush.bf16.msra.mxu0 0
      %536 = vmatpush.bf16.msra.mxu0 0
      %537 = vmatpush.bf16.msra.mxu0 0
      %538 = vmatpush.bf16.msra.mxu0 0
      %539 = vmatpush.bf16.msra.mxu0 0
      %540 = vmatpush.bf16.msra.mxu0 %v528
      %541 = vmatpush.bf16.msra.mxu0 %v527
      %542 = vmatmul.bf16.gmra.mxu0 %v532
      %v543 = vpop.f32.mrf.mxu0
      %v544 = vadd.f32 0.0, %v543
      %v545 = vpop.f32.mrf.mxu0
      %v546 = vadd.f32 0.0, %v545
      %547 = vdwg.mxu0
      %v548 = vadd.f32 %v510, %v544
      %v549 = vadd.f32 %v511, %v546
      %v550 = vld [vmem:[#allocation2 + $0x4] sm:$0xff]
      %v551 = vld [vmem:[#allocation2 + $0xc] sm:$0x1]
      %v552 = vpack.c.bf16 %v551, %v550
      %v553 = vld [vmem:[%s3 + $0x40] sm:$0xf]
      %v554 = vld [vmem:[%s3 + $0x44] sm:$0xf]
      %v555 = vld [vmem:[%s3 + $0x48] sm:$0xf]
      %v556 = vld [vmem:[%s3 + $0x4c] sm:$0xf]
      %v561 = vunpack.c.l.b16 %v553
      %v562 = vunpack.c.l.b16 %v554
      %v563 = vunpack.c.l.b16 %v555
      %v564 = vunpack.c.l.b16 %v556
      %v565 = vpack.c.b16 %v562, %v561
      %v566 = vpack.c.b16 %v564, %v563
      %v570 = vsel %vm397, %v552, 0
      %572 = vmatpush.bf16.msra.mxu0 0
      %573 = vmatpush.bf16.msra.mxu0 0
      %574 = vmatpush.bf16.msra.mxu0 0
      %575 = vmatpush.bf16.msra.mxu0 0
      %576 = vmatpush.bf16.msra.mxu0 0
      %577 = vmatpush.bf16.msra.mxu0 0
      %578 = vmatpush.bf16.msra.mxu0 %v566
      %579 = vmatpush.bf16.msra.mxu0 %v565
      %580 = vmatmul.bf16.gmra.mxu0 %v570
      %v581 = vpop.f32.mrf.mxu0
      %v582 = vadd.f32 0.0, %v581
      %v583 = vpop.f32.mrf.mxu0
      %v584 = vadd.f32 0.0, %v583
      %585 = vdwg.mxu0
      %v586 = vadd.f32 %v548, %v582
      %v587 = vadd.f32 %v549, %v584
      %v588 = vld [vmem:[#allocation2 + $0x5] sm:$0xff]
      %v589 = vld [vmem:[#allocation2 + $0xd] sm:$0x1]
      %v590 = vpack.c.bf16 %v589, %v588
      %v591 = vld [vmem:[%s3 + $0x50] sm:$0xf]
      %v592 = vld [vmem:[%s3 + $0x54] sm:$0xf]
      %v593 = vld [vmem:[%s3 + $0x58] sm:$0xf]
      %v594 = vld [vmem:[%s3 + $0x5c] sm:$0xf]
      %v599 = vunpack.c.l.b16 %v591
      %v600 = vunpack.c.l.b16 %v592
      %v601 = vunpack.c.l.b16 %v593
      %v602 = vunpack.c.l.b16 %v594
      %v603 = vpack.c.b16 %v600, %v599
      %v604 = vpack.c.b16 %v602, %v601
      %v608 = vsel %vm397, %v590, 0
      %610 = vmatpush.bf16.msra.mxu0 0
      %611 = vmatpush.bf16.msra.mxu0 0
      %612 = vmatpush.bf16.msra.mxu0 0
      %613 = vmatpush.bf16.msra.mxu0 0
      %614 = vmatpush.bf16.msra.mxu0 0
      %615 = vmatpush.bf16.msra.mxu0 0
      %616 = vmatpush.bf16.msra.mxu0 %v604
      %617 = vmatpush.bf16.msra.mxu0 %v603
      %618 = vmatmul.bf16.gmra.mxu0 %v608
      %v619 = vpop.f32.mrf.mxu0
      %v620 = vadd.f32 0.0, %v619
      %v621 = vpop.f32.mrf.mxu0
      %v622 = vadd.f32 0.0, %v621
      %623 = vdwg.mxu0
      %v624 = vadd.f32 %v586, %v620
      %v625 = vadd.f32 %v587, %v622
      %v626 = vld [vmem:[#allocation2 + $0x6] sm:$0xff]
      %v627 = vld [vmem:[#allocation2 + $0xe] sm:$0x1]
      %v628 = vpack.c.bf16 %v627, %v626
      %v629 = vld [vmem:[%s3 + $0x60] sm:$0xf]
      %v630 = vld [vmem:[%s3 + $0x64] sm:$0xf]
      %v631 = vld [vmem:[%s3 + $0x68] sm:$0xf]
      %v632 = vld [vmem:[%s3 + $0x6c] sm:$0xf]
      %v637 = vunpack.c.l.b16 %v629
      %v638 = vunpack.c.l.b16 %v630
      %v639 = vunpack.c.l.b16 %v631
      %v640 = vunpack.c.l.b16 %v632
      %v641 = vpack.c.b16 %v638, %v637
      %v642 = vpack.c.b16 %v640, %v639
      %v646 = vsel %vm397, %v628, 0
      %648 = vmatpush.bf16.msra.mxu0 0
      %649 = vmatpush.bf16.msra.mxu0 0
      %650 = vmatpush.bf16.msra.mxu0 0
      %651 = vmatpush.bf16.msra.mxu0 0
      %652 = vmatpush.bf16.msra.mxu0 0
      %653 = vmatpush.bf16.msra.mxu0 0
      %654 = vmatpush.bf16.msra.mxu0 %v642
      %655 = vmatpush.bf16.msra.mxu0 %v641
      %656 = vmatmul.bf16.gmra.mxu0 %v646
      %v657 = vpop.f32.mrf.mxu0
      %v658 = vadd.f32 0.0, %v657
      %v659 = vpop.f32.mrf.mxu0
      %v660 = vadd.f32 0.0, %v659
      %661 = vdwg.mxu0
      %v662 = vadd.f32 %v624, %v658
      %v663 = vadd.f32 %v625, %v660
      %v664 = vld [vmem:[#allocation2 + $0x7] sm:$0xff]
      %v665 = vld [vmem:[#allocation2 + $0xf] sm:$0x1]
      %v666 = vpack.c.bf16 %v665, %v664
      %v667 = vld [vmem:[%s3 + $0x70] sm:$0xf]
      %v668 = vld [vmem:[%s3 + $0x74] sm:$0xf]
      %v669 = vld [vmem:[%s3 + $0x78] sm:$0xf]
      %v670 = vld [vmem:[%s3 + $0x7c] sm:$0xf]
      %v675 = vunpack.c.l.b16 %v667
      %v676 = vunpack.c.l.b16 %v668
      %v677 = vunpack.c.l.b16 %v669
      %v678 = vunpack.c.l.b16 %v670
      %v679 = vpack.c.b16 %v676, %v675
      %v680 = vpack.c.b16 %v678, %v677
      %v684 = vsel %vm397, %v666, 0
      %686 = vmatpush.bf16.msra.mxu0 0
      %687 = vmatpush.bf16.msra.mxu0 0
      %688 = vmatpush.bf16.msra.mxu0 0
      %689 = vmatpush.bf16.msra.mxu0 0
      %690 = vmatpush.bf16.msra.mxu0 0
      %691 = vmatpush.bf16.msra.mxu0 0
      %692 = vmatpush.bf16.msra.mxu0 %v680
      %693 = vmatpush.bf16.msra.mxu0 %v679
      %694 = vmatmul.bf16.gmra.mxu0 %v684
      %v695 = vpop.f32.mrf.mxu0
      %v696 = vadd.f32 0.0, %v695
      %v697 = vpop.f32.mrf.mxu0
      %v698 = vadd.f32 0.0, %v697
      %699 = vdwg.mxu0
      %v700 = vadd.f32 %v662, %v696
      %v701 = vadd.f32 %v663, %v698
      %v702 = vld [vmem:[#allocation2 + $0x8] sm:$0xff]
      %v703 = vld [vmem:[#allocation2 + $0x10] sm:$0x1]
      %v704 = vpack.c.bf16 %v703, %v702
      %v705 = vld [vmem:[%s3 + $0x80] sm:$0xf]
      %v706 = vld [vmem:[%s3 + $0x84] sm:$0xf]
      %v707 = vld [vmem:[%s3 + $0x88] sm:$0xf]
      %v708 = vld [vmem:[%s3 + $0x8c] sm:$0xf]
      %v713 = vunpack.c.l.b16 %v705
      %v714 = vunpack.c.l.b16 %v706
      %v715 = vunpack.c.l.b16 %v707
      %v716 = vunpack.c.l.b16 %v708
      %v717 = vpack.c.b16 %v714, %v713
      %v718 = vpack.c.b16 %v716, %v715
      %v722 = vsel %vm397, %v704, 0
      %724 = vmatpush.bf16.msra.mxu0 0
      %725 = vmatpush.bf16.msra.mxu0 0
      %726 = vmatpush.bf16.msra.mxu0 0
      %727 = vmatpush.bf16.msra.mxu0 0
      %728 = vmatpush.bf16.msra.mxu0 0
      %729 = vmatpush.bf16.msra.mxu0 0
      %730 = vmatpush.bf16.msra.mxu0 %v718
      %731 = vmatpush.bf16.msra.mxu0 %v717
      %732 = vmatmul.bf16.gmra.mxu0 %v722
      %v733 = vpop.f32.mrf.mxu0
      %v734 = vadd.f32 0.0, %v733
      %v735 = vpop.f32.mrf.mxu0
      %v736 = vadd.f32 0.0, %v735
      %737 = vdwg.mxu0
      %v738 = vadd.f32 %v700, %v734
      %v739 = vadd.f32 %v701, %v736
      %v740 = vld [vmem:[%s4] sm:$0x1]
      %v742 = vperm.slane %v740, 0
      %v744 = vadd.f32 %v738, %v742
      %v745 = vadd.f32 %v739, %v742
      %v746 = vtanh.pop %v744
      %v747 = vtanh.pop %v745
      %v748 = vadd.f32 %v746, %v395
      %v749 = vadd.f32 %v747, %v396
      %v750 = vsel %vm397, %v748, 0.0
      %751 = vadd.xlane.f32.xlu0 %v750
      %v752 = vpop.xlane.xlu0 %751
      %v753 = vsel %vm400, %v749, 0.0
      %754 = vadd.xlane.f32.xlu0 %v753
      %v755 = vpop.xlane.xlu0 %754
      %v756 = vrcp.pop 32.0
      %v757 = vmul.f32 32.0, %v756
      %v758 = vsub.f32 1.0, %v757
      %v759 = vmul.f32 %v756, %v758
      %v760 = vadd.f32 %v756, %v759
      %vm761 = vweird.f32 %v756
      %v762 = vsel %vm761, %v756, %v760
      %v763 = vmul.f32 %v752, %v762
      %v764 = vmul.f32 %v755, %v762
      %v765 = vsub.f32 %v748, %v763
      %v766 = vsub.f32 %v749, %v764
      %v767 = vmul.f32 %v765, %v765
      %v768 = vmul.f32 %v766, %v766
      %v769 = vsel %vm397, %v767, 0.0
      %770 = vadd.xlane.f32.xlu0 %v769
      %v771 = vpop.xlane.xlu0 %770
      %v772 = vsel %vm400, %v768, 0.0
      %773 = vadd.xlane.f32.xlu0 %v772
      %v774 = vpop.xlane.xlu0 %773
      %v775 = vmul.f32 %v771, %v762
      %v776 = vmul.f32 %v774, %v762
      %v777 = vadd.f32 %v775, 1e-05
      %v778 = vadd.f32 %v776, 1e-05
      %v779 = vrsqrt.pop %v777
      %v780 = vmul.f32 %v779, %v777
      %v781 = vmul.f32 %v780, %v779
      %v782 = vmul.f32 0.5, %v781
      %v783 = vsub.f32 1.5, %v782
      %v784 = vmul.f32 %v779, %v783
      %vm785 = vweird.f32 %v777
      %vm786 = vweird.f32 %v779
      %vm787 = vmor %vm785, %vm786
      %v788 = vsel %vm787, %v779, %v784
      %v789 = vrsqrt.pop %v778
      %v790 = vmul.f32 %v789, %v778
      %v791 = vmul.f32 %v790, %v789
      %v792 = vmul.f32 0.5, %v791
      %v793 = vsub.f32 1.5, %v792
      %v794 = vmul.f32 %v789, %v793
      %vm795 = vweird.f32 %v778
      %vm796 = vweird.f32 %v789
      %vm797 = vmor %vm795, %vm796
      %v798 = vsel %vm797, %v789, %v794
      %v799 = vmul.f32 %v765, %v788
      %v800 = vmul.f32 %v766, %v798
      %v801 = vld [vmem:[%s7] sm:$0x1]
      %v803 = vperm.slane %v801, 0
      %v805 = vmul.f32 %v799, %v803
      %v806 = vmul.f32 %v800, %v803
      %v807 = vld [vmem:[%s8] sm:$0x1]
      %v809 = vperm.slane %v807, 0
      %v811 = vadd.f32 %v805, %v809
      %v812 = vadd.f32 %v806, %v809
      %v813 = vpack.c.bf16 %v812, %v811
      %v814 = vld [vmem:[%s5] sm:$0xf]
      %v815 = vld [vmem:[%s5 + $0x4] sm:$0xf]
      %v816 = vld [vmem:[%s5 + $0x8] sm:$0xf]
      %v817 = vld [vmem:[%s5 + $0xc] sm:$0xf]
      %v818 = vld [vmem:[%s6] sm:$0x1]
      %v820 = vperm.slane %v818, 0
      %v826 = vunpack.c.l.b16 %v814
      %v827 = vunpack.c.l.b16 %v815
      %v828 = vunpack.c.l.b16 %v816
      %v829 = vunpack.c.l.b16 %v817
      %v830 = vpack.c.b16 %v827, %v826
      %v831 = vpack.c.b16 %v829, %v828
      %v835 = vsel %vm397, %v813, 0
      %837 = vmatpush.bf16.msra.mxu0 0
      %838 = vmatpush.bf16.msra.mxu0 0
      %839 = vmatpush.bf16.msra.mxu0 0
      %840 = vmatpush.bf16.msra.mxu0 0
      %841 = vmatpush.bf16.msra.mxu0 0
      %842 = vmatpush.bf16.msra.mxu0 0
      %843 = vmatpush.bf16.msra.mxu0 %v831
      %844 = vmatpush.bf16.msra.mxu0 %v830
      %845 = vmatmul.bf16.gmra.mxu0 %v835
      %v846 = vpop.f32.mrf.mxu0
      %v847 = vadd.f32 %v820, %v846
      %v848 = vpop.f32.mrf.mxu0
      %v849 = vadd.f32 %v820, %v848
      %850 = vdwg.mxu0
      %v851 = vtanh.pop %v847
      %v852 = vtanh.pop %v849
      %853 = vst.msk [vmem:[%s332] sm:$0xff] %vm377, %v851
      %vm854 = vcmask 516096
      %855 = vst.msk [vmem:[%s332 + $0x8] sm:$0x1] %vm854, %v852
      %p856 = scmp.lt.s32.totalorder %s20, 1
      %s857 = scalar_select %p856, %s20, 1
      %s858 = smul.addr %s857, 2
      %s859 = smul.addr %s858, 8
      %s860 = scalar_lea.vmem %s9, %s859
      // Predicated region
      $region57: #{mic_forward.8} parent=55 // pred_check
        %p861 = pneg %p232
      $region58: #{mic_forward.8} parent=55 // pred_check_branch
        %863 = sbr.rel (%p861) target = $region60
      $region59: #{mic_forward.8} parent=55 // pred_region
        _
      $region60: #{mic_forward.8} parent=55 // pred_fallthru
        _
    $region56: #{mic_forward.8} parent=5 // pred_fallthru
      _
    %p864 = scmp.le.s32.totalorder 2, %s15
    // Predicated region
    $region61: #{mic_forward.8} parent=5 // pred_check
      %p865 = pneg %p864
    $region62: #{mic_forward.8} parent=5 // pred_check_branch
      %867 = sbr.rel (%p865) target = $region64
    $region63: #{mic_forward.8} parent=5 // pred_region
      %s868 = ssub.s32 %s15, 2
      // Predicated region
      $region65: #{mic_forward.8} parent=63 // pred_check
        %p869 = pneg %p238
      $region66: #{mic_forward.8} parent=63 // pred_check_branch
        %871 = sbr.rel (%p869) target = $region68
      $region67: #{mic_forward.8} parent=63 // pred_region
        %p872 = scmp.lt.s32.totalorder %s21, 1
        %s873 = scalar_select %p872, %s21, 1
        %s874 = smul.addr %s873, 2
        %s875 = smul.addr %s874, 8
        %s876 = scalar_lea.vmem %s9, %s875
      $region68: #{mic_forward.8} parent=63 // pred_fallthru
        _
    $region64: #{mic_forward.8} parent=5 // pred_fallthru
      _
  $region6: #{mic_forward.8} parent=0 // loop_footer
    %s19 = sadd.s32 1, %s15
  $region7: #{mic_forward.8} parent=0 // loop_footer_branch
    %14 = sbr.rel target = $region3
  $region8: #{mic_forward.8} parent=0 // loop_exit
    _

// kernel: mic_forward.11
$region0: #{mic_forward.11}
  #allocation0 [shape = 'u32[]', space=smem, size = 0x4, offset = 0x4, fixed_abs, tag = 'smem constant byte address 0x4 - core index']
  #allocation1 [shape = 'u32[72,128]{1,0:T(1,128)}', space=vmem, size = 0x9000, scoped, tag = 'internal scratch']
  #allocation2 [shape = 'f32[13,32]{1,0:T(8,128)}', space=vmem, size = 0x2000, scoped, tag = 'scratch operand']
  %s0 = inlined_call_operand.vmem [shape: bf16[2,5,128], index: 0, kind: input, shape index: {}]
  %s1 = inlined_call_operand.vmem [shape: bf16[128,32], index: 1, kind: input, shape index: {}]
  %s2 = inlined_call_operand.vmem [shape: f32[1,32], index: 2, kind: input, shape index: {}]
  %s3 = inlined_call_operand.vmem [shape: bf16[160,32], index: 3, kind: input, shape index: {}]
  %s4 = inlined_call_operand.vmem [shape: f32[1,32], index: 4, kind: input, shape index: {}]
  %s5 = inlined_call_operand.vmem [shape: bf16[32,128], index: 5, kind: input, shape index: {}]
  %s6 = inlined_call_operand.vmem [shape: f32[1,128], index: 6, kind: input, shape index: {}]
  %s7 = inlined_call_operand.vmem [shape: f32[1,32], index: 7, kind: input, shape index: {}]
  %s8 = inlined_call_operand.vmem [shape: f32[1,32], index: 8, kind: input, shape index: {}]
  %s9 = inlined_call_operand.vmem [shape: f32[2,5,128], index: 9, kind: output, shape index: {}]
  %s10 = sld [smem:[#allocation0]]
  $region69: #{mic_forward.11} parent=0
    _
  %s12 = ssub.s32 1, %s10
  %s13 = scalar_select 0, %s12, %s10
  loop: start=0, step=1, limit=4
  $region2: #{mic_forward.11} parent=0 // loop_pre_header
    _
  $region3: #{mic_forward.11} parent=0 // loop_header
    %s15 = sphi 0, %s19
    %p16 = scmp.ge.s32.totalorder %s15, 4
    %s25 = sphi 0, %s27
    %s28 = sphi 0, %s25
    %s29 = sphi 0, %s28
    %s45 = sphi 0, %s29
    %s49 = sphi 0, %s49
    %s51 = sphi 0, %s49
    %s52 = sphi 0, %s51
    %s66 = sphi 0, %s52
    %s70 = sphi 0, %s70
    %s72 = sphi 0, %s70
    %s73 = sphi 0, %s72
    %s87 = sphi 0, %s73
    %s91 = sphi 0, %s91
    %s93 = sphi 0, %s91
    %s94 = sphi 0, %s93
    %s108 = sphi 0, %s94
    %s112 = sphi 0, %s112
    %s114 = sphi 0, %s112
    %s115 = sphi 0, %s114
    %s129 = sphi 0, %s115
    %s133 = sphi 0, %s133
    %s135 = sphi 0, %s133
    %s136 = sphi 0, %s135
    %s150 = sphi 0, %s136
    %s154 = sphi 0, %s154
    %s156 = sphi 0, %s154
    %s157 = sphi 0, %s156
    %s171 = sphi 0, %s157
    %s175 = sphi 0, %s175
    %s177 = sphi 0, %s175
    %s178 = sphi 0, %s177
    %s192 = sphi 0, %s178
    %s196 = sphi 0, %s196
    %s198 = sphi 0, %s196
    %s199 = sphi 0, %s198
    %s213 = sphi 0, %s199
    %s219 = sphi 0, %s221
    %s222 = sphi 0, %s219
    %s223 = sphi 0, %s222
    %s239 = sphi 0, %s223
  $region4: #{mic_forward.11} parent=0 // loop_header_branch
    %18 = sbr.rel (%p16) target = $region8
  $region5: #{mic_forward.11} parent=0 // loop_body
    %s20 = ssub.s32 %s15, 1
    %s21 = ssub.s32 %s15, 2
    %s22 = sadd.s32 %s15, 1
    %s23 = ssub.s32 %s15, %s22
    %p24 = scmp.eq.s32.totalorder %s23, 0
    %s26 = sadd.s32 %s25, 1
    %s27 = scalar_select %p24, %s25, %s26
    %p30 = pneg %p24
    %p31 = scmp.eq.s32.totalorder %s15, 1
    %p32 = por %p30, %p31
    %p33 = scmp.ne.s32.totalorder %s25, %s28
    %p34 = scmp.eq.s32.totalorder %s15, 0
    %p35 = por %p33, %p34
    %p36 = scmp.ne.s32.totalorder %s25, %s28
    %p37 = scmp.eq.s32.totalorder %s20, 1
    %p38 = por %p36, %p37
    %p39 = scmp.ne.s32.totalorder %s28, %s29
    %p40 = scmp.eq.s32.totalorder %s20, 0
    %p41 = por %p39, %p40
    %p42 = scmp.ne.s32.totalorder %s28, %s29
    %p43 = scmp.eq.s32.totalorder %s21, 1
    %p44 = por %p42, %p43
    %p46 = scmp.ne.s32.totalorder %s29, %s45
    %p47 = scmp.eq.s32.totalorder %s21, 0
    %p48 = por %p46, %p47
    %s50 = sadd.s32 %s49, 1
    %p53 = scmp.eq.s32.totalorder %s15, 1
    %p54 = scmp.ne.s32.totalorder %s49, %s51
    %p55 = scmp.eq.s32.totalorder %s15, 0
    %p56 = por %p54, %p55
    %p57 = scmp.ne.s32.totalorder %s49, %s51
    %p58 = scmp.eq.s32.totalorder %s20, 1
    %p59 = por %p57, %p58
    %p60 = scmp.ne.s32.totalorder %s51, %s52
    %p61 = scmp.eq.s32.totalorder %s20, 0
    %p62 = por %p60, %p61
    %p63 = scmp.ne.s32.totalorder %s51, %s52
    %p64 = scmp.eq.s32.totalorder %s21, 1
    %p65 = por %p63, %p64
    %p67 = scmp.ne.s32.totalorder %s52, %s66
    %p68 = scmp.eq.s32.totalorder %s21, 0
    %p69 = por %p67, %p68
    %s71 = sadd.s32 %s70, 1
    %p74 = scmp.eq.s32.totalorder %s15, 1
    %p75 = scmp.ne.s32.totalorder %s70, %s72
    %p76 = scmp.eq.s32.totalorder %s15, 0
    %p77 = por %p75, %p76
    %p78 = scmp.ne.s32.totalorder %s70, %s72
    %p79 = scmp.eq.s32.totalorder %s20, 1
    %p80 = por %p78, %p79
    %p81 = scmp.ne.s32.totalorder %s72, %s73
    %p82 = scmp.eq.s32.totalorder %s20, 0
    %p83 = por %p81, %p82
    %p84 = scmp.ne.s32.totalorder %s72, %s73
    %p85 = scmp.eq.s32.totalorder %s21, 1
    %p86 = por %p84, %p85
    %p88 = scmp.ne.s32.totalorder %s73, %s87
    %p89 = scmp.eq.s32.totalorder %s21, 0
    %p90 = por %p88, %p89
    %s92 = sadd.s32 %s91, 1
    %p95 = scmp.eq.s32.totalorder %s15, 1
    %p96 = scmp.ne.s32.totalorder %s91, %s93
    %p97 = scmp.eq.s32.totalorder %s15, 0
    %p98 = por %p96, %p97
    %p99 = scmp.ne.s32.totalorder %s91, %s93
    %p100 = scmp.eq.s32.totalorder %s20, 1
    %p101 = por %p99, %p100
    %p102 = scmp.ne.s32.totalorder %s93, %s94
    %p103 = scmp.eq.s32.totalorder %s20, 0
    %p104 = por %p102, %p103
    %p105 = scmp.ne.s32.totalorder %s93, %s94
    %p106 = scmp.eq.s32.totalorder %s21, 1
    %p107 = por %p105, %p106
    %p109 = scmp.ne.s32.totalorder %s94, %s108
    %p110 = scmp.eq.s32.totalorder %s21, 0
    %p111 = por %p109, %p110
    %s113 = sadd.s32 %s112, 1
    %p116 = scmp.eq.s32.totalorder %s15, 1
    %p117 = scmp.ne.s32.totalorder %s112, %s114
    %p118 = scmp.eq.s32.totalorder %s15, 0
    %p119 = por %p117, %p118
    %p120 = scmp.ne.s32.totalorder %s112, %s114
    %p121 = scmp.eq.s32.totalorder %s20, 1
    %p122 = por %p120, %p121
    %p123 = scmp.ne.s32.totalorder %s114, %s115
    %p124 = scmp.eq.s32.totalorder %s20, 0
    %p125 = por %p123, %p124
    %p126 = scmp.ne.s32.totalorder %s114, %s115
    %p127 = scmp.eq.s32.totalorder %s21, 1
    %p128 = por %p126, %p127
    %p130 = scmp.ne.s32.totalorder %s115, %s129
    %p131 = scmp.eq.s32.totalorder %s21, 0
    %p132 = por %p130, %p131
    %s134 = sadd.s32 %s133, 1
    %p137 = scmp.eq.s32.totalorder %s15, 1
    %p138 = scmp.ne.s32.totalorder %s133, %s135
    %p139 = scmp.eq.s32.totalorder %s15, 0
    %p140 = por %p138, %p139
    %p141 = scmp.ne.s32.totalorder %s133, %s135
    %p142 = scmp.eq.s32.totalorder %s20, 1
    %p143 = por %p141, %p142
    %p144 = scmp.ne.s32.totalorder %s135, %s136
    %p145 = scmp.eq.s32.totalorder %s20, 0
    %p146 = por %p144, %p145
    %p147 = scmp.ne.s32.totalorder %s135, %s136
    %p148 = scmp.eq.s32.totalorder %s21, 1
    %p149 = por %p147, %p148
    %p151 = scmp.ne.s32.totalorder %s136, %s150
    %p152 = scmp.eq.s32.totalorder %s21, 0
    %p153 = por %p151, %p152
    %s155 = sadd.s32 %s154, 1
    %p158 = scmp.eq.s32.totalorder %s15, 1
    %p159 = scmp.ne.s32.totalorder %s154, %s156
    %p160 = scmp.eq.s32.totalorder %s15, 0
    %p161 = por %p159, %p160
    %p162 = scmp.ne.s32.totalorder %s154, %s156
    %p163 = scmp.eq.s32.totalorder %s20, 1
    %p164 = por %p162, %p163
    %p165 = scmp.ne.s32.totalorder %s156, %s157
    %p166 = scmp.eq.s32.totalorder %s20, 0
    %p167 = por %p165, %p166
    %p168 = scmp.ne.s32.totalorder %s156, %s157
    %p169 = scmp.eq.s32.totalorder %s21, 1
    %p170 = por %p168, %p169
    %p172 = scmp.ne.s32.totalorder %s157, %s171
    %p173 = scmp.eq.s32.totalorder %s21, 0
    %p174 = por %p172, %p173
    %s176 = sadd.s32 %s175, 1
    %p179 = scmp.eq.s32.totalorder %s15, 1
    %p180 = scmp.ne.s32.totalorder %s175, %s177
    %p181 = scmp.eq.s32.totalorder %s15, 0
    %p182 = por %p180, %p181
    %p183 = scmp.ne.s32.totalorder %s175, %s177
    %p184 = scmp.eq.s32.totalorder %s20, 1
    %p185 = por %p183, %p184
    %p186 = scmp.ne.s32.totalorder %s177, %s178
    %p187 = scmp.eq.s32.totalorder %s20, 0
    %p188 = por %p186, %p187
    %p189 = scmp.ne.s32.totalorder %s177, %s178
    %p190 = scmp.eq.s32.totalorder %s21, 1
    %p191 = por %p189, %p190
    %p193 = scmp.ne.s32.totalorder %s178, %s192
    %p194 = scmp.eq.s32.totalorder %s21, 0
    %p195 = por %p193, %p194
    %s197 = sadd.s32 %s196, 1
    %p200 = scmp.eq.s32.totalorder %s15, 1
    %p201 = scmp.ne.s32.totalorder %s196, %s198
    %p202 = scmp.eq.s32.totalorder %s15, 0
    %p203 = por %p201, %p202
    %p204 = scmp.ne.s32.totalorder %s196, %s198
    %p205 = scmp.eq.s32.totalorder %s20, 1
    %p206 = por %p204, %p205
    %p207 = scmp.ne.s32.totalorder %s198, %s199
    %p208 = scmp.eq.s32.totalorder %s20, 0
    %p209 = por %p207, %p208
    %p210 = scmp.ne.s32.totalorder %s198, %s199
    %p211 = scmp.eq.s32.totalorder %s21, 1
    %p212 = por %p210, %p211
    %p214 = scmp.ne.s32.totalorder %s199, %s213
    %p215 = scmp.eq.s32.totalorder %s21, 0
    %p216 = por %p214, %p215
    %s217 = ssub.s32 %s15, %s22
    %p218 = scmp.eq.s32.totalorder %s217, 0
    %s220 = sadd.s32 %s219, 1
    %s221 = scalar_select %p218, %s219, %s220
    %p224 = pneg %p218
    %p225 = scmp.eq.s32.totalorder %s15, 1
    %p226 = por %p224, %p225
    %p227 = scmp.ne.s32.totalorder %s219, %s222
    %p228 = scmp.eq.s32.totalorder %s15, 0
    %p229 = por %p227, %p228
    %p230 = scmp.ne.s32.totalorder %s219, %s222
    %p231 = scmp.eq.s32.totalorder %s20, 1
    %p232 = por %p230, %p231
    %p233 = scmp.ne.s32.totalorder %s222, %s223
    %p234 = scmp.eq.s32.totalorder %s20, 0
    %p235 = por %p233, %p234
    %p236 = scmp.ne.s32.totalorder %s222, %s223
    %p237 = scmp.eq.s32.totalorder %s21, 1
    %p238 = por %p236, %p237
    %p240 = scmp.ne.s32.totalorder %s223, %s239
    %p241 = scmp.eq.s32.totalorder %s21, 0
    %p242 = por %p240, %p241
    %p243 = scmp.le.s32.totalorder 1, %s15
    %p244 = scmp.lt.s32.totalorder %s15, 3
    %p245 = pnand %p243, %p244
    %p246 = pneg %p245
    // Predicated region
    $region9: #{mic_forward.11} parent=5 // pred_check
      _
    $region10: #{mic_forward.11} parent=5 // pred_check_branch
      %248 = sbr.rel (%p245) target = $region12
    $region11: #{mic_forward.11} parent=5 // pred_region
      %s249 = ssub.s32 %s15, 1
      // Predicated region
      $region13: #{mic_forward.11} parent=11 // pred_check
        %p250 = pneg %p62
      $region14: #{mic_forward.11} parent=11 // pred_check_branch
        %252 = sbr.rel (%p250) target = $region16
      $region15: #{mic_forward.11} parent=11 // pred_region
        _
      $region16: #{mic_forward.11} parent=11 // pred_fallthru
        _
      // Predicated region
      $region17: #{mic_forward.11} parent=11 // pred_check
        %p253 = pneg %p83
      $region18: #{mic_forward.11} parent=11 // pred_check_branch
        %255 = sbr.rel (%p253) target = $region20
      $region19: #{mic_forward.11} parent=11 // pred_region
        _
      $region20: #{mic_forward.11} parent=11 // pred_fallthru
        _
      // Predicated region
      $region21: #{mic_forward.11} parent=11 // pred_check
        %p256 = pneg %p104
      $region22: #{mic_forward.11} parent=11 // pred_check_branch
        %258 = sbr.rel (%p256) target = $region24
      $region23: #{mic_forward.11} parent=11 // pred_region
        _
      $region24: #{mic_forward.11} parent=11 // pred_fallthru
        _
      // Predicated region
      $region25: #{mic_forward.11} parent=11 // pred_check
        %p259 = pneg %p125
      $region26: #{mic_forward.11} parent=11 // pred_check_branch
        %261 = sbr.rel (%p259) target = $region28
      $region27: #{mic_forward.11} parent=11 // pred_region
        _
      $region28: #{mic_forward.11} parent=11 // pred_fallthru
        _
      // Predicated region
      $region29: #{mic_forward.11} parent=11 // pred_check
        %p262 = pneg %p146
      $region30: #{mic_forward.11} parent=11 // pred_check_branch
        %264 = sbr.rel (%p262) target = $region32
      $region31: #{mic_forward.11} parent=11 // pred_region
        _
      $region32: #{mic_forward.11} parent=11 // pred_fallthru
        _
      // Predicated region
      $region33: #{mic_forward.11} parent=11 // pred_check
        %p265 = pneg %p167
      $region34: #{mic_forward.11} parent=11 // pred_check_branch
        %267 = sbr.rel (%p265) target = $region36
      $region35: #{mic_forward.11} parent=11 // pred_region
        _
      $region36: #{mic_forward.11} parent=11 // pred_fallthru
        _
      // Predicated region
      $region37: #{mic_forward.11} parent=11 // pred_check
        %p268 = pneg %p188
      $region38: #{mic_forward.11} parent=11 // pred_check_branch
        %270 = sbr.rel (%p268) target = $region40
      $region39: #{mic_forward.11} parent=11 // pred_region
        _
      $region40: #{mic_forward.11} parent=11 // pred_fallthru
        _
      // Predicated region
      $region41: #{mic_forward.11} parent=11 // pred_check
        %p271 = pneg %p209
      $region42: #{mic_forward.11} parent=11 // pred_check_branch
        %273 = sbr.rel (%p271) target = $region44
      $region43: #{mic_forward.11} parent=11 // pred_region
        _
      $region44: #{mic_forward.11} parent=11 // pred_fallthru
        _
    $region12: #{mic_forward.11} parent=5 // pred_fallthru
      _
    %p274 = scmp.lt.s32.totalorder %s15, 2
    // Predicated region
    $region45: #{mic_forward.11} parent=5 // pred_check
      %p275 = pneg %p274
    $region46: #{mic_forward.11} parent=5 // pred_check_branch
      %277 = sbr.rel (%p275) target = $region48
    $region47: #{mic_forward.11} parent=5 // pred_region
      // Predicated region
      $region49: #{mic_forward.11} parent=47 // pred_check
        %p278 = pneg %p35
      $region50: #{mic_forward.11} parent=47 // pred_check_branch
        %280 = sbr.rel (%p278) target = $region52
      $region51: #{mic_forward.11} parent=47 // pred_region
        %p281 = scmp.lt.s32.totalorder %s15, 1
        %s282 = scalar_select %p281, %s15, 1
        %s283 = smul.addr %s282, 4
        %s284 = scalar_lea.vmem %s0, %s283
      $region52: #{mic_forward.11} parent=47 // pred_fallthru
        _
    $region48: #{mic_forward.11} parent=5 // pred_fallthru
      _
    %p285 = scmp.le.s32.totalorder 1, %s15
    %p286 = scmp.lt.s32.totalorder %s15, 3
    %p287 = pnand %p285, %p286
    %p288 = pneg %p287
    // Predicated region
    $region53: #{mic_forward.11} parent=5 // pred_check
      _
    $region54: #{mic_forward.11} parent=5 // pred_check_branch
      %290 = sbr.rel (%p287) target = $region56
    $region55: #{mic_forward.11} parent=5 // pred_region
      %s291 = ssub.s32 %s15, 1
      %p292 = scmp.lt.s32.totalorder %s20, 1
      %s293 = scalar_select %p292, %s20, 1
      %s294 = smul.addr %s293, 4
      %s295 = scalar_lea.vmem %s0, %s294
      %p296 = pneg %p41
      %p297 = pneg %p38
      %p298 = pneg %p62
      %p299 = pneg %p59
      %p300 = pneg %p83
      %p301 = pneg %p80
      %p302 = pneg %p104
      %p303 = pneg %p101
      %p304 = pneg %p125
      %p305 = pneg %p122
      %p306 = pneg %p146
      %p307 = pneg %p143
      %p308 = pneg %p167
      %p309 = pneg %p164
      %p310 = pneg %p188
      %p311 = pneg %p185
      %p312 = pneg %p209
      %p313 = pneg %p206
      %p314 = pneg %p235
      %p315 = pneg %p232
      %p316 = scmp.lt.s32.totalorder %s20, 1
      %s317 = scalar_select %p316, %s20, 1
      %s318 = smul.addr %s317, 8
      %s319 = scalar_lea.vmem %s9, %s318
      %p320 = scmp.lt.s32.totalorder %s20, 1
      %s321 = scalar_select %p320, %s20, 1
      %s322 = smul.addr %s321, 4
      %s323 = scalar_lea.vmem %s0, %s322
      %p324 = scmp.lt.s32.totalorder %s20, 1
      %s325 = scalar_select %p324, %s20, 1
      %s326 = smul.addr %s325, 8
      %s327 = scalar_lea.vmem %s9, %s326
      %v329 = vld [vmem:[%s323] sm:$0x7]
      %v330 = vld [vmem:[%s1] sm:$0xf]
      %v331 = vld [vmem:[%s1 + $0x4] sm:$0xf]
      %v332 = vld [vmem:[%s1 + $0x8] sm:$0xf]
      %v333 = vld [vmem:[%s1 + $0xc] sm:$0xf]
      %v334 = vld [vmem:[%s1 + $0x10] sm:$0xf]
      %v335 = vld [vmem:[%s1 + $0x14] sm:$0xf]
      %v336 = vld [vmem:[%s1 + $0x18] sm:$0xf]
      %v337 = vld [vmem:[%s1 + $0x1c] sm:$0xf]
      %v338 = vld [vmem:[%s1 + $0x20] sm:$0xf]
      %v339 = vld [vmem:[%s1 + $0x24] sm:$0xf]
      %v340 = vld [vmem:[%s1 + $0x28] sm:$0xf]
      %v341 = vld [vmem:[%s1 + $0x2c] sm:$0xf]
      %v342 = vld [vmem:[%s1 + $0x30] sm:$0xf]
      %v343 = vld [vmem:[%s1 + $0x34] sm:$0xf]
      %v344 = vld [vmem:[%s1 + $0x38] sm:$0xf]
      %v345 = vld [vmem:[%s1 + $0x3c] sm:$0xf]
      %v346 = vld [vmem:[%s2] sm:$0x1]
      %v348 = vperm.slane %v346, 0
      %v366 = vunpack.c.l.b16 %v330
      %v367 = vunpack.c.l.b16 %v331
      %v368 = vunpack.c.l.b16 %v332
      %v369 = vunpack.c.l.b16 %v333
      %v370 = vunpack.c.l.b16 %v334
      %v371 = vunpack.c.l.b16 %v335
      %v372 = vunpack.c.l.b16 %v336
      %v373 = vunpack.c.l.b16 %v337
      %v374 = vunpack.c.l.b16 %v338
      %v375 = vunpack.c.l.b16 %v339
      %v376 = vunpack.c.l.b16 %v340
      %v377 = vunpack.c.l.b16 %v341
      %v378 = vunpack.c.l.b16 %v342
      %v379 = vunpack.c.l.b16 %v343
      %v380 = vunpack.c.l.b16 %v344
      %v381 = vunpack.c.l.b16 %v345
      %v382 = vpack.c.b16 %v367, %v366
      %v383 = vpack.c.b16 %v369, %v368
      %v384 = vpack.c.b16 %v371, %v370
      %v385 = vpack.c.b16 %v373, %v372
      %v386 = vpack.c.b16 %v375, %v374
      %v387 = vpack.c.b16 %v377, %v376
      %v388 = vpack.c.b16 %v379, %v378
      %v389 = vpack.c.b16 %v381, %v380
      %398 = vmatpush.bf16.msra.mxu0 %v389
      %399 = vmatpush.bf16.msra.mxu0 %v388
      %400 = vmatpush.bf16.msra.mxu0 %v387
      %401 = vmatpush.bf16.msra.mxu0 %v386
      %402 = vmatpush.bf16.msra.mxu0 %v385
      %403 = vmatpush.bf16.msra.mxu0 %v384
      %404 = vmatpush.bf16.msra.mxu0 %v383
      %405 = vmatpush.bf16.msra.mxu0 %v382
      %406 = vmatmul.bf16.gmra.mxu0 %v329
      %v407 = vpop.f32.mrf.mxu0
      %v408 = vadd.f32 %v348, %v407
      %v409 = vpop.f32.mrf.mxu0
      %410 = vdwg.mxu0
      %v411 = vtanh.pop %v408
      %vm412 = vcmask 261120
      %413 = vst.msk [vmem:[#allocation2] sm:$0xff] %vm412, 0.0
      %vm414 = vcmask 258048
      %415 = vst.msk [vmem:[#allocation2 + $0x8] sm:$0x1f] %vm414, %v411
      %v416 = vld [vmem:[#allocation2 + $0x4] sm:$0x1f]
      %v417 = vpack.c.bf16 %v416, %v416
      %v418 = vld [vmem:[%s3] sm:$0xf]
      %v419 = vld [vmem:[%s3 + $0x4] sm:$0xf]
      %v420 = vld [vmem:[%s3 + $0x8] sm:$0xf]
      %v421 = vld [vmem:[%s3 + $0xc] sm:$0xf]
      %v422 = vld [vmem:[#allocation2 + $0x5] sm:$0x1f]
      %v423 = vpack.c.bf16 %v422, %v422
      %v424 = vld [vmem:[%s3 + $0x10] sm:$0xf]
      %v425 = vld [vmem:[%s3 + $0x14] sm:$0xf]
      %v426 = vld [vmem:[%s3 + $0x18] sm:$0xf]
      %v427 = vld [vmem:[%s3 + $0x1c] sm:$0xf]
      %v432 = vunpack.c.l.b16 %v424
      %v433 = vunpack.c.l.b16 %v425
      %v434 = vunpack.c.l.b16 %v426
      %v435 = vunpack.c.l.b16 %v427
      %v436 = vpack.c.b16 %v433, %v432
      %v437 = vpack.c.b16 %v435, %v434
      %v441 = vsel %vm412, %v423, 0
      %443 = vmatpush.bf16.msra.mxu0 0
      %444 = vmatpush.bf16.msra.mxu0 0
      %445 = vmatpush.bf16.msra.mxu0 0
      %446 = vmatpush.bf16.msra.mxu0 0
      %447 = vmatpush.bf16.msra.mxu0 0
      %448 = vmatpush.bf16.msra.mxu0 0
      %449 = vmatpush.bf16.msra.mxu0 %v437
      %450 = vmatpush.bf16.msra.mxu0 %v436
      %451 = vmatmul.bf16.gmra.mxu0 %v441
      %v452 = vpop.f32.mrf.mxu0
      %v453 = vadd.f32 0.0, %v452
      %v454 = vpop.f32.mrf.mxu0
      %455 = vdwg.mxu0
      %v460 = vunpack.c.l.b16 %v418
      %v461 = vunpack.c.l.b16 %v419
      %v462 = vunpack.c.l.b16 %v420
      %v463 = vunpack.c.l.b16 %v421
      %v464 = vpack.c.b16 %v461, %v460
      %v465 = vpack.c.b16 %v463, %v462
      %v469 = vsel %vm412, %v417, 0
      %471 = vmatpush.bf16.msra.mxu0 0
      %472 = vmatpush.bf16.msra.mxu0 0
      %473 = vmatpush.bf16.msra.mxu0 0
      %474 = vmatpush.bf16.msra.mxu0 0
      %475 = vmatpush.bf16.msra.mxu0 0
      %476 = vmatpush.bf16.msra.mxu0 0
      %477 = vmatpush.bf16.msra.mxu0 %v465
      %478 = vmatpush.bf16.msra.mxu0 %v464
      %479 = vmatmul.bf16.gmra.mxu0 %v469
      %v480 = vpop.f32.mrf.mxu0
      %v481 = vadd.f32 %v453, %v480
      %v482 = vpop.f32.mrf.mxu0
      %483 = vdwg.mxu0
      %v484 = vld [vmem:[#allocation2 + $0x6] sm:$0x1f]
      %v485 = vpack.c.bf16 %v484, %v484
      %v486 = vld [vmem:[%s3 + $0x20] sm:$0xf]
      %v487 = vld [vmem:[%s3 + $0x24] sm:$0xf]
      %v488 = vld [vmem:[%s3 + $0x28] sm:$0xf]
      %v489 = vld [vmem:[%s3 + $0x2c] sm:$0xf]
      %v494 = vunpack.c.l.b16 %v486
      %v495 = vunpack.c.l.b16 %v487
      %v496 = vunpack.c.l.b16 %v488
      %v497 = vunpack.c.l.b16 %v489
      %v498 = vpack.c.b16 %v495, %v494
      %v499 = vpack.c.b16 %v497, %v496
      %v503 = vsel %vm412, %v485, 0
      %505 = vmatpush.bf16.msra.mxu0 0
      %506 = vmatpush.bf16.msra.mxu0 0
      %507 = vmatpush.bf16.msra.mxu0 0
      %508 = vmatpush.bf16.msra.mxu0 0
      %509 = vmatpush.bf16.msra.mxu0 0
      %510 = vmatpush.bf16.msra.mxu0 0
      %511 = vmatpush.bf16.msra.mxu0 %v499
      %512 = vmatpush.bf16.msra.mxu0 %v498
      %513 = vmatmul.bf16.gmra.mxu0 %v503
      %v514 = vpop.f32.mrf.mxu0
      %v515 = vadd.f32 0.0, %v514
      %v516 = vpop.f32.mrf.mxu0
      %517 = vdwg.mxu0
      %v518 = vadd.f32 %v481, %v515
      %v519 = vld [vmem:[#allocation2 + $0x7] sm:$0x1f]
      %v520 = vpack.c.bf16 %v519, %v519
      %v521 = vld [vmem:[%s3 + $0x30] sm:$0xf]
      %v522 = vld [vmem:[%s3 + $0x34] sm:$0xf]
      %v523 = vld [vmem:[%s3 + $0x38] sm:$0xf]
      %v524 = vld [vmem:[%s3 + $0x3c] sm:$0xf]
      %v529 = vunpack.c.l.b16 %v521
      %v530 = vunpack.c.l.b16 %v522
      %v531 = vunpack.c.l.b16 %v523
      %v532 = vunpack.c.l.b16 %v524
      %v533 = vpack.c.b16 %v530, %v529
      %v534 = vpack.c.b16 %v532, %v531
      %v538 = vsel %vm412, %v520, 0
      %540 = vmatpush.bf16.msra.mxu0 0
      %541 = vmatpush.bf16.msra.mxu0 0
      %542 = vmatpush.bf16.msra.mxu0 0
      %543 = vmatpush.bf16.msra.mxu0 0
      %544 = vmatpush.bf16.msra.mxu0 0
      %545 = vmatpush.bf16.msra.mxu0 0
      %546 = vmatpush.bf16.msra.mxu0 %v534
      %547 = vmatpush.bf16.msra.mxu0 %v533
      %548 = vmatmul.bf16.gmra.mxu0 %v538
      %v549 = vpop.f32.mrf.mxu0
      %v550 = vadd.f32 0.0, %v549
      %v551 = vpop.f32.mrf.mxu0
      %552 = vdwg.mxu0
      %v553 = vadd.f32 %v518, %v550
      %v554 = vld [vmem:[#allocation2 + $0x8] sm:$0x1f]
      %v555 = vpack.c.bf16 %v554, %v554
      %v556 = vld [vmem:[%s3 + $0x40] sm:$0xf]
      %v557 = vld [vmem:[%s3 + $0x44] sm:$0xf]
      %v558 = vld [vmem:[%s3 + $0x48] sm:$0xf]
      %v559 = vld [vmem:[%s3 + $0x4c] sm:$0xf]
      %v564 = vunpack.c.l.b16 %v556
      %v565 = vunpack.c.l.b16 %v557
      %v566 = vunpack.c.l.b16 %v558
      %v567 = vunpack.c.l.b16 %v559
      %v568 = vpack.c.b16 %v565, %v564
      %v569 = vpack.c.b16 %v567, %v566
      %v573 = vsel %vm412, %v555, 0
      %575 = vmatpush.bf16.msra.mxu0 0
      %576 = vmatpush.bf16.msra.mxu0 0
      %577 = vmatpush.bf16.msra.mxu0 0
      %578 = vmatpush.bf16.msra.mxu0 0
      %579 = vmatpush.bf16.msra.mxu0 0
      %580 = vmatpush.bf16.msra.mxu0 0
      %581 = vmatpush.bf16.msra.mxu0 %v569
      %582 = vmatpush.bf16.msra.mxu0 %v568
      %583 = vmatmul.bf16.gmra.mxu0 %v573
      %v584 = vpop.f32.mrf.mxu0
      %v585 = vadd.f32 0.0, %v584
      %v586 = vpop.f32.mrf.mxu0
      %587 = vdwg.mxu0
      %v588 = vadd.f32 %v553, %v585
      %v589 = vld [vmem:[%s4] sm:$0x1]
      %v591 = vperm.slane %v589, 0
      %v593 = vadd.f32 %v588, %v591
      %v594 = vtanh.pop %v593
      %v595 = vadd.f32 %v594, %v411
      %v596 = vsel %vm414, %v595, 0.0
      %597 = vadd.xlane.f32.xlu0 %v596
      %v598 = vpop.xlane.xlu0 %597
      %v599 = vrcp.pop 32.0
      %v600 = vmul.f32 32.0, %v599
      %v601 = vsub.f32 1.0, %v600
      %v602 = vmul.f32 %v599, %v601
      %v603 = vadd.f32 %v599, %v602
      %vm604 = vweird.f32 %v599
      %v605 = vsel %vm604, %v599, %v603
      %v606 = vmul.f32 %v598, %v605
      %v607 = vsub.f32 %v595, %v606
      %v608 = vmul.f32 %v607, %v607
      %v609 = vsel %vm414, %v608, 0.0
      %610 = vadd.xlane.f32.xlu0 %v609
      %v611 = vpop.xlane.xlu0 %610
      %v612 = vmul.f32 %v611, %v605
      %v613 = vadd.f32 %v612, 1e-05
      %v614 = vrsqrt.pop %v613
      %v615 = vmul.f32 %v614, %v613
      %v616 = vmul.f32 %v615, %v614
      %v617 = vmul.f32 0.5, %v616
      %v618 = vsub.f32 1.5, %v617
      %v619 = vmul.f32 %v614, %v618
      %vm620 = vweird.f32 %v613
      %vm621 = vweird.f32 %v614
      %vm622 = vmor %vm620, %vm621
      %v623 = vsel %vm622, %v614, %v619
      %v624 = vmul.f32 %v607, %v623
      %v625 = vld [vmem:[%s7] sm:$0x1]
      %v627 = vperm.slane %v625, 0
      %v629 = vmul.f32 %v624, %v627
      %v630 = vld [vmem:[%s8] sm:$0x1]
      %v632 = vperm.slane %v630, 0
      %v634 = vadd.f32 %v629, %v632
      %v635 = vpack.c.bf16 %v634, %v634
      %v636 = vld [vmem:[%s5] sm:$0xf]
      %v637 = vld [vmem:[%s5 + $0x4] sm:$0xf]
      %v638 = vld [vmem:[%s5 + $0x8] sm:$0xf]
      %v639 = vld [vmem:[%s5 + $0xc] sm:$0xf]
      %v640 = vld [vmem:[%s6] sm:$0x1]
      %v642 = vperm.slane %v640, 0
      %v648 = vunpack.c.l.b16 %v636
      %v649 = vunpack.c.l.b16 %v637
      %v650 = vunpack.c.l.b16 %v638
      %v651 = vunpack.c.l.b16 %v639
      %v652 = vpack.c.b16 %v649, %v648
      %v653 = vpack.c.b16 %v651, %v650
      %v657 = vsel %vm412, %v635, 0
      %659 = vmatpush.bf16.msra.mxu0 0
      %660 = vmatpush.bf16.msra.mxu0 0
      %661 = vmatpush.bf16.msra.mxu0 0
      %662 = vmatpush.bf16.msra.mxu0 0
      %663 = vmatpush.bf16.msra.mxu0 0
      %664 = vmatpush.bf16.msra.mxu0 0
      %665 = vmatpush.bf16.msra.mxu0 %v653
      %666 = vmatpush.bf16.msra.mxu0 %v652
      %667 = vmatmul.bf16.gmra.mxu0 %v657
      %v668 = vpop.f32.mrf.mxu0
      %v669 = vadd.f32 %v642, %v668
      %v670 = vpop.f32.mrf.mxu0
      %671 = vdwg.mxu0
      %v672 = vtanh.pop %v669
      %673 = vst [vmem:[%s327] sm:$0x1f] %v672
      %p674 = scmp.lt.s32.totalorder %s20, 1
      %s675 = scalar_select %p674, %s20, 1
      %s676 = smul.addr %s675, 8
      %s677 = scalar_lea.vmem %s9, %s676
      // Predicated region
      $region57: #{mic_forward.11} parent=55 // pred_check
        %p678 = pneg %p232
      $region58: #{mic_forward.11} parent=55 // pred_check_branch
        %680 = sbr.rel (%p678) target = $region60
      $region59: #{mic_forward.11} parent=55 // pred_region
        _
      $region60: #{mic_forward.11} parent=55 // pred_fallthru
        _
    $region56: #{mic_forward.11} parent=5 // pred_fallthru
      _
    %p681 = scmp.le.s32.totalorder 2, %s15
    // Predicated region
    $region61: #{mic_forward.11} parent=5 // pred_check
      %p682 = pneg %p681
    $region62: #{mic_forward.11} parent=5 // pred_check_branch
      %684 = sbr.rel (%p682) target = $region64
    $region63: #{mic_forward.11} parent=5 // pred_region
      %s685 = ssub.s32 %s15, 2
      // Predicated region
      $region65: #{mic_forward.11} parent=63 // pred_check
        %p686 = pneg %p238
      $region66: #{mic_forward.11} parent=63 // pred_check_branch
        %688 = sbr.rel (%p686) target = $region68
      $region67: #{mic_forward.11} parent=63 // pred_region
        %p689 = scmp.lt.s32.totalorder %s21, 1
        %s690 = scalar_select %p689, %s21, 1
        %s691 = smul.addr %s690, 8
        %s692 = scalar_lea.vmem %s9, %s691
      $region68: #{mic_forward.11} parent=63 // pred_fallthru
        _
    $region64: #{mic_forward.11} parent=5 // pred_fallthru
      _
  $region6: #{mic_forward.11} parent=0 // loop_footer
    %s19 = sadd.s32 1, %s15
  $region7: #{mic_forward.11} parent=0 // loop_footer_branch
    %14 = sbr.rel target = $region3
  $region8: #{mic_forward.11} parent=0 // loop_exit
    _

// kernel: mic_forward.13
$region0: #{mic_forward.13}
  #allocation0 [shape = 'u32[]', space=smem, size = 0x4, offset = 0x4, fixed_abs, tag = 'smem constant byte address 0x4 - core index']
  #allocation1 [shape = 'u32[72,128]{1,0:T(1,128)}', space=vmem, size = 0x9000, scoped, tag = 'internal scratch']
  %s0 = inlined_call_operand.vmem [shape: bf16[32,64], index: 0, kind: input, shape index: {}]
  %s1 = inlined_call_operand.vmem [shape: bf16[64,32], index: 1, kind: input, shape index: {}]
  %s2 = inlined_call_operand.vmem [shape: f32[1,32], index: 2, kind: input, shape index: {}]
  %s3 = inlined_call_operand.vmem [shape: f32[1,32], index: 3, kind: input, shape index: {}]
  %s4 = inlined_call_operand.vmem [shape: f32[1,32], index: 4, kind: input, shape index: {}]
  %s5 = inlined_call_operand.vmem [shape: bf16[32,128], index: 5, kind: input, shape index: {}]
  %s6 = inlined_call_operand.vmem [shape: f32[1,128], index: 6, kind: input, shape index: {}]
  %s7 = inlined_call_operand.vmem [shape: bf16[128,32], index: 7, kind: input, shape index: {}]
  %s8 = inlined_call_operand.vmem [shape: f32[1,32], index: 8, kind: input, shape index: {}]
  %s9 = inlined_call_operand.vmem [shape: f32[1,32], index: 9, kind: input, shape index: {}]
  %s10 = inlined_call_operand.vmem [shape: f32[1,32], index: 10, kind: input, shape index: {}]
  %s11 = inlined_call_operand.hbm [shape: f32[32,32], index: 11, kind: output, shape index: {}]
  %s12 = sld [smem:[#allocation0]]
  $region54: #{mic_forward.13} parent=0
    _
  %s14 = ssub.s32 1, %s12
  %s15 = scalar_select 0, %s14, %s12
  $region1: #{mic_forward.13} parent=0
    #allocation2 [shape = 'u8[16384]{0}', space=vmem, size = 0x4000, scoped, tag = 'output window, operand 0, single buffered']
    #allocation3 [shape = 's32[1]{0}', space=sflag, size = 0x4, scoped, tag = 'scoped memory for mic_forward.13']
    %16 = vsyncpa [#allocation3], 0
    // Predicated region
    $region2: #{mic_forward.13} parent=1 // pred_check
      _
    $region3: #{mic_forward.13} parent=1 // pred_check_branch
      %18 = sbr.rel (0) target = $region5
    $region4: #{mic_forward.13} parent=1 // pred_region
      _
    $region5: #{mic_forward.13} parent=1 // pred_fallthru
      _
    // Predicated region
    $region6: #{mic_forward.13} parent=1 // pred_check
      _
    $region7: #{mic_forward.13} parent=1 // pred_check_branch
      %20 = sbr.rel (0) target = $region9
    $region8: #{mic_forward.13} parent=1 // pred_region
      _
    $region9: #{mic_forward.13} parent=1 // pred_fallthru
      _
    // Predicated region
    $region10: #{mic_forward.13} parent=1 // pred_check
      _
    $region11: #{mic_forward.13} parent=1 // pred_check_branch
      %22 = sbr.rel (0) target = $region13
    $region12: #{mic_forward.13} parent=1 // pred_region
      _
    $region13: #{mic_forward.13} parent=1 // pred_fallthru
      _
    // Predicated region
    $region14: #{mic_forward.13} parent=1 // pred_check
      _
    $region15: #{mic_forward.13} parent=1 // pred_check_branch
      %24 = sbr.rel (0) target = $region17
    $region16: #{mic_forward.13} parent=1 // pred_region
      _
    $region17: #{mic_forward.13} parent=1 // pred_fallthru
      _
    // Predicated region
    $region18: #{mic_forward.13} parent=1 // pred_check
      _
    $region19: #{mic_forward.13} parent=1 // pred_check_branch
      %26 = sbr.rel (0) target = $region21
    $region20: #{mic_forward.13} parent=1 // pred_region
      _
    $region21: #{mic_forward.13} parent=1 // pred_fallthru
      _
    // Predicated region
    $region22: #{mic_forward.13} parent=1 // pred_check
      _
    $region23: #{mic_forward.13} parent=1 // pred_check_branch
      %28 = sbr.rel (0) target = $region25
    $region24: #{mic_forward.13} parent=1 // pred_region
      _
    $region25: #{mic_forward.13} parent=1 // pred_fallthru
      _
    // Predicated region
    $region26: #{mic_forward.13} parent=1 // pred_check
      _
    $region27: #{mic_forward.13} parent=1 // pred_check_branch
      %30 = sbr.rel (0) target = $region29
    $region28: #{mic_forward.13} parent=1 // pred_region
      _
    $region29: #{mic_forward.13} parent=1 // pred_fallthru
      _
    // Predicated region
    $region30: #{mic_forward.13} parent=1 // pred_check
      _
    $region31: #{mic_forward.13} parent=1 // pred_check_branch
      %32 = sbr.rel (0) target = $region33
    $region32: #{mic_forward.13} parent=1 // pred_region
      _
    $region33: #{mic_forward.13} parent=1 // pred_fallthru
      _
    // Predicated region
    $region34: #{mic_forward.13} parent=1 // pred_check
      _
    $region35: #{mic_forward.13} parent=1 // pred_check_branch
      %34 = sbr.rel (0) target = $region37
    $region36: #{mic_forward.13} parent=1 // pred_region
      _
    $region37: #{mic_forward.13} parent=1 // pred_fallthru
      _
    // Predicated region
    $region38: #{mic_forward.13} parent=1 // pred_check
      _
    $region39: #{mic_forward.13} parent=1 // pred_check_branch
      %36 = sbr.rel (0) target = $region41
    $region40: #{mic_forward.13} parent=1 // pred_region
      _
    $region41: #{mic_forward.13} parent=1 // pred_fallthru
      _
    // Predicated region
    $region42: #{mic_forward.13} parent=1 // pred_check
      _
    $region43: #{mic_forward.13} parent=1 // pred_check_branch
      %38 = sbr.rel (0) target = $region45
    $region44: #{mic_forward.13} parent=1 // pred_region
      _
    $region45: #{mic_forward.13} parent=1 // pred_fallthru
      _
    %v40 = vld [vmem:[%s0] sm:$0xf]
    %v41 = vld [vmem:[%s0 + $0x4] sm:$0xf]
    %v42 = vld [vmem:[%s0 + $0x8] sm:$0xf]
    %v43 = vld [vmem:[%s0 + $0xc] sm:$0xf]
    %v44 = vld [vmem:[%s1] sm:$0xf]
    %v45 = vld [vmem:[%s1 + $0x4] sm:$0xf]
    %v46 = vld [vmem:[%s1 + $0x8] sm:$0xf]
    %v47 = vld [vmem:[%s1 + $0xc] sm:$0xf]
    %v48 = vld [vmem:[%s1 + $0x10] sm:$0xf]
    %v49 = vld [vmem:[%s1 + $0x14] sm:$0xf]
    %v50 = vld [vmem:[%s1 + $0x18] sm:$0xf]
    %v51 = vld [vmem:[%s1 + $0x1c] sm:$0xf]
    %v52 = vld [vmem:[%s2] sm:$0x1]
    %v54 = vperm.slane %v52, 0
    %v60 = vunpack.c.l.b16 %v40
    %v61 = vunpack.c.l.b16 %v41
    %v62 = vunpack.c.l.b16 %v42
    %v63 = vunpack.c.l.b16 %v43
    %v64 = vpack.c.b16 %v61, %v60
    %v65 = vpack.c.b16 %v63, %v62
    %v74 = vunpack.c.l.b16 %v44
    %v75 = vunpack.c.l.b16 %v45
    %v76 = vunpack.c.l.b16 %v46
    %v77 = vunpack.c.l.b16 %v47
    %v78 = vunpack.c.l.b16 %v48
    %v79 = vunpack.c.l.b16 %v49
    %v80 = vunpack.c.l.b16 %v50
    %v81 = vunpack.c.l.b16 %v51
    %v82 = vpack.c.b16 %v75, %v74
    %v83 = vpack.c.b16 %v77, %v76
    %v84 = vpack.c.b16 %v79, %v78
    %v85 = vpack.c.b16 %v81, %v80
    %vm90 = vcmask 523264
    %v92 = vsel %vm90, %v64, 0
    %v95 = vsel %vm90, %v65, 0
    %97 = vmatpush.bf16.msra.mxu0 0
    %98 = vmatpush.bf16.msra.mxu0 0
    %99 = vmatpush.bf16.msra.mxu0 0
    %100 = vmatpush.bf16.msra.mxu0 0
    %101 = vmatpush.bf16.msra.mxu0 %v85
    %102 = vmatpush.bf16.msra.mxu0 %v84
    %103 = vmatpush.bf16.msra.mxu0 %v83
    %104 = vmatpush.bf16.msra.mxu0 %v82
    %105 = vmatmul.bf16.gmra.mxu0 %v92
    %v106 = vpop.f32.mrf.mxu0
    %v107 = vadd.f32 %v54, %v106
    %v108 = vpop.f32.mrf.mxu0
    %v109 = vadd.f32 %v54, %v108
    %110 = vmatmul.bf16.gmra.mxu0 %v95
    %v111 = vpop.f32.mrf.mxu0
    %v112 = vadd.f32 %v54, %v111
    %v113 = vpop.f32.mrf.mxu0
    %v114 = vadd.f32 %v54, %v113
    %115 = vdwg.mxu0
    %vm116 = vcmask 261120
    %v117 = vsel %vm116, %v107, 0.0
    %118 = vadd.xlane.f32.xlu0 %v117
    %v119 = vpop.xlane.xlu0 %118
    %v120 = vsel %vm116, %v109, 0.0
    %121 = vadd.xlane.f32.xlu0 %v120
    %v122 = vpop.xlane.xlu0 %121
    %v123 = vsel %vm116, %v112, 0.0
    %124 = vadd.xlane.f32.xlu0 %v123
    %v125 = vpop.xlane.xlu0 %124
    %v126 = vsel %vm116, %v114, 0.0
    %127 = vadd.xlane.f32.xlu0 %v126
    %v128 = vpop.xlane.xlu0 %127
    %v129 = vrcp.pop 32.0
    %v130 = vmul.f32 32.0, %v129
    %v131 = vsub.f32 1.0, %v130
    %v132 = vmul.f32 %v129, %v131
    %v133 = vadd.f32 %v129, %v132
    %vm134 = vweird.f32 %v129
    %v135 = vsel %vm134, %v129, %v133
    %v136 = vmul.f32 %v119, %v135
    %v137 = vmul.f32 %v122, %v135
    %v138 = vmul.f32 %v125, %v135
    %v139 = vmul.f32 %v128, %v135
    %v140 = vsub.f32 %v107, %v136
    %v141 = vsub.f32 %v109, %v137
    %v142 = vsub.f32 %v112, %v138
    %v143 = vsub.f32 %v114, %v139
    %v144 = vmul.f32 %v140, %v140
    %v145 = vmul.f32 %v141, %v141
    %v146 = vmul.f32 %v142, %v142
    %v147 = vmul.f32 %v143, %v143
    %v148 = vsel %vm116, %v144, 0.0
    %149 = vadd.xlane.f32.xlu0 %v148
    %v150 = vpop.xlane.xlu0 %149
    %v151 = vsel %vm116, %v145, 0.0
    %152 = vadd.xlane.f32.xlu0 %v151
    %v153 = vpop.xlane.xlu0 %152
    %v154 = vsel %vm116, %v146, 0.0
    %155 = vadd.xlane.f32.xlu0 %v154
    %v156 = vpop.xlane.xlu0 %155
    %v157 = vsel %vm116, %v147, 0.0
    %158 = vadd.xlane.f32.xlu0 %v157
    %v159 = vpop.xlane.xlu0 %158
    %v160 = vmul.f32 %v150, %v135
    %v161 = vmul.f32 %v153, %v135
    %v162 = vmul.f32 %v156, %v135
    %v163 = vmul.f32 %v159, %v135
    %v164 = vadd.f32 %v160, 1e-05
    %v165 = vadd.f32 %v161, 1e-05
    %v166 = vadd.f32 %v162, 1e-05
    %v167 = vadd.f32 %v163, 1e-05
    %v168 = vrsqrt.pop %v164
    %v169 = vmul.f32 %v168, %v164
    %v170 = vmul.f32 %v169, %v168
    %v171 = vmul.f32 0.5, %v170
    %v172 = vsub.f32 1.5, %v171
    %v173 = vmul.f32 %v168, %v172
    %vm174 = vweird.f32 %v164
    %vm175 = vweird.f32 %v168
    %vm176 = vmor %vm174, %vm175
    %v177 = vsel %vm176, %v168, %v173
    %v178 = vrsqrt.pop %v165
    %v179 = vmul.f32 %v178, %v165
    %v180 = vmul.f32 %v179, %v178
    %v181 = vmul.f32 0.5, %v180
    %v182 = vsub.f32 1.5, %v181
    %v183 = vmul.f32 %v178, %v182
    %vm184 = vweird.f32 %v165
    %vm185 = vweird.f32 %v178
    %vm186 = vmor %vm184, %vm185
    %v187 = vsel %vm186, %v178, %v183
    %v188 = vrsqrt.pop %v166
    %v189 = vmul.f32 %v188, %v166
    %v190 = vmul.f32 %v189, %v188
    %v191 = vmul.f32 0.5, %v190
    %v192 = vsub.f32 1.5, %v191
    %v193 = vmul.f32 %v188, %v192
    %vm194 = vweird.f32 %v166
    %vm195 = vweird.f32 %v188
    %vm196 = vmor %vm194, %vm195
    %v197 = vsel %vm196, %v188, %v193
    %v198 = vrsqrt.pop %v167
    %v199 = vmul.f32 %v198, %v167
    %v200 = vmul.f32 %v199, %v198
    %v201 = vmul.f32 0.5, %v200
    %v202 = vsub.f32 1.5, %v201
    %v203 = vmul.f32 %v198, %v202
    %vm204 = vweird.f32 %v167
    %vm205 = vweird.f32 %v198
    %vm206 = vmor %vm204, %vm205
    %v207 = vsel %vm206, %v198, %v203
    %v208 = vmul.f32 %v140, %v177
    %v209 = vmul.f32 %v141, %v187
    %v210 = vmul.f32 %v142, %v197
    %v211 = vmul.f32 %v143, %v207
    %v212 = vld [vmem:[%s3] sm:$0x1]
    %v214 = vperm.slane %v212, 0
    %v216 = vmul.f32 %v208, %v214
    %v217 = vmul.f32 %v209, %v214
    %v218 = vmul.f32 %v210, %v214
    %v219 = vmul.f32 %v211, %v214
    %v220 = vld [vmem:[%s4] sm:$0x1]
    %v222 = vperm.slane %v220, 0
    %v224 = vadd.f32 %v216, %v222
    %v225 = vadd.f32 %v217, %v222
    %v226 = vadd.f32 %v218, %v222
    %v227 = vadd.f32 %v219, %v222
    %v228 = vpack.c.bf16 %v225, %v224
    %v229 = vpack.c.bf16 %v227, %v226
    %v230 = vld [vmem:[%s5] sm:$0xf]
    %v231 = vld [vmem:[%s5 + $0x4] sm:$0xf]
    %v232 = vld [vmem:[%s5 + $0x8] sm:$0xf]
    %v233 = vld [vmem:[%s5 + $0xc] sm:$0xf]
    %v234 = vld [vmem:[%s6] sm:$0x1]
    %v236 = vperm.slane %v234, 0
    %v242 = vunpack.c.l.b16 %v230
    %v243 = vunpack.c.l.b16 %v231
    %v244 = vunpack.c.l.b16 %v232
    %v245 = vunpack.c.l.b16 %v233
    %v246 = vpack.c.b16 %v243, %v242
    %v247 = vpack.c.b16 %v245, %v244
    %v251 = vsel %vm116, %v228, 0
    %v254 = vsel %vm116, %v229, 0
    %256 = vmatpush.bf16.msra.mxu0 0
    %257 = vmatpush.bf16.msra.mxu0 0
    %258 = vmatpush.bf16.msra.mxu0 0
    %259 = vmatpush.bf16.msra.mxu0 0
    %260 = vmatpush.bf16.msra.mxu0 0
    %261 = vmatpush.bf16.msra.mxu0 0
    %262 = vmatpush.bf16.msra.mxu0 %v247
    %263 = vmatpush.bf16.msra.mxu0 %v246
    %264 = vmatmul.bf16.gmra.mxu0 %v251
    %v265 = vpop.f32.mrf.mxu0
    %v266 = vadd.f32 %v236, %v265
    %v267 = vpop.f32.mrf.mxu0
    %v268 = vadd.f32 %v236, %v267
    %269 = vmatmul.bf16.gmra.mxu0 %v254
    %v270 = vpop.f32.mrf.mxu0
    %v271 = vadd.f32 %v236, %v270
    %v272 = vpop.f32.mrf.mxu0
    %v273 = vadd.f32 %v236, %v272
    %274 = vdwg.mxu0
    %v275 = vpack.c.bf16 %v268, %v266
    %v276 = vpack.c.bf16 %v273, %v271
    %v277 = vld [vmem:[%s7] sm:$0xf]
    %v278 = vld [vmem:[%s7 + $0x4] sm:$0xf]
    %v279 = vld [vmem:[%s7 + $0x8] sm:$0xf]
    %v280 = vld [vmem:[%s7 + $0xc] sm:$0xf]
    %v281 = vld [vmem:[%s7 + $0x10] sm:$0xf]
    %v282 = vld [vmem:[%s7 + $0x14] sm:$0xf]
    %v283 = vld [vmem:[%s7 + $0x18] sm:$0xf]
    %v284 = vld [vmem:[%s7 + $0x1c] sm:$0xf]
    %v285 = vld [vmem:[%s7 + $0x20] sm:$0xf]
    %v286 = vld [vmem:[%s7 + $0x24] sm:$0xf]
    %v287 = vld [vmem:[%s7 + $0x28] sm:$0xf]
    %v288 = vld [vmem:[%s7 + $0x2c] sm:$0xf]
    %v289 = vld [vmem:[%s7 + $0x30] sm:$0xf]
    %v290 = vld [vmem:[%s7 + $0x34] sm:$0xf]
    %v291 = vld [vmem:[%s7 + $0x38] sm:$0xf]
    %v292 = vld [vmem:[%s7 + $0x3c] sm:$0xf]
    %v293 = vld [vmem:[%s8] sm:$0x1]
    %v295 = vperm.slane %v293, 0
    %v313 = vunpack.c.l.b16 %v277
    %v314 = vunpack.c.l.b16 %v278
    %v315 = vunpack.c.l.b16 %v279
    %v316 = vunpack.c.l.b16 %v280
    %v317 = vunpack.c.l.b16 %v281
    %v318 = vunpack.c.l.b16 %v282
    %v319 = vunpack.c.l.b16 %v283
    %v320 = vunpack.c.l.b16 %v284
    %v321 = vunpack.c.l.b16 %v285
    %v322 = vunpack.c.l.b16 %v286
    %v323 = vunpack.c.l.b16 %v287
    %v324 = vunpack.c.l.b16 %v288
    %v325 = vunpack.c.l.b16 %v289
    %v326 = vunpack.c.l.b16 %v290
    %v327 = vunpack.c.l.b16 %v291
    %v328 = vunpack.c.l.b16 %v292
    %v329 = vpack.c.b16 %v314, %v313
    %v330 = vpack.c.b16 %v316, %v315
    %v331 = vpack.c.b16 %v318, %v317
    %v332 = vpack.c.b16 %v320, %v319
    %v333 = vpack.c.b16 %v322, %v321
    %v334 = vpack.c.b16 %v324, %v323
    %v335 = vpack.c.b16 %v326, %v325
    %v336 = vpack.c.b16 %v328, %v327
    %345 = vmatpush.bf16.msra.mxu0 %v336
    %346 = vmatpush.bf16.msra.mxu0 %v335
    %347 = vmatpush.bf16.msra.mxu0 %v334
    %348 = vmatpush.bf16.msra.mxu0 %v333
    %349 = vmatpush.bf16.msra.mxu0 %v332
    %350 = vmatpush.bf16.msra.mxu0 %v331
    %351 = vmatpush.bf16.msra.mxu0 %v330
    %352 = vmatpush.bf16.msra.mxu0 %v329
    %353 = vmatmul.bf16.gmra.mxu0 %v275
    %v354 = vpop.f32.mrf.mxu0
    %v355 = vadd.f32 %v295, %v354
    %v356 = vpop.f32.mrf.mxu0
    %v357 = vadd.f32 %v295, %v356
    %358 = vmatmul.bf16.gmra.mxu0 %v276
    %v359 = vpop.f32.mrf.mxu0
    %v360 = vadd.f32 %v295, %v359
    %v361 = vpop.f32.mrf.mxu0
    %v362 = vadd.f32 %v295, %v361
    %363 = vdwg.mxu0
    %v364 = vadd.f32 %v107, %v355
    %v365 = vadd.f32 %v109, %v357
    %v366 = vadd.f32 %v112, %v360
    %v367 = vadd.f32 %v114, %v362
    %v368 = vsel %vm116, %v364, 0.0
    %369 = vadd.xlane.f32.xlu0 %v368
    %v370 = vpop.xlane.xlu0 %369
    %v371 = vsel %vm116, %v365, 0.0
    %372 = vadd.xlane.f32.xlu0 %v371
    %v373 = vpop.xlane.xlu0 %372
    %v374 = vsel %vm116, %v366, 0.0
    %375 = vadd.xlane.f32.xlu0 %v374
    %v376 = vpop.xlane.xlu0 %375
    %v377 = vsel %vm116, %v367, 0.0
    %378 = vadd.xlane.f32.xlu0 %v377
    %v379 = vpop.xlane.xlu0 %378
    %v380 = vmul.f32 %v370, %v135
    %v381 = vmul.f32 %v373, %v135
    %v382 = vmul.f32 %v376, %v135
    %v383 = vmul.f32 %v379, %v135
    %v384 = vsub.f32 %v364, %v380
    %v385 = vsub.f32 %v365, %v381
    %v386 = vsub.f32 %v366, %v382
    %v387 = vsub.f32 %v367, %v383
    %v388 = vmul.f32 %v384, %v384
    %v389 = vmul.f32 %v385, %v385
    %v390 = vmul.f32 %v386, %v386
    %v391 = vmul.f32 %v387, %v387
    %v392 = vsel %vm116, %v388, 0.0
    %393 = vadd.xlane.f32.xlu0 %v392
    %v394 = vpop.xlane.xlu0 %393
    %v395 = vsel %vm116, %v389, 0.0
    %396 = vadd.xlane.f32.xlu0 %v395
    %v397 = vpop.xlane.xlu0 %396
    %v398 = vsel %vm116, %v390, 0.0
    %399 = vadd.xlane.f32.xlu0 %v398
    %v400 = vpop.xlane.xlu0 %399
    %v401 = vsel %vm116, %v391, 0.0
    %402 = vadd.xlane.f32.xlu0 %v401
    %v403 = vpop.xlane.xlu0 %402
    %v404 = vmul.f32 %v394, %v135
    %v405 = vmul.f32 %v397, %v135
    %v406 = vmul.f32 %v400, %v135
    %v407 = vmul.f32 %v403, %v135
    %v408 = vadd.f32 %v404, 1e-05
    %v409 = vadd.f32 %v405, 1e-05
    %v410 = vadd.f32 %v406, 1e-05
    %v411 = vadd.f32 %v407, 1e-05
    %v412 = vrsqrt.pop %v408
    %v413 = vmul.f32 %v412, %v408
    %v414 = vmul.f32 %v413, %v412
    %v415 = vmul.f32 0.5, %v414
    %v416 = vsub.f32 1.5, %v415
    %v417 = vmul.f32 %v412, %v416
    %vm418 = vweird.f32 %v408
    %vm419 = vweird.f32 %v412
    %vm420 = vmor %vm418, %vm419
    %v421 = vsel %vm420, %v412, %v417
    %v422 = vrsqrt.pop %v409
    %v423 = vmul.f32 %v422, %v409
    %v424 = vmul.f32 %v423, %v422
    %v425 = vmul.f32 0.5, %v424
    %v426 = vsub.f32 1.5, %v425
    %v427 = vmul.f32 %v422, %v426
    %vm428 = vweird.f32 %v409
    %vm429 = vweird.f32 %v422
    %vm430 = vmor %vm428, %vm429
    %v431 = vsel %vm430, %v422, %v427
    %v432 = vrsqrt.pop %v410
    %v433 = vmul.f32 %v432, %v410
    %v434 = vmul.f32 %v433, %v432
    %v435 = vmul.f32 0.5, %v434
    %v436 = vsub.f32 1.5, %v435
    %v437 = vmul.f32 %v432, %v436
    %vm438 = vweird.f32 %v410
    %vm439 = vweird.f32 %v432
    %vm440 = vmor %vm438, %vm439
    %v441 = vsel %vm440, %v432, %v437
    %v442 = vrsqrt.pop %v411
    %v443 = vmul.f32 %v442, %v411
    %v444 = vmul.f32 %v443, %v442
    %v445 = vmul.f32 0.5, %v444
    %v446 = vsub.f32 1.5, %v445
    %v447 = vmul.f32 %v442, %v446
    %vm448 = vweird.f32 %v411
    %vm449 = vweird.f32 %v442
    %vm450 = vmor %vm448, %vm449
    %v451 = vsel %vm450, %v442, %v447
    %v452 = vmul.f32 %v384, %v421
    %v453 = vmul.f32 %v385, %v431
    %v454 = vmul.f32 %v386, %v441
    %v455 = vmul.f32 %v387, %v451
    %v456 = vld [vmem:[%s9] sm:$0x1]
    %v458 = vperm.slane %v456, 0
    %v460 = vmul.f32 %v452, %v458
    %v461 = vmul.f32 %v453, %v458
    %v462 = vmul.f32 %v454, %v458
    %v463 = vmul.f32 %v455, %v458
    %v464 = vld [vmem:[%s10] sm:$0x1]
    %v466 = vperm.slane %v464, 0
    %v468 = vadd.f32 %v460, %v466
    %v469 = vadd.f32 %v461, %v466
    %v470 = vadd.f32 %v462, %v466
    %v471 = vadd.f32 %v463, %v466
    %472 = vst.msk [vmem:[#allocation2] sm:$0xff] %vm116, %v468
    %473 = vst.msk [vmem:[#allocation2 + $0x8] sm:$0xff] %vm116, %v469
    %474 = vst.msk [vmem:[#allocation2 + $0x10] sm:$0xff] %vm116, %v470
    %475 = vst.msk [vmem:[#allocation2 + $0x18] sm:$0xff] %vm116, %v471
    // Predicated region
    $region46: #{mic_forward.13} parent=1 // pred_check
      _
    $region47: #{mic_forward.13} parent=1 // pred_check_branch
      %477 = sbr.rel (0) target = $region49
    $region48: #{mic_forward.13} parent=1 // pred_region
      %479 = vsyncadd [#allocation3], 0
      %s480 = sshll.u32 [#allocation2], 4
      %s481 = int_to_ptr.vmem [resolvable:$true] %s480
      %s482 = sshll.u32 %s11, 4
      %s483 = int_to_ptr.hbm [resolvable:$true] %s482
      %488 = dma.vmem_to_hbm [thread:$0]  %s481, 512, %s483, [#allocation3], 128, 128, 8
    $region49: #{mic_forward.13} parent=1 // pred_fallthru
      _
    // Predicated region
    $region50: #{mic_forward.13} parent=1 // pred_check
      _
    $region51: #{mic_forward.13} parent=1 // pred_check_branch
      %490 = sbr.rel (0) target = $region53
    $region52: #{mic_forward.13} parent=1 // pred_region
      %492 = dma.done [#allocation3], 512
    $region53: #{mic_forward.13} parent=1 // pred_fallthru
      _
    %493 = vsyncpa [#allocation3], 1

</llo_original>
